<compile_context>
chip_gen: v6e
topology: v6e:2x2x1
jax: 0.10.0
libtpu: 0.0.40
codegen_flags: <defaults>
</compile_context>

<pallas_src>
import jax
import jax.numpy as jnp
import numpy as np
from jax.experimental import pallas as pl
from jax.experimental.pallas import tpu as pltpu

F32 = jnp.float32


# ---------------------------------------------------------------------------
# device / tiling / VMEM helpers
# ---------------------------------------------------------------------------
def _round_up(x, m):
    return ((x + m - 1) // m) * m


def _device_vmem_bytes():
    try:
        info = pltpu.get_tpu_info()
        for attr in ("vmem_capacity_bytes", "vmem_bytes", "vmem_size_bytes"):
            v = getattr(info, attr, None)
            if v:
                return int(v)
    except Exception:
        pass
    try:
        kind = jax.devices()[0].device_kind.lower()
    except Exception:
        kind = ""
    return (64 if "v7" in kind else 128) * 1024 * 1024


def _num_tensorcores():
    try:
        info = pltpu.get_tpu_info()
        for attr in ("num_cores", "core_count", "tensorcore_count"):
            v = getattr(info, attr, None)
            if v:
                return int(v)
    except Exception:
        pass
    try:
        return 2 if "v7" in jax.devices()[0].device_kind.lower() else 1
    except Exception:
        return 1


def _pick_batch_tile(B, num_cores=1):
    """Largest tile dividing B while keeping >= num_cores batch blocks so the
    'parallel' axis can shard across TensorCores.  tb must be a multiple of 8
    (sublane constraint on the 2-D (tb, H) blocks) or the whole batch."""
    if B % 8 != 0:
        return B
    candidates = [t for t in (128, 64, 32, 16, 8) if B % t == 0]
    for tb in candidates:
        if B // tb >= num_cores:
            return tb
    return candidates[-1] if candidates else B


def _stream_budget_bytes(resident_bytes):
    cap = _device_vmem_bytes()
    return max(2 * 1024 * 1024, (cap - 16 * 1024 * 1024 - resident_bytes) // 3)


def _pick_seq_tile(S, H, tb, budget_bytes, stream_itemsize):
    """Pick ts as a multiple of 128 (lane-dense scores), as large as the VMEM
    budget allows.  Live per sequence element: double-buffered streamed keys
    chunk + the in-kernel f32 upcast / eo / tanh temporaries (~3 f32 copies)."""
    bytes_per_seq = tb * H * (2 * stream_itemsize + 3 * 4)
    max_ts = max(128, (budget_bytes // max(bytes_per_seq, 1)) // 128 * 128)
    if S <= max_ts:
        return S
    best = None
    ts = 128
    while ts <= max_ts:
        if S % ts == 0:
            best = ts
        ts += 128
    return best if best is not None else S


def _vmem_limit_bytes(tb, ts, H, C_pad, stream_itemsize):
    cap = _device_vmem_bytes() - 8 * 1024 * 1024          # never exceed physical VMEM
    stream = 2 * tb * ts * H * stream_itemsize            # double-buffered keys chunk
    temps = 3 * tb * ts * H * 4                           # f32 upcast + eo + tanh temporaries
    # Resident weights charged 2x: constant-index blocks are still
    # double-buffered by default.  TODO(synk): pl.Buffered(1) on the constant
    # weight BlockSpecs would halve this; kept default for lowering safety.
    resident = 2 * 4 * (5 * H * H + H * C_pad             # eo_w, w_c, fc_w
                        + 3 * H + C_pad + 1               # eo_b, va_w, fc_b, va_b
                        + tb * (8 * H + C_pad))           # hi, c, gates_pre, outputs
    scratch = 4 * (tb * H + 2 * tb)
    total = stream + temps + resident + scratch + 8 * 1024 * 1024
    return int(min(max(total, 16 * 1024 * 1024), cap))


# ---------------------------------------------------------------------------
# Kernel: one decode step (in-kernel eo recompute + online softmax + LSTM + fc)
# ---------------------------------------------------------------------------
def decoder_step_kernel(
    keys_ref, hi_ref, c_ref, gates_pre_ref,
    eo_w_ref, eo_b_ref, va_w_ref, va_b_ref,
    w_c_ref, fc_w_ref, fc_b_ref,
    logits_ref, h_out_ref, c_out_ref,
    m_sc, l_sc, acc_sc,
):
    s_idx = pl.program_id(1)
    n_s = pl.num_programs(1)
    tb, ts, H = keys_ref.shape

    # ---- init (first sequence chunk of each batch block) -------------------
    @pl.when(s_idx == 0)
    def _init():
        m_sc[...] = jnp.full(m_sc.shape, -jnp.inf, F32)
        l_sc[...] = jnp.zeros(l_sc.shape, F32)
        acc_sc[...] = jnp.zeros(acc_sc.shape, F32)

    # ---- streamed attention chunk ------------------------------------------
    # Keys may be streamed as bf16 (halves DMA); compute is f32 after upcast.
    keys = keys_ref[...].astype(F32)                               # (tb, ts, H)
    # eo recomputed from the keys chunk (MXU rides the streaming loop).
    eo = (jnp.einsum('bsh,hk->bsk', keys, eo_w_ref[...],
                     preferred_element_type=F32)
          + eo_b_ref[...])                                         # (tb, ts, H)
    t = jnp.tanh(eo + hi_ref[...][:, None, :])                     # EUP tanh
    # TODO(synk): on v6e/v7x a bf16 tanh input would double EUP throughput.
    scores = (jnp.sum(t * va_w_ref[...][None, :, :], axis=-1)
              + va_b_ref[...])                                     # (tb, ts)

    # Online softmax update.
    m_prev = m_sc[...]                                             # (tb, 1)
    m_new = jnp.maximum(m_prev, jnp.max(scores, axis=-1, keepdims=True))
    alpha = jnp.exp(m_prev - m_new)
    p = jnp.exp(scores - m_new)                                    # (tb, ts)
    l_sc[...] = alpha * l_sc[...] + jnp.sum(p, axis=-1, keepdims=True)
    # Weighted-keys accumulation on the MXU (q = 1 batched matmul).
    ctx_part = jnp.einsum('bqs,bsh->bqh', p[:, None, :], keys,
                          preferred_element_type=F32)[:, 0, :]     # (tb, H)
    acc_sc[...] = alpha * acc_sc[...] + ctx_part
    m_sc[...] = m_new

    # ---- last chunk: finish softmax, LSTM cell, output projection ----------
    @pl.when(s_idx == n_s - 1)
    def _finalize():
        l = l_sc[...]
        inv_l = pl.reciprocal(l, approx=True)        # EUP vrcp (free slot)
        inv_l = inv_l * (2.0 - l * inv_l)            # Newton refinement
        inv_l = inv_l * (2.0 - l * inv_l)            # -> effectively f32-exact
        context = acc_sc[...] * inv_l                # (tb, H)

        # x/h gate terms precomputed in the wrapper; only the context term here.
        gates = (gates_pre_ref[...]
                 + jnp.dot(context, w_c_ref[...], preferred_element_type=F32))
        i_g = jax.nn.sigmoid(gates[:, 0 * H:1 * H])
        f_g = jax.nn.sigmoid(gates[:, 1 * H:2 * H])
        g_g = jnp.tanh(gates[:, 2 * H:3 * H])
        o_g = jax.nn.sigmoid(gates[:, 3 * H:4 * H])

        c_prev = c_ref[...]
        c_new = f_g * c_prev + i_g * g_g
        h_new = o_g * jnp.tanh(c_new)

        logits_ref[...] = (jnp.dot(h_new, fc_w_ref[...],
                                   preferred_element_type=F32) + fc_b_ref[...])
        h_out_ref[...] = h_new
        c_out_ref[...] = c_new


# ---------------------------------------------------------------------------
# params / wrapper
# ---------------------------------------------------------------------------
def make_params(key, hidden_size, num_classes):
    H, C = hidden_size, num_classes
    ks = jax.random.split(key, 12)
    n = lambda k, s: (jax.random.normal(k, s, F32) * 0.1)
    return dict(
        embedding=n(ks[0], (C, H)),
        eo_w=n(ks[1], (H, H)),      eo_b=n(ks[2], (1, H)),
        hi_w=n(ks[3], (2 * H, H)),  hi_b=n(ks[4], (1, H)),
        va_w=n(ks[5], (1, H)),      va_b=n(ks[6], (1, 1)),
        wih=n(ks[7], (2 * H, 4 * H)), bih=n(ks[8], (1, 4 * H)),
        whh=n(ks[9], (H, 4 * H)),     bhh=n(ks[10], (1, 4 * H)),
        fc_w=n(ks[11], (H, C)),       fc_b=jnp.zeros((1, C), F32),
    )


def decoder_forward(params, decoder_input, decoder_hidden, encoder_outputs,
                    *, batch_tile=None, seq_tile=None, stream_dtype=None):
    """decoder_input: (B, 1) int32; decoder_hidden: (h, c) each (1, B, H);
    encoder_outputs: (B, S, H).  Returns (logits (B,1,C), (h', c') each (1,B,H)).

    stream_dtype controls the HBM/VMEM storage dtype of the streamed keys
    (e.g. jnp.bfloat16 to halve DMA bytes); kernel math stays f32."""
    h0, c0 = decoder_hidden
    B, S, H = encoder_outputs.shape
    C = params['fc_w'].shape[-1]
    C_pad = _round_up(C, 128)
    stream_dtype = jnp.dtype(stream_dtype) if stream_dtype is not None \
        else encoder_outputs.dtype

    num_cores = _num_tensorcores()
    tb = batch_tile if batch_tile is not None else _pick_batch_tile(B, num_cores)
    if B % tb != 0:
        tb = B
    resident_est = 8 * (5 * H * H + H * C_pad)        # double-buffered f32 resident weights
    ts = (seq_tile if seq_tile is not None
          else _pick_seq_tile(S, H, tb, _stream_budget_bytes(resident_est),
                              stream_dtype.itemsize))
    if S % ts != 0:
        ts = S

    hp = jax.lax.Precision.HIGHEST
    h = h0[0].astype(F32)
    c = c0[0].astype(F32)

    # Step-known matmuls hoisted out of the kernel (tiny (B,*)x(*,*) XLA ops).
    # TODO(synk): dropout on the embedded token is eval-mode identity here.
    x_emb = params['embedding'][decoder_input[:, 0]]                      # (B, H)
    hi = (jnp.dot(h, params['hi_w'][:H], precision=hp)
          + jnp.dot(c, params['hi_w'][H:], precision=hp)
          + params['hi_b'])                                               # (B, H)
    gates_pre = (jnp.dot(x_emb, params['wih'][:H], precision=hp)
                 + jnp.dot(h, params['whh'], precision=hp)
                 + params['bih'] + params['bhh'])                         # (B, 4H)
    w_c = params['wih'][H:]                                               # (H, 4H)

    keys = encoder_outputs.astype(stream_dtype)

    # Lane-dense fc: pad num_classes to a 128 multiple; slice back afterwards.
    # TODO(synk): for vocab-sized C, split fc into its own pallas_call tiled over C.
    fc_w, fc_b = params['fc_w'], params['fc_b']
    if C_pad != C:
        fc_w = jnp.pad(fc_w, ((0, 0), (0, C_pad - C)))
        fc_b = jnp.pad(fc_b, ((0, 0), (0, C_pad - C)))

    grid = (B // tb, S // ts)
    vmem_limit = _vmem_limit_bytes(tb, ts, H, C_pad, stream_dtype.itemsize)

    logits_pad, h1, c1 = pl.pallas_call(
        decoder_step_kernel,
        out_shape=(
            jax.ShapeDtypeStruct((B, C_pad), F32),
            jax.ShapeDtypeStruct((B, H), F32),
            jax.ShapeDtypeStruct((B, H), F32),
        ),
        grid_spec=pltpu.PrefetchScalarGridSpec(
            num_scalar_prefetch=0,
            grid=grid,
            in_specs=[
                pl.BlockSpec((tb, ts, H), lambda b, s: (b, s, 0)),   # keys chunk (streamed)
                pl.BlockSpec((tb, H), lambda b, s: (b, 0)),          # hi
                pl.BlockSpec((tb, H), lambda b, s: (b, 0)),          # c0
                pl.BlockSpec((tb, 4 * H), lambda b, s: (b, 0)),      # gates_pre
                # resident weights (constant index_map -> streamed once)
                pl.BlockSpec((H, H), lambda b, s: (0, 0)),           # eo_w
                pl.BlockSpec((1, H), lambda b, s: (0, 0)),           # eo_b
                pl.BlockSpec((1, H), lambda b, s: (0, 0)),           # va_w
                pl.BlockSpec((1, 1), lambda b, s: (0, 0)),           # va_b
                pl.BlockSpec((H, 4 * H), lambda b, s: (0, 0)),       # w_c
                pl.BlockSpec((H, C_pad), lambda b, s: (0, 0)),       # fc_w
                pl.BlockSpec((1, C_pad), lambda b, s: (0, 0)),       # fc_b
            ],
            out_specs=(
                pl.BlockSpec((tb, C_pad), lambda b, s: (b, 0)),
                pl.BlockSpec((tb, H), lambda b, s: (b, 0)),
                pl.BlockSpec((tb, H), lambda b, s: (b, 0)),
            ),
            scratch_shapes=[
                pltpu.VMEM((tb, 1), F32),    # running max
                pltpu.VMEM((tb, 1), F32),    # running sum
                pltpu.VMEM((tb, H), F32),    # running context accumulator
            ],
        ),
        compiler_params=pltpu.CompilerParams(
            dimension_semantics=("parallel", "arbitrary"),
            vmem_limit_bytes=vmem_limit,
        ),
    )(keys, hi, c, gates_pre,
      params['eo_w'], params['eo_b'], params['va_w'], params['va_b'],
      w_c, fc_w, fc_b)

    logits = logits_pad[:, :C]
    return logits[:, None, :], (h1[None], c1[None])


# ---------------------------------------------------------------------------
# pure-JAX reference (mirrors the PyTorch forward, eval mode)
# ---------------------------------------------------------------------------
def decoder_reference(params, decoder_input, decoder_hidden, encoder_outputs):
    hp = jax.lax.Precision.HIGHEST
    mm = lambda a, b: jnp.dot(a, b, precision=hp)
    h0, c0 = decoder_hidden
    H = h0.shape[-1]
    x = params['embedding'][decoder_input[:, 0]][:, None, :]        # (B,1,H)
    hidden_state = jnp.transpose(h0, (1, 0, 2))                     # (B,1,H)
    cell_state = jnp.transpose(c0, (1, 0, 2))                       # (B,1,H)
    hc = jnp.concatenate([hidden_state, cell_state], axis=-1)       # (B,1,2H)
    hi = mm(hc, params['hi_w']) + params['hi_b']                    # (B,1,H)
    eo = mm(encoder_outputs, params['eo_w']) + params['eo_b']       # (B,S,H)
    scores = mm(jnp.tanh(hi + eo), params['va_w'].T) + params['va_b'][0]  # (B,S,1)
    weights = jax.nn.softmax(scores, axis=1)
    context = jnp.sum(weights * encoder_outputs, axis=1)[:, None, :]      # (B,1,H)
    x_lstm = jnp.concatenate([x, context], axis=-1)[:, 0, :]        # (B,2H)
    gates = (mm(x_lstm, params['wih']) + params['bih']
             + mm(h0[0], params['whh']) + params['bhh'])
    i_g = jax.nn.sigmoid(gates[:, 0 * H:1 * H])
    f_g = jax.nn.sigmoid(gates[:, 1 * H:2 * H])
    g_g = jnp.tanh(gates[:, 2 * H:3 * H])
    o_g = jax.nn.sigmoid(gates[:, 3 * H:4 * H])
    c_new = f_g * c0[0] + i_g * g_g
    h_new = o_g * jnp.tanh(c_new)
    logits = mm(h_new, params['fc_w']) + params['fc_b']
    return logits[:, None, :], (h_new[None], c_new[None])


if __name__ == "__main__":
    # Shapes sized so the test exercises both grid axes (2 batch blocks x
    # 2 sequence chunks of the online softmax) with 128-lane-aligned H.
    B, S, H, C = 16, 256, 128, 40
    key = jax.random.PRNGKey(0)
    k_par, k_tok, k_enc, k_h, k_c = jax.random.split(key, 5)

    params = make_params(k_par, H, C)
    decoder_input = jax.random.randint(k_tok, (B, 1), 0, C, jnp.int32)
    encoder_outputs = jax.random.normal(k_enc, (B, S, H), F32)
    decoder_hidden = (jax.random.normal(k_h, (1, B, H), F32),
                      jax.random.normal(k_c, (1, B, H), F32))

    ref_logits, (ref_h, ref_c) = decoder_reference(params, decoder_input,
                                                   decoder_hidden, encoder_outputs)

    # f32 path, explicit tiles -> grid (2 batch blocks, 2 sequence chunks).
    logits, (h1, c1) = decoder_forward(params, decoder_input, decoder_hidden,
                                       encoder_outputs,
                                       batch_tile=8, seq_tile=128)
    jax.block_until_ready((logits, h1, c1))
    np.testing.assert_allclose(np.asarray(logits), np.asarray(ref_logits),
                               rtol=2e-3, atol=2e-3)
    np.testing.assert_allclose(np.asarray(h1), np.asarray(ref_h), rtol=2e-3, atol=2e-3)
    np.testing.assert_allclose(np.asarray(c1), np.asarray(ref_c), rtol=2e-3, atol=2e-3)

    # bf16 key-streaming path with auto tile selection (loose-tolerance smoke test).
    logits_b, (h1_b, c1_b) = decoder_forward(params, decoder_input, decoder_hidden,
                                             encoder_outputs,
                                             stream_dtype=jnp.bfloat16)
    jax.block_until_ready((logits_b, h1_b, c1_b))
    np.testing.assert_allclose(np.asarray(logits_b), np.asarray(ref_logits),
                               rtol=1e-1, atol=1e-1)
    np.testing.assert_allclose(np.asarray(h1_b), np.asarray(ref_h), rtol=1e-1, atol=1e-1)
    np.testing.assert_allclose(np.asarray(c1_b), np.asarray(ref_c), rtol=1e-1, atol=1e-1)

    print("KERNEL_OK")
</pallas_src>

<mosaic_0001>
module attributes {stable_mosaic.version = 11 : i64} {
  func.func @decoder_step_kernel(%arg0: i32, %arg1: i32, %arg2: memref<8x128x128xf32, #tpu.memory_space<vmem>>, %arg3: memref<8x128xf32, #tpu.memory_space<vmem>>, %arg4: memref<8x128xf32, #tpu.memory_space<vmem>>, %arg5: memref<8x512xf32, #tpu.memory_space<vmem>>, %arg6: memref<128x128xf32, #tpu.memory_space<vmem>>, %arg7: memref<1x128xf32, #tpu.memory_space<vmem>>, %arg8: memref<1x128xf32, #tpu.memory_space<vmem>>, %arg9: memref<1x1xf32, #tpu.memory_space<vmem>>, %arg10: memref<128x512xf32, #tpu.memory_space<vmem>>, %arg11: memref<128x128xf32, #tpu.memory_space<vmem>>, %arg12: memref<1x128xf32, #tpu.memory_space<vmem>>, %arg13: memref<8x128xf32, #tpu.memory_space<vmem>>, %arg14: memref<8x128xf32, #tpu.memory_space<vmem>>, %arg15: memref<8x128xf32, #tpu.memory_space<vmem>>, %arg16: memref<8x1xf32, #tpu.memory_space<vmem>>, %arg17: memref<8x1xf32, #tpu.memory_space<vmem>>, %arg18: memref<8x128xf32, #tpu.memory_space<vmem>>) attributes {dimension_semantics = [#tpu.dimension_semantics<parallel>, #tpu.dimension_semantics<arbitrary>], iteration_bounds = array<i64: 2, 2>, scalar_prefetch = 0 : i64, scratch_operands = 3 : i64, tpu.core_type = #tpu.core_type<tc>, window_params = [{transform_indices = @transform_0, window_bounds = array<i64: 8, 128, 128>}, {transform_indices = @transform_1, window_bounds = array<i64: 8, 128>}, {transform_indices = @transform_2, window_bounds = array<i64: 8, 128>}, {transform_indices = @transform_3, window_bounds = array<i64: 8, 512>}, {pipeline_mode = #tpu.pipeline_mode<synchronous>, transform_indices = @transform_4, window_bounds = array<i64: 128, 128>}, {pipeline_mode = #tpu.pipeline_mode<synchronous>, transform_indices = @transform_5, window_bounds = array<i64: 1, 128>}, {pipeline_mode = #tpu.pipeline_mode<synchronous>, transform_indices = @transform_6, window_bounds = array<i64: 1, 128>}, {pipeline_mode = #tpu.pipeline_mode<synchronous>, transform_indices = @transform_7, window_bounds = array<i64: 1, 1>}, {pipeline_mode = #tpu.pipeline_mode<synchronous>, transform_indices = @transform_8, window_bounds = array<i64: 128, 512>}, {pipeline_mode = #tpu.pipeline_mode<synchronous>, transform_indices = @transform_9, window_bounds = array<i64: 128, 128>}, {pipeline_mode = #tpu.pipeline_mode<synchronous>, transform_indices = @transform_10, window_bounds = array<i64: 1, 128>}, {transform_indices = @transform_11, window_bounds = array<i64: 8, 128>}, {transform_indices = @transform_12, window_bounds = array<i64: 8, 128>}, {transform_indices = @transform_13, window_bounds = array<i64: 8, 128>}]} {
    %c0_i32 = arith.constant 0 : i32
    %0 = arith.cmpi eq, %arg1, %c0_i32 : i32
    %1 = arith.extui %0 : i1 to i32
    %c0_i32_0 = arith.constant 0 : i32
    %2 = arith.cmpi ne, %1, %c0_i32_0 : i32
    scf.if %2 {
      %cst_30 = arith.constant 0xFF800000 : f32
      %50 = vector.broadcast %cst_30 : f32 to vector<8x1xf32>
      %c0_31 = arith.constant 0 : index
      %c0_32 = arith.constant 0 : index
      %51 = vector.load %arg16[%c0_31, %c0_32] : memref<8x1xf32, #tpu.memory_space<vmem>>, vector<8x1xf32>
      tpu.vector_store %arg16[%c0_31, %c0_32], %50 {strides = array<i32>} : memref<8x1xf32, #tpu.memory_space<vmem>>, vector<8x1xf32>,
      %cst_33 = arith.constant 0.000000e+00 : f32
      %52 = vector.broadcast %cst_33 : f32 to vector<8x1xf32>
      %c0_34 = arith.constant 0 : index
      %c0_35 = arith.constant 0 : index
      %53 = vector.load %arg17[%c0_34, %c0_35] : memref<8x1xf32, #tpu.memory_space<vmem>>, vector<8x1xf32>
      tpu.vector_store %arg17[%c0_34, %c0_35], %52 {strides = array<i32>} : memref<8x1xf32, #tpu.memory_space<vmem>>, vector<8x1xf32>,
      %cst_36 = arith.constant 0.000000e+00 : f32
      %54 = vector.broadcast %cst_36 : f32 to vector<8x128xf32>
      %c0_37 = arith.constant 0 : index
      %c0_38 = arith.constant 0 : index
      %55 = vector.load %arg18[%c0_37, %c0_38] : memref<8x128xf32, #tpu.memory_space<vmem>>, vector<8x128xf32>
      tpu.vector_store %arg18[%c0_37, %c0_38], %54 {strides = array<i32>} : memref<8x128xf32, #tpu.memory_space<vmem>>, vector<8x128xf32>,
    } else {
    }
    %c0 = arith.constant 0 : index
    %c0_1 = arith.constant 0 : index
    %c0_2 = arith.constant 0 : index
    %3 = vector.load %arg2[%c0, %c0_1, %c0_2] : memref<8x128x128xf32, #tpu.memory_space<vmem>>, vector<8x128x128xf32>
    %c0_3 = arith.constant 0 : index
    %c0_4 = arith.constant 0 : index
    %4 = vector.load %arg6[%c0_3, %c0_4] : memref<128x128xf32, #tpu.memory_space<vmem>>, vector<128x128xf32>
    "tpu.trace_start"() <{level = 10 : i32, message = "bsh,hk->bsk"}> : () -> ()
    %cst = arith.constant dense<0.000000e+00> : vector<8x128x128xf32>
    %5 = tpu.matmul %3, %4, %cst {dimension_numbers = #tpu.dot_dimension_numbers<[2], [0], [0, 1], [1], [0, 0, 0, 1, 1, 1], [], []>} : vector<8x128x128xf32>, vector<128x128xf32>, vector<8x128x128xf32> -> vector<8x128x128xf32>
    "tpu.trace_stop"() : () -> ()
    %c0_5 = arith.constant 0 : index
    %c0_6 = arith.constant 0 : index
    %6 = vector.load %arg7[%c0_5, %c0_6] : memref<1x128xf32, #tpu.memory_space<vmem>>, vector<1x128xf32>
    %7 = vector.shape_cast %6 : vector<1x128xf32> to vector<1x1x128xf32>
    %8 = vector.broadcast %7 : vector<1x1x128xf32> to vector<8x128x128xf32>
    %9 = arith.addf %5, %8 : vector<8x128x128xf32>
    %c0_7 = arith.constant 0 : index
    %c0_8 = arith.constant 0 : index
    %10 = vector.load %arg3[%c0_7, %c0_8] : memref<8x128xf32, #tpu.memory_space<vmem>>, vector<8x128xf32>
    %11 = vector.shape_cast %10 : vector<8x128xf32> to vector<8x1x128xf32>
    %12 = vector.broadcast %11 : vector<8x1x128xf32> to vector<8x128x128xf32>
    %13 = arith.addf %9, %12 : vector<8x128x128xf32>
    %14 = math.tanh %13 : vector<8x128x128xf32>
    %c0_9 = arith.constant 0 : index
    %c0_10 = arith.constant 0 : index
    %15 = vector.load %arg8[%c0_9, %c0_10] : memref<1x128xf32, #tpu.memory_space<vmem>>, vector<1x128xf32>
    %16 = vector.shape_cast %15 : vector<1x128xf32> to vector<1x1x128xf32>
    %17 = vector.broadcast %16 : vector<1x1x128xf32> to vector<8x128x128xf32>
    %18 = arith.mulf %14, %17 : vector<8x128x128xf32>
    %cst_11 = arith.constant dense<0.000000e+00> : vector<8x128xf32>
    %19 = vector.multi_reduction <add>, %18, %cst_11 [2] : vector<8x128x128xf32> to vector<8x128xf32>
    %c0_12 = arith.constant 0 : index
    %c0_13 = arith.constant 0 : index
    %20 = vector.load %arg9[%c0_12, %c0_13] : memref<1x1xf32, #tpu.memory_space<vmem>>, vector<1x1xf32>
    %21 = vector.broadcast %20 : vector<1x1xf32> to vector<8x128xf32>
    %22 = arith.addf %19, %21 : vector<8x128xf32>
    %c0_14 = arith.constant 0 : index
    %c0_15 = arith.constant 0 : index
    %23 = vector.load %arg16[%c0_14, %c0_15] : memref<8x1xf32, #tpu.memory_space<vmem>>, vector<8x1xf32>
    %cst_16 = arith.constant dense<0xFF800000> : vector<8xf32>
    %24 = vector.multi_reduction <maximumf>, %22, %cst_16 [1] : vector<8x128xf32> to vector<8xf32>
    %25 = vector.shape_cast %24 : vector<8xf32> to vector<8x1xf32>
    %26 = arith.maximumf %23, %25 : vector<8x1xf32>
    %27 = arith.subf %23, %26 : vector<8x1xf32>
    %28 = math.exp %27 : vector<8x1xf32>
    %29 = vector.broadcast %26 : vector<8x1xf32> to vector<8x128xf32>
    %30 = arith.subf %22, %29 : vector<8x128xf32>
    %31 = math.exp %30 : vector<8x128xf32>
    %c0_17 = arith.constant 0 : index
    %c0_18 = arith.constant 0 : index
    %32 = vector.load %arg17[%c0_17, %c0_18] : memref<8x1xf32, #tpu.memory_space<vmem>>, vector<8x1xf32>
    %33 = arith.mulf %28, %32 : vector<8x1xf32>
    %cst_19 = arith.constant dense<0.000000e+00> : vector<8xf32>
    %34 = vector.multi_reduction <add>, %31, %cst_19 [1] : vector<8x128xf32> to vector<8xf32>
    %35 = vector.shape_cast %34 : vector<8xf32> to vector<8x1xf32>
    %36 = arith.addf %33, %35 : vector<8x1xf32>
    %c0_20 = arith.constant 0 : index
    %c0_21 = arith.constant 0 : index
    %37 = vector.load %arg17[%c0_20, %c0_21] : memref<8x1xf32, #tpu.memory_space<vmem>>, vector<8x1xf32>
    tpu.vector_store %arg17[%c0_20, %c0_21], %36 {strides = array<i32>} : memref<8x1xf32, #tpu.memory_space<vmem>>, vector<8x1xf32>,
    %38 = vector.shape_cast %31 : vector<8x128xf32> to vector<8x1x128xf32>
    "tpu.trace_start"() <{level = 10 : i32, message = "bqs,bsh->bqh"}> : () -> ()
    %cst_22 = arith.constant dense<0.000000e+00> : vector<8x1x128xf32>
    %39 = tpu.matmul %38, %3, %cst_22 {dimension_numbers = #tpu.dot_dimension_numbers<[2], [1], [1], [2], [0, 0, 0, 1, 1, 2], [0], [0]>} : vector<8x1x128xf32>, vector<8x128x128xf32>, vector<8x1x128xf32> -> vector<8x1x128xf32>
    "tpu.trace_stop"() : () -> ()
    %40 = vector.shape_cast %39 : vector<8x1x128xf32> to vector<8x128xf32>
    %c0_23 = arith.constant 0 : index
    %c0_24 = arith.constant 0 : index
    %41 = vector.load %arg18[%c0_23, %c0_24] : memref<8x128xf32, #tpu.memory_space<vmem>>, vector<8x128xf32>
    %42 = vector.broadcast %28 : vector<8x1xf32> to vector<8x128xf32>
    %43 = arith.mulf %42, %41 : vector<8x128xf32>
    %44 = arith.addf %43, %40 : vector<8x128xf32>
    %c0_25 = arith.constant 0 : index
    %c0_26 = arith.constant 0 : index
    %45 = vector.load %arg18[%c0_25, %c0_26] : memref<8x128xf32, #tpu.memory_space<vmem>>, vector<8x128xf32>
    tpu.vector_store %arg18[%c0_25, %c0_26], %44 {strides = array<i32>} : memref<8x128xf32, #tpu.memory_space<vmem>>, vector<8x128xf32>,
    %c0_27 = arith.constant 0 : index
    %c0_28 = arith.constant 0 : index
    %46 = vector.load %arg16[%c0_27, %c0_28] : memref<8x1xf32, #tpu.memory_space<vmem>>, vector<8x1xf32>
    tpu.vector_store %arg16[%c0_27, %c0_28], %26 {strides = array<i32>} : memref<8x1xf32, #tpu.memory_space<vmem>>, vector<8x1xf32>,
    %c1_i32 = arith.constant 1 : i32
    %47 = arith.cmpi eq, %arg1, %c1_i32 : i32
    %48 = arith.extui %47 : i1 to i32
    %c0_i32_29 = arith.constant 0 : i32
    %49 = arith.cmpi ne, %48, %c0_i32_29 : i32
    scf.if %49 {
      %c0_30 = arith.constant 0 : index
      %c0_31 = arith.constant 0 : index
      %50 = vector.load %arg17[%c0_30, %c0_31] : memref<8x1xf32, #tpu.memory_space<vmem>>, vector<8x1xf32>
      %51 = tpu.reciprocal %50 {approx = true} : vector<8x1xf32> -> vector<8x1xf32>
      %52 = arith.mulf %50, %51 : vector<8x1xf32>
      %cst_32 = arith.constant 2.000000e+00 : f32
      %53 = vector.broadcast %cst_32 : f32 to vector<8x1xf32>
      %54 = arith.subf %53, %52 : vector<8x1xf32>
      %55 = arith.mulf %51, %54 : vector<8x1xf32>
      %56 = arith.mulf %50, %55 : vector<8x1xf32>
      %cst_33 = arith.constant 2.000000e+00 : f32
      %57 = vector.broadcast %cst_33 : f32 to vector<8x1xf32>
      %58 = arith.subf %57, %56 : vector<8x1xf32>
      %59 = arith.mulf %55, %58 : vector<8x1xf32>
      %c0_34 = arith.constant 0 : index
      %c0_35 = arith.constant 0 : index
      %60 = vector.load %arg18[%c0_34, %c0_35] : memref<8x128xf32, #tpu.memory_space<vmem>>, vector<8x128xf32>
      %61 = vector.broadcast %59 : vector<8x1xf32> to vector<8x128xf32>
      %62 = arith.mulf %60, %61 : vector<8x128xf32>
      %c0_36 = arith.constant 0 : index
      %c0_37 = arith.constant 0 : index
      %63 = vector.load %arg5[%c0_36, %c0_37] : memref<8x512xf32, #tpu.memory_space<vmem>>, vector<8x512xf32>
      %c0_38 = arith.constant 0 : index
      %c0_39 = arith.constant 0 : index
      %64 = vector.load %arg10[%c0_38, %c0_39] : memref<128x512xf32, #tpu.memory_space<vmem>>, vector<128x512xf32>
      %cst_40 = arith.constant dense<0.000000e+00> : vector<8x512xf32>
      %65 = tpu.matmul %62, %64, %cst_40 {dimension_numbers = #tpu.dot_dimension_numbers<[1], [0], [0], [1], [0, 0, 1, 1], [], []>} : vector<8x128xf32>, vector<128x512xf32>, vector<8x512xf32> -> vector<8x512xf32>
      %66 = arith.addf %63, %65 : vector<8x512xf32>
      %67 = vector.extract_strided_slice %66 {offsets = [0, 0], sizes = [8, 128], strides = [1, 1]} : vector<8x512xf32> to vector<8x128xf32>
      %68 = arith.negf %67 : vector<8x128xf32>
      %69 = math.exp %68 : vector<8x128xf32>
      %cst_41 = arith.constant 1.000000e+00 : f32
      %70 = vector.broadcast %cst_41 : f32 to vector<8x128xf32>
      %71 = arith.addf %70, %69 : vector<8x128xf32>
      %72 = arith.divf %70, %71 : vector<8x128xf32>
      %73 = vector.extract_strided_slice %66 {offsets = [0, 128], sizes = [8, 128], strides = [1, 1]} : vector<8x512xf32> to vector<8x128xf32>
      %74 = arith.negf %73 : vector<8x128xf32>
      %75 = math.exp %74 : vector<8x128xf32>
      %cst_42 = arith.constant 1.000000e+00 : f32
      %76 = vector.broadcast %cst_42 : f32 to vector<8x128xf32>
      %77 = arith.addf %76, %75 : vector<8x128xf32>
      %78 = arith.divf %76, %77 : vector<8x128xf32>
      %79 = vector.extract_strided_slice %66 {offsets = [0, 256], sizes = [8, 128], strides = [1, 1]} : vector<8x512xf32> to vector<8x128xf32>
      %80 = math.tanh %79 : vector<8x128xf32>
      %81 = vector.extract_strided_slice %66 {offsets = [0, 384], sizes = [8, 128], strides = [1, 1]} : vector<8x512xf32> to vector<8x128xf32>
      %82 = arith.negf %81 : vector<8x128xf32>
      %83 = math.exp %82 : vector<8x128xf32>
      %cst_43 = arith.constant 1.000000e+00 : f32
      %84 = vector.broadcast %cst_43 : f32 to vector<8x128xf32>
      %85 = arith.addf %84, %83 : vector<8x128xf32>
      %86 = arith.divf %84, %85 : vector<8x128xf32>
      %c0_44 = arith.constant 0 : index
      %c0_45 = arith.constant 0 : index
      %87 = vector.load %arg4[%c0_44, %c0_45] : memref<8x128xf32, #tpu.memory_space<vmem>>, vector<8x128xf32>
      %88 = arith.mulf %78, %87 : vector<8x128xf32>
      %89 = arith.mulf %72, %80 : vector<8x128xf32>
      %90 = arith.addf %88, %89 : vector<8x128xf32>
      %91 = math.tanh %90 : vector<8x128xf32>
      %92 = arith.mulf %86, %91 : vector<8x128xf32>
      %c0_46 = arith.constant 0 : index
      %c0_47 = arith.constant 0 : index
      %93 = vector.load %arg11[%c0_46, %c0_47] : memref<128x128xf32, #tpu.memory_space<vmem>>, vector<128x128xf32>
      %cst_48 = arith.constant dense<0.000000e+00> : vector<8x128xf32>
      %94 = tpu.matmul %92, %93, %cst_48 {dimension_numbers = #tpu.dot_dimension_numbers<[1], [0], [0], [1], [0, 0, 1, 1], [], []>} : vector<8x128xf32>, vector<128x128xf32>, vector<8x128xf32> -> vector<8x128xf32>
      %c0_49 = arith.constant 0 : index
      %c0_50 = arith.constant 0 : index
      %95 = vector.load %arg12[%c0_49, %c0_50] : memref<1x128xf32, #tpu.memory_space<vmem>>, vector<1x128xf32>
      %96 = vector.broadcast %95 : vector<1x128xf32> to vector<8x128xf32>
      %97 = arith.addf %94, %96 : vector<8x128xf32>
      %c0_51 = arith.constant 0 : index
      %c0_52 = arith.constant 0 : index
      %98 = vector.load %arg13[%c0_51, %c0_52] : memref<8x128xf32, #tpu.memory_space<vmem>>, vector<8x128xf32>
      tpu.vector_store %arg13[%c0_51, %c0_52], %97 {strides = array<i32>} : memref<8x128xf32, #tpu.memory_space<vmem>>, vector<8x128xf32>,
      %c0_53 = arith.constant 0 : index
      %c0_54 = arith.constant 0 : index
      %99 = vector.load %arg14[%c0_53, %c0_54] : memref<8x128xf32, #tpu.memory_space<vmem>>, vector<8x128xf32>
      tpu.vector_store %arg14[%c0_53, %c0_54], %92 {strides = array<i32>} : memref<8x128xf32, #tpu.memory_space<vmem>>, vector<8x128xf32>,
      %c0_55 = arith.constant 0 : index
      %c0_56 = arith.constant 0 : index
      %100 = vector.load %arg15[%c0_55, %c0_56] : memref<8x128xf32, #tpu.memory_space<vmem>>, vector<8x128xf32>
      tpu.vector_store %arg15[%c0_55, %c0_56], %90 {strides = array<i32>} : memref<8x128xf32, #tpu.memory_space<vmem>>, vector<8x128xf32>,
    } else {
    }
    return
  }
  func.func @transform_0(%arg0: i32, %arg1: i32) -> (i32, i32, i32) {
    %c0_i32 = arith.constant 0 : i32
    %c0_i32_0 = arith.constant 0 : i32
    return %arg0, %arg1, %c0_i32 : i32, i32, i32
  }
  func.func @transform_1(%arg0: i32, %arg1: i32) -> (i32, i32) {
    %c0_i32 = arith.constant 0 : i32
    %c0_i32_0 = arith.constant 0 : i32
    return %arg0, %c0_i32 : i32, i32
  }
  func.func @transform_2(%arg0: i32, %arg1: i32) -> (i32, i32) {
    %c0_i32 = arith.constant 0 : i32
    %c0_i32_0 = arith.constant 0 : i32
    return %arg0, %c0_i32 : i32, i32
  }
  func.func @transform_3(%arg0: i32, %arg1: i32) -> (i32, i32) {
    %c0_i32 = arith.constant 0 : i32
    %c0_i32_0 = arith.constant 0 : i32
    return %arg0, %c0_i32 : i32, i32
  }
  func.func @transform_4(%arg0: i32, %arg1: i32) -> (i32, i32) {
    %c0_i32 = arith.constant 0 : i32
    %c0_i32_0 = arith.constant 0 : i32
    %c0_i32_1 = arith.constant 0 : i32
    return %c0_i32, %c0_i32_0 : i32, i32
  }
  func.func @transform_5(%arg0: i32, %arg1: i32) -> (i32, i32) {
    %c0_i32 = arith.constant 0 : i32
    %c0_i32_0 = arith.constant 0 : i32
    %c0_i32_1 = arith.constant 0 : i32
    return %c0_i32, %c0_i32_0 : i32, i32
  }
  func.func @transform_6(%arg0: i32, %arg1: i32) -> (i32, i32) {
    %c0_i32 = arith.constant 0 : i32
    %c0_i32_0 = arith.constant 0 : i32
    %c0_i32_1 = arith.constant 0 : i32
    return %c0_i32, %c0_i32_0 : i32, i32
  }
  func.func @transform_7(%arg0: i32, %arg1: i32) -> (i32, i32) {
    %c0_i32 = arith.constant 0 : i32
    %c0_i32_0 = arith.constant 0 : i32
    %c0_i32_1 = arith.constant 0 : i32
    return %c0_i32, %c0_i32_0 : i32, i32
  }
  func.func @transform_8(%arg0: i32, %arg1: i32) -> (i32, i32) {
    %c0_i32 = arith.constant 0 : i32
    %c0_i32_0 = arith.constant 0 : i32
    %c0_i32_1 = arith.constant 0 : i32
    return %c0_i32, %c0_i32_0 : i32, i32
  }
  func.func @transform_9(%arg0: i32, %arg1: i32) -> (i32, i32) {
    %c0_i32 = arith.constant 0 : i32
    %c0_i32_0 = arith.constant 0 : i32
    %c0_i32_1 = arith.constant 0 : i32
    return %c0_i32, %c0_i32_0 : i32, i32
  }
  func.func @transform_10(%arg0: i32, %arg1: i32) -> (i32, i32) {
    %c0_i32 = arith.constant 0 : i32
    %c0_i32_0 = arith.constant 0 : i32
    %c0_i32_1 = arith.constant 0 : i32
    return %c0_i32, %c0_i32_0 : i32, i32
  }
  func.func @transform_11(%arg0: i32, %arg1: i32) -> (i32, i32) {
    %c0_i32 = arith.constant 0 : i32
    %c0_i32_0 = arith.constant 0 : i32
    return %arg0, %c0_i32 : i32, i32
  }
  func.func @transform_12(%arg0: i32, %arg1: i32) -> (i32, i32) {
    %c0_i32 = arith.constant 0 : i32
    %c0_i32_0 = arith.constant 0 : i32
    return %arg0, %c0_i32 : i32, i32
  }
  func.func @transform_13(%arg0: i32, %arg1: i32) -> (i32, i32) {
    %c0_i32 = arith.constant 0 : i32
    %c0_i32_0 = arith.constant 0 : i32
    return %arg0, %c0_i32 : i32, i32
  }
}

</mosaic_0001>

<llo_original>
// kernel: tpu_custom_call.1
$region0: #{tpu_custom_call.1}
  #allocation0 [shape = 'u32[]', space=smem, size = 0x4, offset = 0x4, fixed_abs, tag = 'smem constant byte address 0x4 - core index']
  #allocation1 [shape = 'u32[144,128]{1,0:T(1,128)}', space=vmem, size = 0x12000, scoped, tag = 'internal scratch']
  #allocation2 [shape = 'f32[8,1]{1,0:T(8,128)}', space=vmem, size = 0x1000, scoped, tag = 'scratch operand']
  #allocation3 [shape = 'f32[8,1]{1,0:T(8,128)}', space=vmem, size = 0x1000, scoped, tag = 'scratch operand']
  #allocation4 [shape = 'f32[8,128]{1,0:T(8,128)}', space=vmem, size = 0x1000, scoped, tag = 'scratch operand']
  #allocation5 [shape = 'f32[1,1]{1,0:T(1,128)S(1)}', space=vmem, size = 0x200, scoped, tag = 'scoped memory for tpu_custom_call.1']
  #allocation27 [shape = 's32[]', space=sflag, size = 0x4, offset = 0, fixed_abs, tag = 'sflag constant byte address 0x0 - dummy sync flag']
  %s0 = inlined_call_operand.hbm [shape: f32[16,256,128], index: 0, kind: input, shape index: {}]
  %s1 = inlined_call_operand.hbm [shape: f32[16,128], index: 1, kind: input, shape index: {}]
  %s2 = inlined_call_operand.hbm [shape: f32[16,128], index: 2, kind: input, shape index: {}]
  %s3 = inlined_call_operand.hbm [shape: f32[16,512], index: 3, kind: input, shape index: {}]
  %s4 = inlined_call_operand.hbm [shape: f32[128,128], index: 4, kind: input, shape index: {}]
  %s5 = inlined_call_operand.hbm [shape: f32[1,128], index: 5, kind: input, shape index: {}]
  %s6 = inlined_call_operand.hbm [shape: f32[1,128], index: 6, kind: input, shape index: {}]
  %s7 = inlined_call_operand.<no memory space> [shape: f32[1,1], index: 7, kind: input, shape index: {}]
  %s8 = inlined_call_operand.hbm [shape: f32[128,512], index: 8, kind: input, shape index: {}]
  %s9 = inlined_call_operand.hbm [shape: f32[128,128], index: 9, kind: input, shape index: {}]
  %s10 = inlined_call_operand.hbm [shape: f32[1,128], index: 10, kind: input, shape index: {}]
  %s11 = inlined_call_operand.hbm [shape: f32[16,128], index: 11, kind: output, shape index: {0}]
  %s12 = inlined_call_operand.hbm [shape: f32[16,128], index: 12, kind: output, shape index: {1}]
  %s13 = inlined_call_operand.hbm [shape: f32[16,128], index: 13, kind: output, shape index: {2}]
  %14 = xla_tuple %s11, %s12, %s13
  %s15 = sld [smem:[#allocation0]]
  $region141: #{tpu_custom_call.1} parent=0
    _
  %s17 = ssub.s32 1, %s15
  %s18 = scalar_select 0, %s17, %s15
  %v19 = vstv %s7
  %20 = vst [vmem:[#allocation5] sm:$0x1] %v19
  $region1: #{tpu_custom_call.1} parent=0
    #allocation6 [shape = 'u8[1048576]{0}', space=vmem, size = 0x100000, scoped, tag = 'input window, operand 0']
    #allocation7 [shape = 's32[2]{0}', space=sflag, size = 0x8, scoped, tag = 'scoped memory for tpu_custom_call.1']
    #allocation8 [shape = 's32[2]{0}', space=sflag, size = 0x8, scoped, tag = 'scoped memory for tpu_custom_call.1']
    #allocation9 [shape = 'u8[8192]{0}', space=vmem, size = 0x2000, scoped, tag = 'input window, operand 1']
    #allocation10 [shape = 's32[2]{0}', space=sflag, size = 0x8, scoped, tag = 'scoped memory for tpu_custom_call.1']
    #allocation11 [shape = 'u8[8192]{0}', space=vmem, size = 0x2000, scoped, tag = 'input window, operand 2']
    #allocation12 [shape = 'u8[32768]{0}', space=vmem, size = 0x8000, scoped, tag = 'input window, operand 3']
    #allocation13 [shape = 's32[2]{0}', space=sflag, size = 0x8, scoped, tag = 'scoped memory for tpu_custom_call.1']
    #allocation14 [shape = 'u8[65536]{0}', space=vmem, size = 0x10000, scoped, tag = 'input window, operand 4, single buffered']
    #allocation15 [shape = 'u8[512]{0}', space=vmem, size = 0x400, scoped, tag = 'input window, operand 5, single buffered']
    #allocation16 [shape = 's32[1]{0}', space=sflag, size = 0x4, scoped, tag = 'scoped memory for tpu_custom_call.1']
    #allocation17 [shape = 'u8[512]{0}', space=vmem, size = 0x400, scoped, tag = 'input window, operand 6, single buffered']
    #allocation18 [shape = 'u8[262144]{0}', space=vmem, size = 0x40000, scoped, tag = 'input window, operand 8, single buffered']
    #allocation19 [shape = 's32[1]{0}', space=sflag, size = 0x4, scoped, tag = 'scoped memory for tpu_custom_call.1']
    #allocation20 [shape = 'u8[65536]{0}', space=vmem, size = 0x10000, scoped, tag = 'input window, operand 9, single buffered']
    #allocation21 [shape = 'u8[512]{0}', space=vmem, size = 0x400, scoped, tag = 'input window, operand 10, single buffered']
    #allocation22 [shape = 's32[1]{0}', space=sflag, size = 0x4, scoped, tag = 'scoped memory for tpu_custom_call.1']
    #allocation23 [shape = 'u8[8192]{0}', space=vmem, size = 0x2000, scoped, tag = 'output window, operand 0']
    #allocation24 [shape = 'u8[8192]{0}', space=vmem, size = 0x2000, scoped, tag = 'output window, operand 1']
    #allocation25 [shape = 's32[2]{0}', space=sflag, size = 0x8, scoped, tag = 'scoped memory for tpu_custom_call.1']
    #allocation26 [shape = 'u8[8192]{0}', space=vmem, size = 0x2000, scoped, tag = 'output window, operand 2']
    %21 = vsyncpa [#allocation7], 0
    %s22 = scalar_lea.sflag [#allocation7], 1
    %23 = vsyncpa %s22, 0
    %24 = vsyncpa [#allocation10], 0
    %s25 = scalar_lea.sflag [#allocation10], 1
    %26 = vsyncpa %s25, 0
    %27 = vsyncpa [#allocation13], 0
    %s28 = scalar_lea.sflag [#allocation13], 1
    %29 = vsyncpa %s28, 0
    %30 = vsyncpa [#allocation16], 0
    %31 = vsyncpa [#allocation19], 0
    %32 = vsyncpa [#allocation22], 0
    %33 = vsyncpa [#allocation8], 0
    %s34 = scalar_lea.sflag [#allocation8], 1
    %35 = vsyncpa %s34, 0
    %36 = vsyncpa [#allocation25], 0
    %s37 = scalar_lea.sflag [#allocation25], 1
    %38 = vsyncpa %s37, 0
    loop: start=0, step=1, limit=6
    $region2: #{tpu_custom_call.1} parent=1 // loop_pre_header
      _
    $region3: #{tpu_custom_call.1} parent=1 // loop_header
      %s40 = sphi 0, %s44
      %p41 = scmp.ge.s32.totalorder %s40, 6
      %s47 = sphi 0, %s59
      %s48 = sphi 0, %s55
      %s49 = sphi 0, %s47
      %s50 = sphi 0, %s48
      %s51 = sphi 0, %s49
      %s52 = sphi 0, %s50
      %s64 = sphi 0, %s66
      %s67 = sphi 0, %s64
      %s68 = sphi 0, %s67
      %s84 = sphi 0, %s68
      %s90 = sphi 0, %s92
      %s93 = sphi 0, %s90
      %s94 = sphi 0, %s93
      %s110 = sphi 0, %s94
      %s116 = sphi 0, %s118
      %s119 = sphi 0, %s116
      %s120 = sphi 0, %s119
      %s136 = sphi 0, %s120
      %s142 = sphi 0, %s144
      %s145 = sphi 0, %s142
      %s146 = sphi 0, %s145
      %s162 = sphi 0, %s146
      %s166 = sphi 0, %s166
      %s168 = sphi 0, %s166
      %s169 = sphi 0, %s168
      %s183 = sphi 0, %s169
      %s187 = sphi 0, %s187
      %s189 = sphi 0, %s187
      %s190 = sphi 0, %s189
      %s204 = sphi 0, %s190
      %s208 = sphi 0, %s208
      %s210 = sphi 0, %s208
      %s211 = sphi 0, %s210
      %s225 = sphi 0, %s211
      %s229 = sphi 0, %s229
      %s231 = sphi 0, %s229
      %s232 = sphi 0, %s231
      %s246 = sphi 0, %s232
      %s250 = sphi 0, %s250
      %s252 = sphi 0, %s250
      %s253 = sphi 0, %s252
      %s267 = sphi 0, %s253
      %s271 = sphi 0, %s271
      %s273 = sphi 0, %s271
      %s274 = sphi 0, %s273
      %s288 = sphi 0, %s274
      %s292 = sphi 0, %s292
      %s294 = sphi 0, %s292
      %s295 = sphi 0, %s294
      %s309 = sphi 0, %s295
      %s315 = sphi 0, %s317
      %s318 = sphi 0, %s315
      %s319 = sphi 0, %s318
      %s335 = sphi 0, %s319
      %s341 = sphi 0, %s343
      %s344 = sphi 0, %s341
      %s345 = sphi 0, %s344
      %s361 = sphi 0, %s345
      %s367 = sphi 0, %s369
      %s370 = sphi 0, %s367
      %s371 = sphi 0, %s370
      %s387 = sphi 0, %s371
    $region4: #{tpu_custom_call.1} parent=1 // loop_header_branch
      %43 = sbr.rel (%p41) target = $region8
    $region5: #{tpu_custom_call.1} parent=1 // loop_body
      %s45 = ssub.s32 %s40, 1
      %s46 = ssub.s32 %s40, 2
      %s53 = sadd.s32 1, %s48
      %p54 = scmp.ge.s32.totalorder %s53, 2
      %s55 = scalar_select %p54, 0, %s53
      %s56 = sadd.s32 1, %s47
      %s57 = scalar_select %p54, %s56, %s47
      %p58 = scmp.ge.s32.totalorder %s57, 2
      %s59 = scalar_select %p58, 0, %s57
      %s60 = ssub.s32 %s47, %s59
      %s61 = ssub.s32 %s48, %s55
      %s62 = sor.u32 %s60, %s61
      %p63 = scmp.eq.s32.totalorder %s62, 0
      %s65 = sadd.s32 %s64, 1
      %s66 = scalar_select %p63, %s64, %s65
      %p69 = pneg %p63
      %p70 = scmp.eq.s32.totalorder %s40, 3
      %p71 = por %p69, %p70
      %p72 = scmp.ne.s32.totalorder %s64, %s67
      %p73 = scmp.eq.s32.totalorder %s40, 0
      %p74 = por %p72, %p73
      %p75 = scmp.ne.s32.totalorder %s64, %s67
      %p76 = scmp.eq.s32.totalorder %s45, 3
      %p77 = por %p75, %p76
      %p78 = scmp.ne.s32.totalorder %s67, %s68
      %p79 = scmp.eq.s32.totalorder %s45, 0
      %p80 = por %p78, %p79
      %p81 = scmp.ne.s32.totalorder %s67, %s68
      %p82 = scmp.eq.s32.totalorder %s46, 3
      %p83 = por %p81, %p82
      %p85 = scmp.ne.s32.totalorder %s68, %s84
      %p86 = scmp.eq.s32.totalorder %s46, 0
      %p87 = por %p85, %p86
      %s88 = ssub.s32 %s47, %s59
      %p89 = scmp.eq.s32.totalorder %s88, 0
      %s91 = sadd.s32 %s90, 1
      %s92 = scalar_select %p89, %s90, %s91
      %p95 = pneg %p89
      %p96 = scmp.eq.s32.totalorder %s40, 3
      %p97 = por %p95, %p96
      %p98 = scmp.ne.s32.totalorder %s90, %s93
      %p99 = scmp.eq.s32.totalorder %s40, 0
      %p100 = por %p98, %p99
      %p101 = scmp.ne.s32.totalorder %s90, %s93
      %p102 = scmp.eq.s32.totalorder %s45, 3
      %p103 = por %p101, %p102
      %p104 = scmp.ne.s32.totalorder %s93, %s94
      %p105 = scmp.eq.s32.totalorder %s45, 0
      %p106 = por %p104, %p105
      %p107 = scmp.ne.s32.totalorder %s93, %s94
      %p108 = scmp.eq.s32.totalorder %s46, 3
      %p109 = por %p107, %p108
      %p111 = scmp.ne.s32.totalorder %s94, %s110
      %p112 = scmp.eq.s32.totalorder %s46, 0
      %p113 = por %p111, %p112
      %s114 = ssub.s32 %s47, %s59
      %p115 = scmp.eq.s32.totalorder %s114, 0
      %s117 = sadd.s32 %s116, 1
      %s118 = scalar_select %p115, %s116, %s117
      %p121 = pneg %p115
      %p122 = scmp.eq.s32.totalorder %s40, 3
      %p123 = por %p121, %p122
      %p124 = scmp.ne.s32.totalorder %s116, %s119
      %p125 = scmp.eq.s32.totalorder %s40, 0
      %p126 = por %p124, %p125
      %p127 = scmp.ne.s32.totalorder %s116, %s119
      %p128 = scmp.eq.s32.totalorder %s45, 3
      %p129 = por %p127, %p128
      %p130 = scmp.ne.s32.totalorder %s119, %s120
      %p131 = scmp.eq.s32.totalorder %s45, 0
      %p132 = por %p130, %p131
      %p133 = scmp.ne.s32.totalorder %s119, %s120
      %p134 = scmp.eq.s32.totalorder %s46, 3
      %p135 = por %p133, %p134
      %p137 = scmp.ne.s32.totalorder %s120, %s136
      %p138 = scmp.eq.s32.totalorder %s46, 0
      %p139 = por %p137, %p138
      %s140 = ssub.s32 %s47, %s59
      %p141 = scmp.eq.s32.totalorder %s140, 0
      %s143 = sadd.s32 %s142, 1
      %s144 = scalar_select %p141, %s142, %s143
      %p147 = pneg %p141
      %p148 = scmp.eq.s32.totalorder %s40, 3
      %p149 = por %p147, %p148
      %p150 = scmp.ne.s32.totalorder %s142, %s145
      %p151 = scmp.eq.s32.totalorder %s40, 0
      %p152 = por %p150, %p151
      %p153 = scmp.ne.s32.totalorder %s142, %s145
      %p154 = scmp.eq.s32.totalorder %s45, 3
      %p155 = por %p153, %p154
      %p156 = scmp.ne.s32.totalorder %s145, %s146
      %p157 = scmp.eq.s32.totalorder %s45, 0
      %p158 = por %p156, %p157
      %p159 = scmp.ne.s32.totalorder %s145, %s146
      %p160 = scmp.eq.s32.totalorder %s46, 3
      %p161 = por %p159, %p160
      %p163 = scmp.ne.s32.totalorder %s146, %s162
      %p164 = scmp.eq.s32.totalorder %s46, 0
      %p165 = por %p163, %p164
      %s167 = sadd.s32 %s166, 1
      %p170 = scmp.eq.s32.totalorder %s40, 3
      %p171 = scmp.ne.s32.totalorder %s166, %s168
      %p172 = scmp.eq.s32.totalorder %s40, 0
      %p173 = por %p171, %p172
      %p174 = scmp.ne.s32.totalorder %s166, %s168
      %p175 = scmp.eq.s32.totalorder %s45, 3
      %p176 = por %p174, %p175
      %p177 = scmp.ne.s32.totalorder %s168, %s169
      %p178 = scmp.eq.s32.totalorder %s45, 0
      %p179 = por %p177, %p178
      %p180 = scmp.ne.s32.totalorder %s168, %s169
      %p181 = scmp.eq.s32.totalorder %s46, 3
      %p182 = por %p180, %p181
      %p184 = scmp.ne.s32.totalorder %s169, %s183
      %p185 = scmp.eq.s32.totalorder %s46, 0
      %p186 = por %p184, %p185
      %s188 = sadd.s32 %s187, 1
      %p191 = scmp.eq.s32.totalorder %s40, 3
      %p192 = scmp.ne.s32.totalorder %s187, %s189
      %p193 = scmp.eq.s32.totalorder %s40, 0
      %p194 = por %p192, %p193
      %p195 = scmp.ne.s32.totalorder %s187, %s189
      %p196 = scmp.eq.s32.totalorder %s45, 3
      %p197 = por %p195, %p196
      %p198 = scmp.ne.s32.totalorder %s189, %s190
      %p199 = scmp.eq.s32.totalorder %s45, 0
      %p200 = por %p198, %p199
      %p201 = scmp.ne.s32.totalorder %s189, %s190
      %p202 = scmp.eq.s32.totalorder %s46, 3
      %p203 = por %p201, %p202
      %p205 = scmp.ne.s32.totalorder %s190, %s204
      %p206 = scmp.eq.s32.totalorder %s46, 0
      %p207 = por %p205, %p206
      %s209 = sadd.s32 %s208, 1
      %p212 = scmp.eq.s32.totalorder %s40, 3
      %p213 = scmp.ne.s32.totalorder %s208, %s210
      %p214 = scmp.eq.s32.totalorder %s40, 0
      %p215 = por %p213, %p214
      %p216 = scmp.ne.s32.totalorder %s208, %s210
      %p217 = scmp.eq.s32.totalorder %s45, 3
      %p218 = por %p216, %p217
      %p219 = scmp.ne.s32.totalorder %s210, %s211
      %p220 = scmp.eq.s32.totalorder %s45, 0
      %p221 = por %p219, %p220
      %p222 = scmp.ne.s32.totalorder %s210, %s211
      %p223 = scmp.eq.s32.totalorder %s46, 3
      %p224 = por %p222, %p223
      %p226 = scmp.ne.s32.totalorder %s211, %s225
      %p227 = scmp.eq.s32.totalorder %s46, 0
      %p228 = por %p226, %p227
      %s230 = sadd.s32 %s229, 1
      %p233 = scmp.eq.s32.totalorder %s40, 3
      %p234 = scmp.ne.s32.totalorder %s229, %s231
      %p235 = scmp.eq.s32.totalorder %s40, 0
      %p236 = por %p234, %p235
      %p237 = scmp.ne.s32.totalorder %s229, %s231
      %p238 = scmp.eq.s32.totalorder %s45, 3
      %p239 = por %p237, %p238
      %p240 = scmp.ne.s32.totalorder %s231, %s232
      %p241 = scmp.eq.s32.totalorder %s45, 0
      %p242 = por %p240, %p241
      %p243 = scmp.ne.s32.totalorder %s231, %s232
      %p244 = scmp.eq.s32.totalorder %s46, 3
      %p245 = por %p243, %p244
      %p247 = scmp.ne.s32.totalorder %s232, %s246
      %p248 = scmp.eq.s32.totalorder %s46, 0
      %p249 = por %p247, %p248
      %s251 = sadd.s32 %s250, 1
      %p254 = scmp.eq.s32.totalorder %s40, 3
      %p255 = scmp.ne.s32.totalorder %s250, %s252
      %p256 = scmp.eq.s32.totalorder %s40, 0
      %p257 = por %p255, %p256
      %p258 = scmp.ne.s32.totalorder %s250, %s252
      %p259 = scmp.eq.s32.totalorder %s45, 3
      %p260 = por %p258, %p259
      %p261 = scmp.ne.s32.totalorder %s252, %s253
      %p262 = scmp.eq.s32.totalorder %s45, 0
      %p263 = por %p261, %p262
      %p264 = scmp.ne.s32.totalorder %s252, %s253
      %p265 = scmp.eq.s32.totalorder %s46, 3
      %p266 = por %p264, %p265
      %p268 = scmp.ne.s32.totalorder %s253, %s267
      %p269 = scmp.eq.s32.totalorder %s46, 0
      %p270 = por %p268, %p269
      %s272 = sadd.s32 %s271, 1
      %p275 = scmp.eq.s32.totalorder %s40, 3
      %p276 = scmp.ne.s32.totalorder %s271, %s273
      %p277 = scmp.eq.s32.totalorder %s40, 0
      %p278 = por %p276, %p277
      %p279 = scmp.ne.s32.totalorder %s271, %s273
      %p280 = scmp.eq.s32.totalorder %s45, 3
      %p281 = por %p279, %p280
      %p282 = scmp.ne.s32.totalorder %s273, %s274
      %p283 = scmp.eq.s32.totalorder %s45, 0
      %p284 = por %p282, %p283
      %p285 = scmp.ne.s32.totalorder %s273, %s274
      %p286 = scmp.eq.s32.totalorder %s46, 3
      %p287 = por %p285, %p286
      %p289 = scmp.ne.s32.totalorder %s274, %s288
      %p290 = scmp.eq.s32.totalorder %s46, 0
      %p291 = por %p289, %p290
      %s293 = sadd.s32 %s292, 1
      %p296 = scmp.eq.s32.totalorder %s40, 3
      %p297 = scmp.ne.s32.totalorder %s292, %s294
      %p298 = scmp.eq.s32.totalorder %s40, 0
      %p299 = por %p297, %p298
      %p300 = scmp.ne.s32.totalorder %s292, %s294
      %p301 = scmp.eq.s32.totalorder %s45, 3
      %p302 = por %p300, %p301
      %p303 = scmp.ne.s32.totalorder %s294, %s295
      %p304 = scmp.eq.s32.totalorder %s45, 0
      %p305 = por %p303, %p304
      %p306 = scmp.ne.s32.totalorder %s294, %s295
      %p307 = scmp.eq.s32.totalorder %s46, 3
      %p308 = por %p306, %p307
      %p310 = scmp.ne.s32.totalorder %s295, %s309
      %p311 = scmp.eq.s32.totalorder %s46, 0
      %p312 = por %p310, %p311
      %s313 = ssub.s32 %s47, %s59
      %p314 = scmp.eq.s32.totalorder %s313, 0
      %s316 = sadd.s32 %s315, 1
      %s317 = scalar_select %p314, %s315, %s316
      %p320 = pneg %p314
      %p321 = scmp.eq.s32.totalorder %s40, 3
      %p322 = por %p320, %p321
      %p323 = scmp.ne.s32.totalorder %s315, %s318
      %p324 = scmp.eq.s32.totalorder %s40, 0
      %p325 = por %p323, %p324
      %p326 = scmp.ne.s32.totalorder %s315, %s318
      %p327 = scmp.eq.s32.totalorder %s45, 3
      %p328 = por %p326, %p327
      %p329 = scmp.ne.s32.totalorder %s318, %s319
      %p330 = scmp.eq.s32.totalorder %s45, 0
      %p331 = por %p329, %p330
      %p332 = scmp.ne.s32.totalorder %s318, %s319
      %p333 = scmp.eq.s32.totalorder %s46, 3
      %p334 = por %p332, %p333
      %p336 = scmp.ne.s32.totalorder %s319, %s335
      %p337 = scmp.eq.s32.totalorder %s46, 0
      %p338 = por %p336, %p337
      %s339 = ssub.s32 %s47, %s59
      %p340 = scmp.eq.s32.totalorder %s339, 0
      %s342 = sadd.s32 %s341, 1
      %s343 = scalar_select %p340, %s341, %s342
      %p346 = pneg %p340
      %p347 = scmp.eq.s32.totalorder %s40, 3
      %p348 = por %p346, %p347
      %p349 = scmp.ne.s32.totalorder %s341, %s344
      %p350 = scmp.eq.s32.totalorder %s40, 0
      %p351 = por %p349, %p350
      %p352 = scmp.ne.s32.totalorder %s341, %s344
      %p353 = scmp.eq.s32.totalorder %s45, 3
      %p354 = por %p352, %p353
      %p355 = scmp.ne.s32.totalorder %s344, %s345
      %p356 = scmp.eq.s32.totalorder %s45, 0
      %p357 = por %p355, %p356
      %p358 = scmp.ne.s32.totalorder %s344, %s345
      %p359 = scmp.eq.s32.totalorder %s46, 3
      %p360 = por %p358, %p359
      %p362 = scmp.ne.s32.totalorder %s345, %s361
      %p363 = scmp.eq.s32.totalorder %s46, 0
      %p364 = por %p362, %p363
      %s365 = ssub.s32 %s47, %s59
      %p366 = scmp.eq.s32.totalorder %s365, 0
      %s368 = sadd.s32 %s367, 1
      %s369 = scalar_select %p366, %s367, %s368
      %p372 = pneg %p366
      %p373 = scmp.eq.s32.totalorder %s40, 3
      %p374 = por %p372, %p373
      %p375 = scmp.ne.s32.totalorder %s367, %s370
      %p376 = scmp.eq.s32.totalorder %s40, 0
      %p377 = por %p375, %p376
      %p378 = scmp.ne.s32.totalorder %s367, %s370
      %p379 = scmp.eq.s32.totalorder %s45, 3
      %p380 = por %p378, %p379
      %p381 = scmp.ne.s32.totalorder %s370, %s371
      %p382 = scmp.eq.s32.totalorder %s45, 0
      %p383 = por %p381, %p382
      %p384 = scmp.ne.s32.totalorder %s370, %s371
      %p385 = scmp.eq.s32.totalorder %s46, 3
      %p386 = por %p384, %p385
      %p388 = scmp.ne.s32.totalorder %s371, %s387
      %p389 = scmp.eq.s32.totalorder %s46, 0
      %p390 = por %p388, %p389
      %p391 = scmp.le.s32.totalorder 1, %s40
      %p392 = scmp.lt.s32.totalorder %s40, 5
      %p393 = pnand %p391, %p392
      %p394 = pneg %p393
      // Predicated region
      $region9: #{tpu_custom_call.1} parent=5 // pred_check
        _
      $region10: #{tpu_custom_call.1} parent=5 // pred_check_branch
        %396 = sbr.rel (%p393) target = $region12
      $region11: #{tpu_custom_call.1} parent=5 // pred_region
        %s397 = ssub.s32 %s40, 1
        // Predicated region
        $region13: #{tpu_custom_call.1} parent=11 // pred_check
          %p398 = pneg %p179
        $region14: #{tpu_custom_call.1} parent=11 // pred_check_branch
          %400 = sbr.rel (%p398) target = $region16
        $region15: #{tpu_custom_call.1} parent=11 // pred_region
          %s402 = ssub.s32 2048, 2048
          %403 = vsyncadd [#allocation13], %s402
          %s404 = sshll.u32 [#allocation14], 4
          %s405 = int_to_ptr.vmem [resolvable:$true] %s404
          %410 = dma.hbm_to_vmem [thread:$0]  %s4, 2048, %s405, [#allocation13], 128, 128, 8
        $region16: #{tpu_custom_call.1} parent=11 // pred_fallthru
          _
        // Predicated region
        $region17: #{tpu_custom_call.1} parent=11 // pred_check
          %p411 = pneg %p200
        $region18: #{tpu_custom_call.1} parent=11 // pred_check_branch
          %413 = sbr.rel (%p411) target = $region20
        $region19: #{tpu_custom_call.1} parent=11 // pred_region
          %s415 = ssub.s32 16, 16
          %416 = vsyncadd [#allocation16], %s415
          %s418 = sshll.u32 [#allocation15], 4
          %s419 = int_to_ptr.vmem [resolvable:$true] %s418
          %421 = dma.hbm_to_vmem [thread:$0]  %s5, 16, %s419, [#allocation16]
        $region20: #{tpu_custom_call.1} parent=11 // pred_fallthru
          _
        // Predicated region
        $region21: #{tpu_custom_call.1} parent=11 // pred_check
          %p422 = pneg %p221
        $region22: #{tpu_custom_call.1} parent=11 // pred_check_branch
          %424 = sbr.rel (%p422) target = $region24
        $region23: #{tpu_custom_call.1} parent=11 // pred_region
          %s426 = ssub.s32 16, 16
          %427 = vsyncadd [#allocation16], %s426
          %s429 = sshll.u32 [#allocation17], 4
          %s430 = int_to_ptr.vmem [resolvable:$true] %s429
          %432 = dma.hbm_to_vmem [thread:$0]  %s6, 16, %s430, [#allocation16]
        $region24: #{tpu_custom_call.1} parent=11 // pred_fallthru
          _
        // Predicated region
        $region25: #{tpu_custom_call.1} parent=11 // pred_check
          %p433 = pneg %p242
        $region26: #{tpu_custom_call.1} parent=11 // pred_check_branch
          %435 = sbr.rel (%p433) target = $region28
        $region27: #{tpu_custom_call.1} parent=11 // pred_region
          _
        $region28: #{tpu_custom_call.1} parent=11 // pred_fallthru
          _
        // Predicated region
        $region29: #{tpu_custom_call.1} parent=11 // pred_check
          %p436 = pneg %p263
        $region30: #{tpu_custom_call.1} parent=11 // pred_check_branch
          %438 = sbr.rel (%p436) target = $region32
        $region31: #{tpu_custom_call.1} parent=11 // pred_region
          %s440 = ssub.s32 8192, 8192
          %441 = vsyncadd [#allocation19], %s440
          %s442 = sshll.u32 [#allocation18], 4
          %s443 = int_to_ptr.vmem [resolvable:$true] %s442
          %448 = dma.hbm_to_vmem [thread:$0]  %s8, 8192, %s443, [#allocation19], 512, 512, 32
        $region32: #{tpu_custom_call.1} parent=11 // pred_fallthru
          _
        // Predicated region
        $region33: #{tpu_custom_call.1} parent=11 // pred_check
          %p449 = pneg %p284
        $region34: #{tpu_custom_call.1} parent=11 // pred_check_branch
          %451 = sbr.rel (%p449) target = $region36
        $region35: #{tpu_custom_call.1} parent=11 // pred_region
          %s453 = ssub.s32 2048, 2048
          %454 = vsyncadd [#allocation19], %s453
          %s455 = sshll.u32 [#allocation20], 4
          %s456 = int_to_ptr.vmem [resolvable:$true] %s455
          %461 = dma.hbm_to_vmem [thread:$0]  %s9, 2048, %s456, [#allocation19], 128, 128, 8
        $region36: #{tpu_custom_call.1} parent=11 // pred_fallthru
          _
        // Predicated region
        $region37: #{tpu_custom_call.1} parent=11 // pred_check
          %p462 = pneg %p305
        $region38: #{tpu_custom_call.1} parent=11 // pred_check_branch
          %464 = sbr.rel (%p462) target = $region40
        $region39: #{tpu_custom_call.1} parent=11 // pred_region
          %s466 = ssub.s32 16, 16
          %467 = vsyncadd [#allocation22], %s466
          %s469 = sshll.u32 [#allocation21], 4
          %s470 = int_to_ptr.vmem [resolvable:$true] %s469
          %472 = dma.hbm_to_vmem [thread:$0]  %s10, 16, %s470, [#allocation22]
        $region40: #{tpu_custom_call.1} parent=11 // pred_fallthru
          _
      $region12: #{tpu_custom_call.1} parent=5 // pred_fallthru
        _
      %p473 = scmp.lt.s32.totalorder %s40, 4
      // Predicated region
      $region41: #{tpu_custom_call.1} parent=5 // pred_check
        %p474 = pneg %p473
      $region42: #{tpu_custom_call.1} parent=5 // pred_check_branch
        %476 = sbr.rel (%p474) target = $region44
      $region43: #{tpu_custom_call.1} parent=5 // pred_region
        // Predicated region
        $region45: #{tpu_custom_call.1} parent=43 // pred_check
          %p477 = pneg %p74
        $region46: #{tpu_custom_call.1} parent=43 // pred_check_branch
          %479 = sbr.rel (%p477) target = $region48
        $region47: #{tpu_custom_call.1} parent=43 // pred_region
          #allocation28 [shape = 'u32[6]{0}', space=smem, size = 0x18, scoped, tag = 'DMA stride descriptor']
          %s480 = sand.u32 %s64, 1
          %s481 = scalar_lea.sflag [#allocation7], %s480
          %s482 = sand.u32 %s64, 1
          %s483 = smul.addr %s482, 1024
          %s484 = scalar_lea.vmem [#allocation6], %s483
          %s485 = smul.u32 8, %s47
          %s486 = smul.u32 16, %s48
          %s488 = ssub.s32 16384, 16384
          %489 = vsyncadd %s481, %s488
          %s490 = smul.addr %s485, 32
          %s491 = sadd.s32 %s486, %s490
          %s492 = smul.addr %s491, 128
          %s493 = scalar_lea.hbm %s0, %s492
          %s495 = sshll.u32 1, 14
          %s496 = sxor.u32 4294967295, %s495
          %s498 = sld [smem:[#allocation0]]
          %s499 = sadd.s32 2, %s498
          %s501 = sshll.u32 7, 26
          %s502 = sxor.u32 4294967295, %s501
          %s503 = sand.u32 0, %s502
          %s504 = sshll.u32 %s499, 26
          %s505 = sor.u32 %s503, %s504
          %s506 = sshll.u32 %s484, 4
          %s507 = int_to_ptr.vmem [resolvable:$true] %s506
          %513 = sst [smem:[#allocation28]] 4096
          %s514 = scalar_lea.smem [#allocation28], 1
          %515 = sst [smem:[%s514]] 2048
          %s516 = scalar_lea.smem [#allocation28], 2
          %517 = sst [smem:[%s516]] 16
          %s518 = scalar_lea.smem [#allocation28], 3
          %519 = sst [smem:[%s518]] 128
          %s520 = scalar_lea.smem [#allocation28], 4
          %521 = sst [smem:[%s520]] 128
          %s522 = scalar_lea.smem [#allocation28], 5
          %523 = sst [smem:[%s522]] 8
          %525 = dma.general %s493, 16384, %s507, %s481, 131072, [#allocation28], %s505, 0
        $region48: #{tpu_custom_call.1} parent=43 // pred_fallthru
          _
        // Predicated region
        $region49: #{tpu_custom_call.1} parent=43 // pred_check
          %p526 = pneg %p100
        $region50: #{tpu_custom_call.1} parent=43 // pred_check_branch
          %528 = sbr.rel (%p526) target = $region52
        $region51: #{tpu_custom_call.1} parent=43 // pred_region
          %s529 = sand.u32 %s40, 1
          %s530 = scalar_lea.sflag [#allocation10], %s529
          %s531 = sand.u32 %s90, 1
          %s532 = smul.addr %s531, 8
          %s533 = scalar_lea.vmem [#allocation9], %s532
          %s535 = ssub.s32 128, 128
          %536 = vsyncadd %s530, %s535
          %s537 = smul.addr %s47, 128
          %s538 = scalar_lea.hbm %s1, %s537
          %s540 = sshll.u32 %s533, 4
          %s541 = int_to_ptr.vmem [resolvable:$true] %s540
          %543 = dma.hbm_to_vmem [thread:$0]  %s538, 128, %s541, %s530
        $region52: #{tpu_custom_call.1} parent=43 // pred_fallthru
          _
        // Predicated region
        $region53: #{tpu_custom_call.1} parent=43 // pred_check
          %p544 = pneg %p126
        $region54: #{tpu_custom_call.1} parent=43 // pred_check_branch
          %546 = sbr.rel (%p544) target = $region56
        $region55: #{tpu_custom_call.1} parent=43 // pred_region
          %s547 = sand.u32 %s40, 1
          %s548 = scalar_lea.sflag [#allocation10], %s547
          %s549 = sand.u32 %s116, 1
          %s550 = smul.addr %s549, 8
          %s551 = scalar_lea.vmem [#allocation11], %s550
          %s553 = ssub.s32 128, 128
          %554 = vsyncadd %s548, %s553
          %s555 = smul.addr %s47, 128
          %s556 = scalar_lea.hbm %s2, %s555
          %s558 = sshll.u32 %s551, 4
          %s559 = int_to_ptr.vmem [resolvable:$true] %s558
          %561 = dma.hbm_to_vmem [thread:$0]  %s556, 128, %s559, %s548
        $region56: #{tpu_custom_call.1} parent=43 // pred_fallthru
          _
        // Predicated region
        $region57: #{tpu_custom_call.1} parent=43 // pred_check
          %p562 = pneg %p152
        $region58: #{tpu_custom_call.1} parent=43 // pred_check_branch
          %564 = sbr.rel (%p562) target = $region60
        $region59: #{tpu_custom_call.1} parent=43 // pred_region
          %s565 = sand.u32 %s40, 1
          %s566 = scalar_lea.sflag [#allocation13], %s565
          %s567 = sand.u32 %s142, 1
          %s568 = smul.addr %s567, 32
          %s569 = scalar_lea.vmem [#allocation12], %s568
          %s571 = ssub.s32 512, 512
          %572 = vsyncadd %s566, %s571
          %s573 = smul.addr %s47, 4
          %s574 = smul.addr %s573, 128
          %s575 = scalar_lea.hbm %s3, %s574
          %s577 = sshll.u32 %s569, 4
          %s578 = int_to_ptr.vmem [resolvable:$true] %s577
          %580 = dma.hbm_to_vmem [thread:$0]  %s575, 512, %s578, %s566
        $region60: #{tpu_custom_call.1} parent=43 // pred_fallthru
          _
      $region44: #{tpu_custom_call.1} parent=5 // pred_fallthru
        _
      %p581 = scmp.le.s32.totalorder 1, %s40
      %p582 = scmp.lt.s32.totalorder %s40, 5
      %p583 = pnand %p581, %p582
      %p584 = pneg %p583
      // Predicated region
      $region61: #{tpu_custom_call.1} parent=5 // pred_check
        _
      $region62: #{tpu_custom_call.1} parent=5 // pred_check_branch
        %586 = sbr.rel (%p583) target = $region64
      $region63: #{tpu_custom_call.1} parent=5 // pred_region
        %s587 = ssub.s32 %s40, 1
        %s588 = sand.u32 %s67, 1
        %s589 = scalar_lea.sflag [#allocation7], %s588
        %s590 = sand.u32 %s67, 1
        %s591 = smul.addr %s590, 1024
        %s592 = scalar_lea.vmem [#allocation6], %s591
        // Predicated region
        $region65: #{tpu_custom_call.1} parent=63 // pred_check
          %p593 = pneg %p80
        $region66: #{tpu_custom_call.1} parent=63 // pred_check_branch
          %595 = sbr.rel (%p593) target = $region68
        $region67: #{tpu_custom_call.1} parent=63 // pred_region
          %596 = dma.done %s589, 16384
        $region68: #{tpu_custom_call.1} parent=63 // pred_fallthru
          _
        %s597 = sand.u32 %s45, 1
        %s598 = scalar_lea.sflag [#allocation10], %s597
        %s599 = sand.u32 %s93, 1
        %s600 = smul.addr %s599, 8
        %s601 = scalar_lea.vmem [#allocation9], %s600
        // Predicated region
        $region69: #{tpu_custom_call.1} parent=63 // pred_check
          %p602 = pneg %p106
        $region70: #{tpu_custom_call.1} parent=63 // pred_check_branch
          %604 = sbr.rel (%p602) target = $region72
        $region71: #{tpu_custom_call.1} parent=63 // pred_region
          %605 = dma.done %s598, 128
        $region72: #{tpu_custom_call.1} parent=63 // pred_fallthru
          _
        %s606 = sand.u32 %s45, 1
        %s607 = scalar_lea.sflag [#allocation10], %s606
        %s608 = sand.u32 %s119, 1
        %s609 = smul.addr %s608, 8
        %s610 = scalar_lea.vmem [#allocation11], %s609
        // Predicated region
        $region73: #{tpu_custom_call.1} parent=63 // pred_check
          %p611 = pneg %p132
        $region74: #{tpu_custom_call.1} parent=63 // pred_check_branch
          %613 = sbr.rel (%p611) target = $region76
        $region75: #{tpu_custom_call.1} parent=63 // pred_region
          %614 = dma.done %s607, 128
        $region76: #{tpu_custom_call.1} parent=63 // pred_fallthru
          _
        %s615 = sand.u32 %s45, 1
        %s616 = scalar_lea.sflag [#allocation13], %s615
        %s617 = sand.u32 %s145, 1
        %s618 = smul.addr %s617, 32
        %s619 = scalar_lea.vmem [#allocation12], %s618
        // Predicated region
        $region77: #{tpu_custom_call.1} parent=63 // pred_check
          %p620 = pneg %p158
        $region78: #{tpu_custom_call.1} parent=63 // pred_check_branch
          %622 = sbr.rel (%p620) target = $region80
        $region79: #{tpu_custom_call.1} parent=63 // pred_region
          %623 = dma.done %s616, 512
        $region80: #{tpu_custom_call.1} parent=63 // pred_fallthru
          _
        // Predicated region
        $region81: #{tpu_custom_call.1} parent=63 // pred_check
          %p624 = pneg %p179
        $region82: #{tpu_custom_call.1} parent=63 // pred_check_branch
          %626 = sbr.rel (%p624) target = $region84
        $region83: #{tpu_custom_call.1} parent=63 // pred_region
          %627 = dma.done [#allocation13], 2048
        $region84: #{tpu_custom_call.1} parent=63 // pred_fallthru
          _
        // Predicated region
        $region85: #{tpu_custom_call.1} parent=63 // pred_check
          %p628 = pneg %p200
        $region86: #{tpu_custom_call.1} parent=63 // pred_check_branch
          %630 = sbr.rel (%p628) target = $region88
        $region87: #{tpu_custom_call.1} parent=63 // pred_region
          %631 = dma.done [#allocation16], 16
        $region88: #{tpu_custom_call.1} parent=63 // pred_fallthru
          _
        // Predicated region
        $region89: #{tpu_custom_call.1} parent=63 // pred_check
          %p632 = pneg %p221
        $region90: #{tpu_custom_call.1} parent=63 // pred_check_branch
          %634 = sbr.rel (%p632) target = $region92
        $region91: #{tpu_custom_call.1} parent=63 // pred_region
          %635 = dma.done [#allocation16], 16
        $region92: #{tpu_custom_call.1} parent=63 // pred_fallthru
          _
        // Predicated region
        $region93: #{tpu_custom_call.1} parent=63 // pred_check
          %p636 = pneg %p263
        $region94: #{tpu_custom_call.1} parent=63 // pred_check_branch
          %638 = sbr.rel (%p636) target = $region96
        $region95: #{tpu_custom_call.1} parent=63 // pred_region
          %639 = dma.done [#allocation19], 8192
        $region96: #{tpu_custom_call.1} parent=63 // pred_fallthru
          _
        // Predicated region
        $region97: #{tpu_custom_call.1} parent=63 // pred_check
          %p640 = pneg %p284
        $region98: #{tpu_custom_call.1} parent=63 // pred_check_branch
          %642 = sbr.rel (%p640) target = $region100
        $region99: #{tpu_custom_call.1} parent=63 // pred_region
          %643 = dma.done [#allocation19], 2048
        $region100: #{tpu_custom_call.1} parent=63 // pred_fallthru
          _
        // Predicated region
        $region101: #{tpu_custom_call.1} parent=63 // pred_check
          %p644 = pneg %p305
        $region102: #{tpu_custom_call.1} parent=63 // pred_check_branch
          %646 = sbr.rel (%p644) target = $region104
        $region103: #{tpu_custom_call.1} parent=63 // pred_region
          %647 = dma.done [#allocation22], 16
        $region104: #{tpu_custom_call.1} parent=63 // pred_fallthru
          _
        %s648 = sand.u32 %s67, 1
        %s649 = scalar_lea.sflag [#allocation7], %s648
        %s650 = sand.u32 %s67, 1
        %s651 = smul.addr %s650, 1024
        %s652 = scalar_lea.vmem [#allocation6], %s651
        %p653 = pneg %p80
        %p654 = pneg %p77
        %s655 = sand.u32 %s45, 1
        %s656 = scalar_lea.sflag [#allocation10], %s655
        %s657 = sand.u32 %s93, 1
        %s658 = smul.addr %s657, 8
        %s659 = scalar_lea.vmem [#allocation9], %s658
        %p660 = pneg %p106
        %p661 = pneg %p103
        %s662 = sand.u32 %s45, 1
        %s663 = scalar_lea.sflag [#allocation10], %s662
        %s664 = sand.u32 %s119, 1
        %s665 = smul.addr %s664, 8
        %s666 = scalar_lea.vmem [#allocation11], %s665
        %p667 = pneg %p132
        %p668 = pneg %p129
        %s669 = sand.u32 %s45, 1
        %s670 = scalar_lea.sflag [#allocation13], %s669
        %s671 = sand.u32 %s145, 1
        %s672 = smul.addr %s671, 32
        %s673 = scalar_lea.vmem [#allocation12], %s672
        %p674 = pneg %p158
        %p675 = pneg %p155
        %p676 = pneg %p179
        %p677 = pneg %p176
        %p678 = pneg %p200
        %p679 = pneg %p197
        %p680 = pneg %p221
        %p681 = pneg %p218
        %p682 = pneg %p242
        %p683 = pneg %p239
        %p684 = pneg %p263
        %p685 = pneg %p260
        %p686 = pneg %p284
        %p687 = pneg %p281
        %p688 = pneg %p305
        %p689 = pneg %p302
        %p690 = pneg %p331
        %p691 = pneg %p328
        %s692 = sand.u32 %s318, 1
        %s693 = scalar_lea.sflag [#allocation8], %s692
        %s694 = sand.u32 %s318, 1
        %s695 = smul.addr %s694, 8
        %s696 = scalar_lea.vmem [#allocation23], %s695
        %p697 = pneg %p357
        %p698 = pneg %p354
        %s699 = sand.u32 %s45, 1
        %s700 = scalar_lea.sflag [#allocation25], %s699
        %s701 = sand.u32 %s344, 1
        %s702 = smul.addr %s701, 8
        %s703 = scalar_lea.vmem [#allocation24], %s702
        %p704 = pneg %p383
        %p705 = pneg %p380
        %s706 = sand.u32 %s45, 1
        %s707 = scalar_lea.sflag [#allocation25], %s706
        %s708 = sand.u32 %s370, 1
        %s709 = smul.addr %s708, 8
        %s710 = scalar_lea.vmem [#allocation26], %s709
        %s711 = smul.u32 8, %s49
        %s712 = smul.u32 16, %s50
        %p713 = scmp.eq.s32.totalorder %s50, 0
        // Predicated region
        $region105: #{tpu_custom_call.1} parent=63 // pred_check
          %p714 = pneg %p713
        $region106: #{tpu_custom_call.1} parent=63 // pred_check_branch
          %716 = sbr.rel (%p714) target = $region108
        $region107: #{tpu_custom_call.1} parent=63 // pred_region
          %vm717 = vcmask 7168
          %718 = vst.msk [vmem:[#allocation2] sm:$0xff] %vm717, -inf
          %719 = vst.msk [vmem:[#allocation3] sm:$0xff] %vm717, 0.0
          %720 = vst [vmem:[#allocation4] sm:$0xff] 0.0
        $region108: #{tpu_custom_call.1} parent=63 // pred_fallthru
          _
        %v721 = vld [vmem:[%s592] sm:$0xff]
        %v722 = vld [vmem:[%s592 + $0x8] sm:$0xff]
        %v723 = vld [vmem:[%s592 + $0x10] sm:$0xff]
        %v724 = vld [vmem:[%s592 + $0x18] sm:$0xff]
        %v725 = vld [vmem:[%s592 + $0x20] sm:$0xff]
        %v726 = vld [vmem:[%s592 + $0x28] sm:$0xff]
        %v727 = vld [vmem:[%s592 + $0x30] sm:$0xff]
        %v728 = vld [vmem:[%s592 + $0x38] sm:$0xff]
        %v729 = vld [vmem:[%s592 + $0x40] sm:$0xff]
        %v730 = vld [vmem:[%s592 + $0x48] sm:$0xff]
        %v731 = vld [vmem:[%s592 + $0x50] sm:$0xff]
        %v732 = vld [vmem:[%s592 + $0x58] sm:$0xff]
        %v733 = vld [vmem:[%s592 + $0x60] sm:$0xff]
        %v734 = vld [vmem:[%s592 + $0x68] sm:$0xff]
        %v735 = vld [vmem:[%s592 + $0x70] sm:$0xff]
        %v736 = vld [vmem:[%s592 + $0x78] sm:$0xff]
        %v737 = vld [vmem:[%s592 + $0x80] sm:$0xff]
        %v738 = vld [vmem:[%s592 + $0x88] sm:$0xff]
        %v739 = vld [vmem:[%s592 + $0x90] sm:$0xff]
        %v740 = vld [vmem:[%s592 + $0x98] sm:$0xff]
        %v741 = vld [vmem:[%s592 + $0xa0] sm:$0xff]
        %v742 = vld [vmem:[%s592 + $0xa8] sm:$0xff]
        %v743 = vld [vmem:[%s592 + $0xb0] sm:$0xff]
        %v744 = vld [vmem:[%s592 + $0xb8] sm:$0xff]
        %v745 = vld [vmem:[%s592 + $0xc0] sm:$0xff]
        %v746 = vld [vmem:[%s592 + $0xc8] sm:$0xff]
        %v747 = vld [vmem:[%s592 + $0xd0] sm:$0xff]
        %v748 = vld [vmem:[%s592 + $0xd8] sm:$0xff]
        %v749 = vld [vmem:[%s592 + $0xe0] sm:$0xff]
        %v750 = vld [vmem:[%s592 + $0xe8] sm:$0xff]
        %v751 = vld [vmem:[%s592 + $0xf0] sm:$0xff]
        %v752 = vld [vmem:[%s592 + $0xf8] sm:$0xff]
        %v753 = vld [vmem:[%s592 + $0x100] sm:$0xff]
        %v754 = vld [vmem:[%s592 + $0x108] sm:$0xff]
        %v755 = vld [vmem:[%s592 + $0x110] sm:$0xff]
        %v756 = vld [vmem:[%s592 + $0x118] sm:$0xff]
        %v757 = vld [vmem:[%s592 + $0x120] sm:$0xff]
        %v758 = vld [vmem:[%s592 + $0x128] sm:$0xff]
        %v759 = vld [vmem:[%s592 + $0x130] sm:$0xff]
        %v760 = vld [vmem:[%s592 + $0x138] sm:$0xff]
        %v761 = vld [vmem:[%s592 + $0x140] sm:$0xff]
        %v762 = vld [vmem:[%s592 + $0x148] sm:$0xff]
        %v763 = vld [vmem:[%s592 + $0x150] sm:$0xff]
        %v764 = vld [vmem:[%s592 + $0x158] sm:$0xff]
        %v765 = vld [vmem:[%s592 + $0x160] sm:$0xff]
        %v766 = vld [vmem:[%s592 + $0x168] sm:$0xff]
        %v767 = vld [vmem:[%s592 + $0x170] sm:$0xff]
        %v768 = vld [vmem:[%s592 + $0x178] sm:$0xff]
        %v769 = vld [vmem:[%s592 + $0x180] sm:$0xff]
        %v770 = vld [vmem:[%s592 + $0x188] sm:$0xff]
        %v771 = vld [vmem:[%s592 + $0x190] sm:$0xff]
        %v772 = vld [vmem:[%s592 + $0x198] sm:$0xff]
        %v773 = vld [vmem:[%s592 + $0x1a0] sm:$0xff]
        %v774 = vld [vmem:[%s592 + $0x1a8] sm:$0xff]
        %v775 = vld [vmem:[%s592 + $0x1b0] sm:$0xff]
        %v776 = vld [vmem:[%s592 + $0x1b8] sm:$0xff]
        %v777 = vld [vmem:[%s592 + $0x1c0] sm:$0xff]
        %v778 = vld [vmem:[%s592 + $0x1c8] sm:$0xff]
        %v779 = vld [vmem:[%s592 + $0x1d0] sm:$0xff]
        %v780 = vld [vmem:[%s592 + $0x1d8] sm:$0xff]
        %v781 = vld [vmem:[%s592 + $0x1e0] sm:$0xff]
        %v782 = vld [vmem:[%s592 + $0x1e8] sm:$0xff]
        %v783 = vld [vmem:[%s592 + $0x1f0] sm:$0xff]
        %v784 = vld [vmem:[%s592 + $0x1f8] sm:$0xff]
        %v785 = vld [vmem:[%s592 + $0x200] sm:$0xff]
        %v786 = vld [vmem:[%s592 + $0x208] sm:$0xff]
        %v787 = vld [vmem:[%s592 + $0x210] sm:$0xff]
        %v788 = vld [vmem:[%s592 + $0x218] sm:$0xff]
        %v789 = vld [vmem:[%s592 + $0x220] sm:$0xff]
        %v790 = vld [vmem:[%s592 + $0x228] sm:$0xff]
        %v791 = vld [vmem:[%s592 + $0x230] sm:$0xff]
        %v792 = vld [vmem:[%s592 + $0x238] sm:$0xff]
        %v793 = vld [vmem:[%s592 + $0x240] sm:$0xff]
        %v794 = vld [vmem:[%s592 + $0x248] sm:$0xff]
        %v795 = vld [vmem:[%s592 + $0x250] sm:$0xff]
        %v796 = vld [vmem:[%s592 + $0x258] sm:$0xff]
        %v797 = vld [vmem:[%s592 + $0x260] sm:$0xff]
        %v798 = vld [vmem:[%s592 + $0x268] sm:$0xff]
        %v799 = vld [vmem:[%s592 + $0x270] sm:$0xff]
        %v800 = vld [vmem:[%s592 + $0x278] sm:$0xff]
        %v801 = vld [vmem:[%s592 + $0x280] sm:$0xff]
        %v802 = vld [vmem:[%s592 + $0x288] sm:$0xff]
        %v803 = vld [vmem:[%s592 + $0x290] sm:$0xff]
        %v804 = vld [vmem:[%s592 + $0x298] sm:$0xff]
        %v805 = vld [vmem:[%s592 + $0x2a0] sm:$0xff]
        %v806 = vld [vmem:[%s592 + $0x2a8] sm:$0xff]
        %v807 = vld [vmem:[%s592 + $0x2b0] sm:$0xff]
        %v808 = vld [vmem:[%s592 + $0x2b8] sm:$0xff]
        %v809 = vld [vmem:[%s592 + $0x2c0] sm:$0xff]
        %v810 = vld [vmem:[%s592 + $0x2c8] sm:$0xff]
        %v811 = vld [vmem:[%s592 + $0x2d0] sm:$0xff]
        %v812 = vld [vmem:[%s592 + $0x2d8] sm:$0xff]
        %v813 = vld [vmem:[%s592 + $0x2e0] sm:$0xff]
        %v814 = vld [vmem:[%s592 + $0x2e8] sm:$0xff]
        %v815 = vld [vmem:[%s592 + $0x2f0] sm:$0xff]
        %v816 = vld [vmem:[%s592 + $0x2f8] sm:$0xff]
        %v817 = vld [vmem:[%s592 + $0x300] sm:$0xff]
        %v818 = vld [vmem:[%s592 + $0x308] sm:$0xff]
        %v819 = vld [vmem:[%s592 + $0x310] sm:$0xff]
        %v820 = vld [vmem:[%s592 + $0x318] sm:$0xff]
        %v821 = vld [vmem:[%s592 + $0x320] sm:$0xff]
        %v822 = vld [vmem:[%s592 + $0x328] sm:$0xff]
        %v823 = vld [vmem:[%s592 + $0x330] sm:$0xff]
        %v824 = vld [vmem:[%s592 + $0x338] sm:$0xff]
        %v825 = vld [vmem:[%s592 + $0x340] sm:$0xff]
        %v826 = vld [vmem:[%s592 + $0x348] sm:$0xff]
        %v827 = vld [vmem:[%s592 + $0x350] sm:$0xff]
        %v828 = vld [vmem:[%s592 + $0x358] sm:$0xff]
        %v829 = vld [vmem:[%s592 + $0x360] sm:$0xff]
        %v830 = vld [vmem:[%s592 + $0x368] sm:$0xff]
        %v831 = vld [vmem:[%s592 + $0x370] sm:$0xff]
        %v832 = vld [vmem:[%s592 + $0x378] sm:$0xff]
        %v833 = vld [vmem:[%s592 + $0x380] sm:$0xff]
        %v834 = vld [vmem:[%s592 + $0x388] sm:$0xff]
        %v835 = vld [vmem:[%s592 + $0x390] sm:$0xff]
        %v836 = vld [vmem:[%s592 + $0x398] sm:$0xff]
        %v837 = vld [vmem:[%s592 + $0x3a0] sm:$0xff]
        %v838 = vld [vmem:[%s592 + $0x3a8] sm:$0xff]
        %v839 = vld [vmem:[%s592 + $0x3b0] sm:$0xff]
        %v840 = vld [vmem:[%s592 + $0x3b8] sm:$0xff]
        %v841 = vld [vmem:[%s592 + $0x3c0] sm:$0xff]
        %v842 = vld [vmem:[%s592 + $0x3c8] sm:$0xff]
        %v843 = vld [vmem:[%s592 + $0x3d0] sm:$0xff]
        %v844 = vld [vmem:[%s592 + $0x3d8] sm:$0xff]
        %v845 = vld [vmem:[%s592 + $0x3e0] sm:$0xff]
        %v846 = vld [vmem:[%s592 + $0x3e8] sm:$0xff]
        %v847 = vld [vmem:[%s592 + $0x3f0] sm:$0xff]
        %v848 = vld [vmem:[%s592 + $0x3f8] sm:$0xff]
        %v849 = vld [vmem:[#allocation14] sm:$0xff]
        %v850 = vld [vmem:[#allocation14 + $0x8] sm:$0xff]
        %v851 = vld [vmem:[#allocation14 + $0x10] sm:$0xff]
        %v852 = vld [vmem:[#allocation14 + $0x18] sm:$0xff]
        %v853 = vld [vmem:[#allocation14 + $0x20] sm:$0xff]
        %v854 = vld [vmem:[#allocation14 + $0x28] sm:$0xff]
        %v855 = vld [vmem:[#allocation14 + $0x30] sm:$0xff]
        %v856 = vld [vmem:[#allocation14 + $0x38] sm:$0xff]
        %v857 = vld [vmem:[#allocation14 + $0x40] sm:$0xff]
        %v858 = vld [vmem:[#allocation14 + $0x48] sm:$0xff]
        %v859 = vld [vmem:[#allocation14 + $0x50] sm:$0xff]
        %v860 = vld [vmem:[#allocation14 + $0x58] sm:$0xff]
        %v861 = vld [vmem:[#allocation14 + $0x60] sm:$0xff]
        %v862 = vld [vmem:[#allocation14 + $0x68] sm:$0xff]
        %v863 = vld [vmem:[#allocation14 + $0x70] sm:$0xff]
        %v864 = vld [vmem:[#allocation14 + $0x78] sm:$0xff]
        %v865 = vld [vmem:[#allocation15] sm:$0x1]
        %v867 = vlaneseq
        %v868 = vshrl.u32 %v867, 7
        %v869 = vsub.s32 0, %v868
        %v870 = vrot.slane %v865, %v869
        %872 = vmatprep.subr.mxu0 0.0
        %873 = vmatpush1.msra.mxu0 %v864
        %874 = vmatprep.subr.mxu0 0.0
        %875 = vmatpush1.msra.mxu0 %v863
        %876 = vmatprep.subr.mxu0 0.0
        %877 = vmatpush1.msra.mxu0 %v862
        %878 = vmatprep.subr.mxu0 0.0
        %879 = vmatpush1.msra.mxu0 %v861
        %880 = vmatprep.subr.mxu0 0.0
        %881 = vmatpush1.msra.mxu0 %v860
        %882 = vmatprep.subr.mxu0 0.0
        %883 = vmatpush1.msra.mxu0 %v859
        %884 = vmatprep.subr.mxu0 0.0
        %885 = vmatpush1.msra.mxu0 %v858
        %886 = vmatprep.subr.mxu0 0.0
        %887 = vmatpush1.msra.mxu0 %v857
        %888 = vmatprep.subr.mxu0 0.0
        %889 = vmatpush1.msra.mxu0 %v856
        %890 = vmatprep.subr.mxu0 0.0
        %891 = vmatpush1.msra.mxu0 %v855
        %892 = vmatprep.subr.mxu0 0.0
        %893 = vmatpush1.msra.mxu0 %v854
        %894 = vmatprep.subr.mxu0 0.0
        %895 = vmatpush1.msra.mxu0 %v853
        %896 = vmatprep.subr.mxu0 0.0
        %897 = vmatpush1.msra.mxu0 %v852
        %898 = vmatprep.subr.mxu0 0.0
        %899 = vmatpush1.msra.mxu0 %v851
        %900 = vmatprep.subr.mxu0 0.0
        %901 = vmatpush1.msra.mxu0 %v850
        %902 = vmatprep.subr.mxu0 0.0
        %903 = vmatpush1.msra.mxu0 %v849
        %904 = vmatprep.subr.mxu0 0.0
        %905 = vmatpush2.msra.mxu0 0.0
        %906 = vmatprep.subr.mxu0 0.0
        %907 = vmatpush2.msra.mxu0 0.0
        %908 = vmatprep.subr.mxu0 0.0
        %909 = vmatpush2.msra.mxu0 0.0
        %910 = vmatprep.subr.mxu0 0.0
        %911 = vmatpush2.msra.mxu0 0.0
        %912 = vmatprep.subr.mxu0 0.0
        %913 = vmatpush2.msra.mxu0 0.0
        %914 = vmatprep.subr.mxu0 0.0
        %915 = vmatpush2.msra.mxu0 0.0
        %916 = vmatprep.subr.mxu0 0.0
        %917 = vmatpush2.msra.mxu0 0.0
        %918 = vmatprep.subr.mxu0 0.0
        %919 = vmatpush2.msra.mxu0 0.0
        %920 = vmatprep.subr.mxu0 0.0
        %921 = vmatpush2.msra.mxu0 0.0
        %922 = vmatprep.subr.mxu0 0.0
        %923 = vmatpush2.msra.mxu0 0.0
        %924 = vmatprep.subr.mxu0 0.0
        %925 = vmatpush2.msra.mxu0 0.0
        %926 = vmatprep.subr.mxu0 0.0
        %927 = vmatpush2.msra.mxu0 0.0
        %928 = vmatprep.subr.mxu0 0.0
        %929 = vmatpush2.msra.mxu0 0.0
        %930 = vmatprep.subr.mxu0 0.0
        %931 = vmatpush2.msra.mxu0 0.0
        %932 = vmatprep.subr.mxu0 0.0
        %933 = vmatpush2.msra.mxu0 0.0
        %934 = vmatprep.subr.mxu0 0.0
        %935 = vmatpush2.msra.mxu0 0.0
        %936 = vmatprep.mubr.f32.mxu0 0.0
        %937 = vmatmul.mubr.f32.gmra.mxu0 %v721
        %v938 = vpop.f32.mrf.mxu0
        %v939 = vadd.f32 %v870, %v938
        %v940 = vpop.f32.mrf.mxu0
        %941 = vmatprep.mubr.f32.mxu0 0.0
        %942 = vmatmul.mubr.f32.gmra.mxu0 %v722
        %v943 = vpop.f32.mrf.mxu0
        %v944 = vadd.f32 %v870, %v943
        %v945 = vpop.f32.mrf.mxu0
        %946 = vmatprep.mubr.f32.mxu0 0.0
        %947 = vmatmul.mubr.f32.gmra.mxu0 %v723
        %v948 = vpop.f32.mrf.mxu0
        %v949 = vadd.f32 %v870, %v948
        %v950 = vpop.f32.mrf.mxu0
        %951 = vmatprep.mubr.f32.mxu0 0.0
        %952 = vmatmul.mubr.f32.gmra.mxu0 %v724
        %v953 = vpop.f32.mrf.mxu0
        %v954 = vadd.f32 %v870, %v953
        %v955 = vpop.f32.mrf.mxu0
        %956 = vmatprep.mubr.f32.mxu0 0.0
        %957 = vmatmul.mubr.f32.gmra.mxu0 %v725
        %v958 = vpop.f32.mrf.mxu0
        %v959 = vadd.f32 %v870, %v958
        %v960 = vpop.f32.mrf.mxu0
        %961 = vmatprep.mubr.f32.mxu0 0.0
        %962 = vmatmul.mubr.f32.gmra.mxu0 %v726
        %v963 = vpop.f32.mrf.mxu0
        %v964 = vadd.f32 %v870, %v963
        %v965 = vpop.f32.mrf.mxu0
        %966 = vmatprep.mubr.f32.mxu0 0.0
        %967 = vmatmul.mubr.f32.gmra.mxu0 %v727
        %v968 = vpop.f32.mrf.mxu0
        %v969 = vadd.f32 %v870, %v968
        %v970 = vpop.f32.mrf.mxu0
        %971 = vmatprep.mubr.f32.mxu0 0.0
        %972 = vmatmul.mubr.f32.gmra.mxu0 %v728
        %v973 = vpop.f32.mrf.mxu0
        %v974 = vadd.f32 %v870, %v973
        %v975 = vpop.f32.mrf.mxu0
        %976 = vmatprep.mubr.f32.mxu0 0.0
        %977 = vmatmul.mubr.f32.gmra.mxu0 %v729
        %v978 = vpop.f32.mrf.mxu0
        %v979 = vadd.f32 %v870, %v978
        %v980 = vpop.f32.mrf.mxu0
        %981 = vmatprep.mubr.f32.mxu0 0.0
        %982 = vmatmul.mubr.f32.gmra.mxu0 %v730
        %v983 = vpop.f32.mrf.mxu0
        %v984 = vadd.f32 %v870, %v983
        %v985 = vpop.f32.mrf.mxu0
        %986 = vmatprep.mubr.f32.mxu0 0.0
        %987 = vmatmul.mubr.f32.gmra.mxu0 %v731
        %v988 = vpop.f32.mrf.mxu0
        %v989 = vadd.f32 %v870, %v988
        %v990 = vpop.f32.mrf.mxu0
        %991 = vmatprep.mubr.f32.mxu0 0.0
        %992 = vmatmul.mubr.f32.gmra.mxu0 %v732
        %v993 = vpop.f32.mrf.mxu0
        %v994 = vadd.f32 %v870, %v993
        %v995 = vpop.f32.mrf.mxu0
        %996 = vmatprep.mubr.f32.mxu0 0.0
        %997 = vmatmul.mubr.f32.gmra.mxu0 %v733
        %v998 = vpop.f32.mrf.mxu0
        %v999 = vadd.f32 %v870, %v998
        %v1000 = vpop.f32.mrf.mxu0
        %1001 = vmatprep.mubr.f32.mxu0 0.0
        %1002 = vmatmul.mubr.f32.gmra.mxu0 %v734
        %v1003 = vpop.f32.mrf.mxu0
        %v1004 = vadd.f32 %v870, %v1003
        %v1005 = vpop.f32.mrf.mxu0
        %1006 = vmatprep.mubr.f32.mxu0 0.0
        %1007 = vmatmul.mubr.f32.gmra.mxu0 %v735
        %v1008 = vpop.f32.mrf.mxu0
        %v1009 = vadd.f32 %v870, %v1008
        %v1010 = vpop.f32.mrf.mxu0
        %1011 = vmatprep.mubr.f32.mxu0 0.0
        %1012 = vmatmul.mubr.f32.gmra.mxu0 %v736
        %v1013 = vpop.f32.mrf.mxu0
        %v1014 = vadd.f32 %v870, %v1013
        %v1015 = vpop.f32.mrf.mxu0
        %1016 = vmatprep.mubr.f32.mxu0 0.0
        %1017 = vmatmul.mubr.f32.gmra.mxu0 %v737
        %v1018 = vpop.f32.mrf.mxu0
        %v1019 = vadd.f32 %v870, %v1018
        %v1020 = vpop.f32.mrf.mxu0
        %1021 = vmatprep.mubr.f32.mxu0 0.0
        %1022 = vmatmul.mubr.f32.gmra.mxu0 %v738
        %v1023 = vpop.f32.mrf.mxu0
        %v1024 = vadd.f32 %v870, %v1023
        %v1025 = vpop.f32.mrf.mxu0
        %1026 = vmatprep.mubr.f32.mxu0 0.0
        %1027 = vmatmul.mubr.f32.gmra.mxu0 %v739
        %v1028 = vpop.f32.mrf.mxu0
        %v1029 = vadd.f32 %v870, %v1028
        %v1030 = vpop.f32.mrf.mxu0
        %1031 = vmatprep.mubr.f32.mxu0 0.0
        %1032 = vmatmul.mubr.f32.gmra.mxu0 %v740
        %v1033 = vpop.f32.mrf.mxu0
        %v1034 = vadd.f32 %v870, %v1033
        %v1035 = vpop.f32.mrf.mxu0
        %1036 = vmatprep.mubr.f32.mxu0 0.0
        %1037 = vmatmul.mubr.f32.gmra.mxu0 %v741
        %v1038 = vpop.f32.mrf.mxu0
        %v1039 = vadd.f32 %v870, %v1038
        %v1040 = vpop.f32.mrf.mxu0
        %1041 = vmatprep.mubr.f32.mxu0 0.0
        %1042 = vmatmul.mubr.f32.gmra.mxu0 %v742
        %v1043 = vpop.f32.mrf.mxu0
        %v1044 = vadd.f32 %v870, %v1043
        %v1045 = vpop.f32.mrf.mxu0
        %1046 = vmatprep.mubr.f32.mxu0 0.0
        %1047 = vmatmul.mubr.f32.gmra.mxu0 %v743
        %v1048 = vpop.f32.mrf.mxu0
        %v1049 = vadd.f32 %v870, %v1048
        %v1050 = vpop.f32.mrf.mxu0
        %1051 = vmatprep.mubr.f32.mxu0 0.0
        %1052 = vmatmul.mubr.f32.gmra.mxu0 %v744
        %v1053 = vpop.f32.mrf.mxu0
        %v1054 = vadd.f32 %v870, %v1053
        %v1055 = vpop.f32.mrf.mxu0
        %1056 = vmatprep.mubr.f32.mxu0 0.0
        %1057 = vmatmul.mubr.f32.gmra.mxu0 %v745
        %v1058 = vpop.f32.mrf.mxu0
        %v1059 = vadd.f32 %v870, %v1058
        %v1060 = vpop.f32.mrf.mxu0
        %1061 = vmatprep.mubr.f32.mxu0 0.0
        %1062 = vmatmul.mubr.f32.gmra.mxu0 %v746
        %v1063 = vpop.f32.mrf.mxu0
        %v1064 = vadd.f32 %v870, %v1063
        %v1065 = vpop.f32.mrf.mxu0
        %1066 = vmatprep.mubr.f32.mxu0 0.0
        %1067 = vmatmul.mubr.f32.gmra.mxu0 %v747
        %v1068 = vpop.f32.mrf.mxu0
        %v1069 = vadd.f32 %v870, %v1068
        %v1070 = vpop.f32.mrf.mxu0
        %1071 = vmatprep.mubr.f32.mxu0 0.0
        %1072 = vmatmul.mubr.f32.gmra.mxu0 %v748
        %v1073 = vpop.f32.mrf.mxu0
        %v1074 = vadd.f32 %v870, %v1073
        %v1075 = vpop.f32.mrf.mxu0
        %1076 = vmatprep.mubr.f32.mxu0 0.0
        %1077 = vmatmul.mubr.f32.gmra.mxu0 %v749
        %v1078 = vpop.f32.mrf.mxu0
        %v1079 = vadd.f32 %v870, %v1078
        %v1080 = vpop.f32.mrf.mxu0
        %1081 = vmatprep.mubr.f32.mxu0 0.0
        %1082 = vmatmul.mubr.f32.gmra.mxu0 %v750
        %v1083 = vpop.f32.mrf.mxu0
        %v1084 = vadd.f32 %v870, %v1083
        %v1085 = vpop.f32.mrf.mxu0
        %1086 = vmatprep.mubr.f32.mxu0 0.0
        %1087 = vmatmul.mubr.f32.gmra.mxu0 %v751
        %v1088 = vpop.f32.mrf.mxu0
        %v1089 = vadd.f32 %v870, %v1088
        %v1090 = vpop.f32.mrf.mxu0
        %1091 = vmatprep.mubr.f32.mxu0 0.0
        %1092 = vmatmul.mubr.f32.gmra.mxu0 %v752
        %v1093 = vpop.f32.mrf.mxu0
        %v1094 = vadd.f32 %v870, %v1093
        %v1095 = vpop.f32.mrf.mxu0
        %1096 = vmatprep.mubr.f32.mxu0 0.0
        %1097 = vmatmul.mubr.f32.gmra.mxu0 %v753
        %v1098 = vpop.f32.mrf.mxu0
        %v1099 = vadd.f32 %v870, %v1098
        %v1100 = vpop.f32.mrf.mxu0
        %1101 = vmatprep.mubr.f32.mxu0 0.0
        %1102 = vmatmul.mubr.f32.gmra.mxu0 %v754
        %v1103 = vpop.f32.mrf.mxu0
        %v1104 = vadd.f32 %v870, %v1103
        %v1105 = vpop.f32.mrf.mxu0
        %1106 = vmatprep.mubr.f32.mxu0 0.0
        %1107 = vmatmul.mubr.f32.gmra.mxu0 %v755
        %v1108 = vpop.f32.mrf.mxu0
        %v1109 = vadd.f32 %v870, %v1108
        %v1110 = vpop.f32.mrf.mxu0
        %1111 = vmatprep.mubr.f32.mxu0 0.0
        %1112 = vmatmul.mubr.f32.gmra.mxu0 %v756
        %v1113 = vpop.f32.mrf.mxu0
        %v1114 = vadd.f32 %v870, %v1113
        %v1115 = vpop.f32.mrf.mxu0
        %1116 = vmatprep.mubr.f32.mxu0 0.0
        %1117 = vmatmul.mubr.f32.gmra.mxu0 %v757
        %v1118 = vpop.f32.mrf.mxu0
        %v1119 = vadd.f32 %v870, %v1118
        %v1120 = vpop.f32.mrf.mxu0
        %1121 = vmatprep.mubr.f32.mxu0 0.0
        %1122 = vmatmul.mubr.f32.gmra.mxu0 %v758
        %v1123 = vpop.f32.mrf.mxu0
        %v1124 = vadd.f32 %v870, %v1123
        %v1125 = vpop.f32.mrf.mxu0
        %1126 = vmatprep.mubr.f32.mxu0 0.0
        %1127 = vmatmul.mubr.f32.gmra.mxu0 %v759
        %v1128 = vpop.f32.mrf.mxu0
        %v1129 = vadd.f32 %v870, %v1128
        %v1130 = vpop.f32.mrf.mxu0
        %1131 = vmatprep.mubr.f32.mxu0 0.0
        %1132 = vmatmul.mubr.f32.gmra.mxu0 %v760
        %v1133 = vpop.f32.mrf.mxu0
        %v1134 = vadd.f32 %v870, %v1133
        %v1135 = vpop.f32.mrf.mxu0
        %1136 = vmatprep.mubr.f32.mxu0 0.0
        %1137 = vmatmul.mubr.f32.gmra.mxu0 %v761
        %v1138 = vpop.f32.mrf.mxu0
        %v1139 = vadd.f32 %v870, %v1138
        %v1140 = vpop.f32.mrf.mxu0
        %1141 = vmatprep.mubr.f32.mxu0 0.0
        %1142 = vmatmul.mubr.f32.gmra.mxu0 %v762
        %v1143 = vpop.f32.mrf.mxu0
        %v1144 = vadd.f32 %v870, %v1143
        %v1145 = vpop.f32.mrf.mxu0
        %1146 = vmatprep.mubr.f32.mxu0 0.0
        %1147 = vmatmul.mubr.f32.gmra.mxu0 %v763
        %v1148 = vpop.f32.mrf.mxu0
        %v1149 = vadd.f32 %v870, %v1148
        %v1150 = vpop.f32.mrf.mxu0
        %1151 = vmatprep.mubr.f32.mxu0 0.0
        %1152 = vmatmul.mubr.f32.gmra.mxu0 %v764
        %v1153 = vpop.f32.mrf.mxu0
        %v1154 = vadd.f32 %v870, %v1153
        %v1155 = vpop.f32.mrf.mxu0
        %1156 = vmatprep.mubr.f32.mxu0 0.0
        %1157 = vmatmul.mubr.f32.gmra.mxu0 %v765
        %v1158 = vpop.f32.mrf.mxu0
        %v1159 = vadd.f32 %v870, %v1158
        %v1160 = vpop.f32.mrf.mxu0
        %1161 = vmatprep.mubr.f32.mxu0 0.0
        %1162 = vmatmul.mubr.f32.gmra.mxu0 %v766
        %v1163 = vpop.f32.mrf.mxu0
        %v1164 = vadd.f32 %v870, %v1163
        %v1165 = vpop.f32.mrf.mxu0
        %1166 = vmatprep.mubr.f32.mxu0 0.0
        %1167 = vmatmul.mubr.f32.gmra.mxu0 %v767
        %v1168 = vpop.f32.mrf.mxu0
        %v1169 = vadd.f32 %v870, %v1168
        %v1170 = vpop.f32.mrf.mxu0
        %1171 = vmatprep.mubr.f32.mxu0 0.0
        %1172 = vmatmul.mubr.f32.gmra.mxu0 %v768
        %v1173 = vpop.f32.mrf.mxu0
        %v1174 = vadd.f32 %v870, %v1173
        %v1175 = vpop.f32.mrf.mxu0
        %1176 = vmatprep.mubr.f32.mxu0 0.0
        %1177 = vmatmul.mubr.f32.gmra.mxu0 %v769
        %v1178 = vpop.f32.mrf.mxu0
        %v1179 = vadd.f32 %v870, %v1178
        %v1180 = vpop.f32.mrf.mxu0
        %1181 = vmatprep.mubr.f32.mxu0 0.0
        %1182 = vmatmul.mubr.f32.gmra.mxu0 %v770
        %v1183 = vpop.f32.mrf.mxu0
        %v1184 = vadd.f32 %v870, %v1183
        %v1185 = vpop.f32.mrf.mxu0
        %1186 = vmatprep.mubr.f32.mxu0 0.0
        %1187 = vmatmul.mubr.f32.gmra.mxu0 %v771
        %v1188 = vpop.f32.mrf.mxu0
        %v1189 = vadd.f32 %v870, %v1188
        %v1190 = vpop.f32.mrf.mxu0
        %1191 = vmatprep.mubr.f32.mxu0 0.0
        %1192 = vmatmul.mubr.f32.gmra.mxu0 %v772
        %v1193 = vpop.f32.mrf.mxu0
        %v1194 = vadd.f32 %v870, %v1193
        %v1195 = vpop.f32.mrf.mxu0
        %1196 = vmatprep.mubr.f32.mxu0 0.0
        %1197 = vmatmul.mubr.f32.gmra.mxu0 %v773
        %v1198 = vpop.f32.mrf.mxu0
        %v1199 = vadd.f32 %v870, %v1198
        %v1200 = vpop.f32.mrf.mxu0
        %1201 = vmatprep.mubr.f32.mxu0 0.0
        %1202 = vmatmul.mubr.f32.gmra.mxu0 %v774
        %v1203 = vpop.f32.mrf.mxu0
        %v1204 = vadd.f32 %v870, %v1203
        %v1205 = vpop.f32.mrf.mxu0
        %1206 = vmatprep.mubr.f32.mxu0 0.0
        %1207 = vmatmul.mubr.f32.gmra.mxu0 %v775
        %v1208 = vpop.f32.mrf.mxu0
        %v1209 = vadd.f32 %v870, %v1208
        %v1210 = vpop.f32.mrf.mxu0
        %1211 = vmatprep.mubr.f32.mxu0 0.0
        %1212 = vmatmul.mubr.f32.gmra.mxu0 %v776
        %v1213 = vpop.f32.mrf.mxu0
        %v1214 = vadd.f32 %v870, %v1213
        %v1215 = vpop.f32.mrf.mxu0
        %1216 = vmatprep.mubr.f32.mxu0 0.0
        %1217 = vmatmul.mubr.f32.gmra.mxu0 %v777
        %v1218 = vpop.f32.mrf.mxu0
        %v1219 = vadd.f32 %v870, %v1218
        %v1220 = vpop.f32.mrf.mxu0
        %1221 = vmatprep.mubr.f32.mxu0 0.0
        %1222 = vmatmul.mubr.f32.gmra.mxu0 %v778
        %v1223 = vpop.f32.mrf.mxu0
        %v1224 = vadd.f32 %v870, %v1223
        %v1225 = vpop.f32.mrf.mxu0
        %1226 = vmatprep.mubr.f32.mxu0 0.0
        %1227 = vmatmul.mubr.f32.gmra.mxu0 %v779
        %v1228 = vpop.f32.mrf.mxu0
        %v1229 = vadd.f32 %v870, %v1228
        %v1230 = vpop.f32.mrf.mxu0
        %1231 = vmatprep.mubr.f32.mxu0 0.0
        %1232 = vmatmul.mubr.f32.gmra.mxu0 %v780
        %v1233 = vpop.f32.mrf.mxu0
        %v1234 = vadd.f32 %v870, %v1233
        %v1235 = vpop.f32.mrf.mxu0
        %1236 = vmatprep.mubr.f32.mxu0 0.0
        %1237 = vmatmul.mubr.f32.gmra.mxu0 %v781
        %v1238 = vpop.f32.mrf.mxu0
        %v1239 = vadd.f32 %v870, %v1238
        %v1240 = vpop.f32.mrf.mxu0
        %1241 = vmatprep.mubr.f32.mxu0 0.0
        %1242 = vmatmul.mubr.f32.gmra.mxu0 %v782
        %v1243 = vpop.f32.mrf.mxu0
        %v1244 = vadd.f32 %v870, %v1243
        %v1245 = vpop.f32.mrf.mxu0
        %1246 = vmatprep.mubr.f32.mxu0 0.0
        %1247 = vmatmul.mubr.f32.gmra.mxu0 %v783
        %v1248 = vpop.f32.mrf.mxu0
        %v1249 = vadd.f32 %v870, %v1248
        %v1250 = vpop.f32.mrf.mxu0
        %1251 = vmatprep.mubr.f32.mxu0 0.0
        %1252 = vmatmul.mubr.f32.gmra.mxu0 %v784
        %v1253 = vpop.f32.mrf.mxu0
        %v1254 = vadd.f32 %v870, %v1253
        %v1255 = vpop.f32.mrf.mxu0
        %1256 = vmatprep.mubr.f32.mxu0 0.0
        %1257 = vmatmul.mubr.f32.gmra.mxu0 %v785
        %v1258 = vpop.f32.mrf.mxu0
        %v1259 = vadd.f32 %v870, %v1258
        %v1260 = vpop.f32.mrf.mxu0
        %1261 = vmatprep.mubr.f32.mxu0 0.0
        %1262 = vmatmul.mubr.f32.gmra.mxu0 %v786
        %v1263 = vpop.f32.mrf.mxu0
        %v1264 = vadd.f32 %v870, %v1263
        %v1265 = vpop.f32.mrf.mxu0
        %1266 = vmatprep.mubr.f32.mxu0 0.0
        %1267 = vmatmul.mubr.f32.gmra.mxu0 %v787
        %v1268 = vpop.f32.mrf.mxu0
        %v1269 = vadd.f32 %v870, %v1268
        %v1270 = vpop.f32.mrf.mxu0
        %1271 = vmatprep.mubr.f32.mxu0 0.0
        %1272 = vmatmul.mubr.f32.gmra.mxu0 %v788
        %v1273 = vpop.f32.mrf.mxu0
        %v1274 = vadd.f32 %v870, %v1273
        %v1275 = vpop.f32.mrf.mxu0
        %1276 = vmatprep.mubr.f32.mxu0 0.0
        %1277 = vmatmul.mubr.f32.gmra.mxu0 %v789
        %v1278 = vpop.f32.mrf.mxu0
        %v1279 = vadd.f32 %v870, %v1278
        %v1280 = vpop.f32.mrf.mxu0
        %1281 = vmatprep.mubr.f32.mxu0 0.0
        %1282 = vmatmul.mubr.f32.gmra.mxu0 %v790
        %v1283 = vpop.f32.mrf.mxu0
        %v1284 = vadd.f32 %v870, %v1283
        %v1285 = vpop.f32.mrf.mxu0
        %1286 = vmatprep.mubr.f32.mxu0 0.0
        %1287 = vmatmul.mubr.f32.gmra.mxu0 %v791
        %v1288 = vpop.f32.mrf.mxu0
        %v1289 = vadd.f32 %v870, %v1288
        %v1290 = vpop.f32.mrf.mxu0
        %1291 = vmatprep.mubr.f32.mxu0 0.0
        %1292 = vmatmul.mubr.f32.gmra.mxu0 %v792
        %v1293 = vpop.f32.mrf.mxu0
        %v1294 = vadd.f32 %v870, %v1293
        %v1295 = vpop.f32.mrf.mxu0
        %1296 = vmatprep.mubr.f32.mxu0 0.0
        %1297 = vmatmul.mubr.f32.gmra.mxu0 %v793
        %v1298 = vpop.f32.mrf.mxu0
        %v1299 = vadd.f32 %v870, %v1298
        %v1300 = vpop.f32.mrf.mxu0
        %1301 = vmatprep.mubr.f32.mxu0 0.0
        %1302 = vmatmul.mubr.f32.gmra.mxu0 %v794
        %v1303 = vpop.f32.mrf.mxu0
        %v1304 = vadd.f32 %v870, %v1303
        %v1305 = vpop.f32.mrf.mxu0
        %1306 = vmatprep.mubr.f32.mxu0 0.0
        %1307 = vmatmul.mubr.f32.gmra.mxu0 %v795
        %v1308 = vpop.f32.mrf.mxu0
        %v1309 = vadd.f32 %v870, %v1308
        %v1310 = vpop.f32.mrf.mxu0
        %1311 = vmatprep.mubr.f32.mxu0 0.0
        %1312 = vmatmul.mubr.f32.gmra.mxu0 %v796
        %v1313 = vpop.f32.mrf.mxu0
        %v1314 = vadd.f32 %v870, %v1313
        %v1315 = vpop.f32.mrf.mxu0
        %1316 = vmatprep.mubr.f32.mxu0 0.0
        %1317 = vmatmul.mubr.f32.gmra.mxu0 %v797
        %v1318 = vpop.f32.mrf.mxu0
        %v1319 = vadd.f32 %v870, %v1318
        %v1320 = vpop.f32.mrf.mxu0
        %1321 = vmatprep.mubr.f32.mxu0 0.0
        %1322 = vmatmul.mubr.f32.gmra.mxu0 %v798
        %v1323 = vpop.f32.mrf.mxu0
        %v1324 = vadd.f32 %v870, %v1323
        %v1325 = vpop.f32.mrf.mxu0
        %1326 = vmatprep.mubr.f32.mxu0 0.0
        %1327 = vmatmul.mubr.f32.gmra.mxu0 %v799
        %v1328 = vpop.f32.mrf.mxu0
        %v1329 = vadd.f32 %v870, %v1328
        %v1330 = vpop.f32.mrf.mxu0
        %1331 = vmatprep.mubr.f32.mxu0 0.0
        %1332 = vmatmul.mubr.f32.gmra.mxu0 %v800
        %v1333 = vpop.f32.mrf.mxu0
        %v1334 = vadd.f32 %v870, %v1333
        %v1335 = vpop.f32.mrf.mxu0
        %1336 = vmatprep.mubr.f32.mxu0 0.0
        %1337 = vmatmul.mubr.f32.gmra.mxu0 %v801
        %v1338 = vpop.f32.mrf.mxu0
        %v1339 = vadd.f32 %v870, %v1338
        %v1340 = vpop.f32.mrf.mxu0
        %1341 = vmatprep.mubr.f32.mxu0 0.0
        %1342 = vmatmul.mubr.f32.gmra.mxu0 %v802
        %v1343 = vpop.f32.mrf.mxu0
        %v1344 = vadd.f32 %v870, %v1343
        %v1345 = vpop.f32.mrf.mxu0
        %1346 = vmatprep.mubr.f32.mxu0 0.0
        %1347 = vmatmul.mubr.f32.gmra.mxu0 %v803
        %v1348 = vpop.f32.mrf.mxu0
        %v1349 = vadd.f32 %v870, %v1348
        %v1350 = vpop.f32.mrf.mxu0
        %1351 = vmatprep.mubr.f32.mxu0 0.0
        %1352 = vmatmul.mubr.f32.gmra.mxu0 %v804
        %v1353 = vpop.f32.mrf.mxu0
        %v1354 = vadd.f32 %v870, %v1353
        %v1355 = vpop.f32.mrf.mxu0
        %1356 = vmatprep.mubr.f32.mxu0 0.0
        %1357 = vmatmul.mubr.f32.gmra.mxu0 %v805
        %v1358 = vpop.f32.mrf.mxu0
        %v1359 = vadd.f32 %v870, %v1358
        %v1360 = vpop.f32.mrf.mxu0
        %1361 = vmatprep.mubr.f32.mxu0 0.0
        %1362 = vmatmul.mubr.f32.gmra.mxu0 %v806
        %v1363 = vpop.f32.mrf.mxu0
        %v1364 = vadd.f32 %v870, %v1363
        %v1365 = vpop.f32.mrf.mxu0
        %1366 = vmatprep.mubr.f32.mxu0 0.0
        %1367 = vmatmul.mubr.f32.gmra.mxu0 %v807
        %v1368 = vpop.f32.mrf.mxu0
        %v1369 = vadd.f32 %v870, %v1368
        %v1370 = vpop.f32.mrf.mxu0
        %1371 = vmatprep.mubr.f32.mxu0 0.0
        %1372 = vmatmul.mubr.f32.gmra.mxu0 %v808
        %v1373 = vpop.f32.mrf.mxu0
        %v1374 = vadd.f32 %v870, %v1373
        %v1375 = vpop.f32.mrf.mxu0
        %1376 = vmatprep.mubr.f32.mxu0 0.0
        %1377 = vmatmul.mubr.f32.gmra.mxu0 %v809
        %v1378 = vpop.f32.mrf.mxu0
        %v1379 = vadd.f32 %v870, %v1378
        %v1380 = vpop.f32.mrf.mxu0
        %1381 = vmatprep.mubr.f32.mxu0 0.0
        %1382 = vmatmul.mubr.f32.gmra.mxu0 %v810
        %v1383 = vpop.f32.mrf.mxu0
        %v1384 = vadd.f32 %v870, %v1383
        %v1385 = vpop.f32.mrf.mxu0
        %1386 = vmatprep.mubr.f32.mxu0 0.0
        %1387 = vmatmul.mubr.f32.gmra.mxu0 %v811
        %v1388 = vpop.f32.mrf.mxu0
        %v1389 = vadd.f32 %v870, %v1388
        %v1390 = vpop.f32.mrf.mxu0
        %1391 = vmatprep.mubr.f32.mxu0 0.0
        %1392 = vmatmul.mubr.f32.gmra.mxu0 %v812
        %v1393 = vpop.f32.mrf.mxu0
        %v1394 = vadd.f32 %v870, %v1393
        %v1395 = vpop.f32.mrf.mxu0
        %1396 = vmatprep.mubr.f32.mxu0 0.0
        %1397 = vmatmul.mubr.f32.gmra.mxu0 %v813
        %v1398 = vpop.f32.mrf.mxu0
        %v1399 = vadd.f32 %v870, %v1398
        %v1400 = vpop.f32.mrf.mxu0
        %1401 = vmatprep.mubr.f32.mxu0 0.0
        %1402 = vmatmul.mubr.f32.gmra.mxu0 %v814
        %v1403 = vpop.f32.mrf.mxu0
        %v1404 = vadd.f32 %v870, %v1403
        %v1405 = vpop.f32.mrf.mxu0
        %1406 = vmatprep.mubr.f32.mxu0 0.0
        %1407 = vmatmul.mubr.f32.gmra.mxu0 %v815
        %v1408 = vpop.f32.mrf.mxu0
        %v1409 = vadd.f32 %v870, %v1408
        %v1410 = vpop.f32.mrf.mxu0
        %1411 = vmatprep.mubr.f32.mxu0 0.0
        %1412 = vmatmul.mubr.f32.gmra.mxu0 %v816
        %v1413 = vpop.f32.mrf.mxu0
        %v1414 = vadd.f32 %v870, %v1413
        %v1415 = vpop.f32.mrf.mxu0
        %1416 = vmatprep.mubr.f32.mxu0 0.0
        %1417 = vmatmul.mubr.f32.gmra.mxu0 %v817
        %v1418 = vpop.f32.mrf.mxu0
        %v1419 = vadd.f32 %v870, %v1418
        %v1420 = vpop.f32.mrf.mxu0
        %1421 = vmatprep.mubr.f32.mxu0 0.0
        %1422 = vmatmul.mubr.f32.gmra.mxu0 %v818
        %v1423 = vpop.f32.mrf.mxu0
        %v1424 = vadd.f32 %v870, %v1423
        %v1425 = vpop.f32.mrf.mxu0
        %1426 = vmatprep.mubr.f32.mxu0 0.0
        %1427 = vmatmul.mubr.f32.gmra.mxu0 %v819
        %v1428 = vpop.f32.mrf.mxu0
        %v1429 = vadd.f32 %v870, %v1428
        %v1430 = vpop.f32.mrf.mxu0
        %1431 = vmatprep.mubr.f32.mxu0 0.0
        %1432 = vmatmul.mubr.f32.gmra.mxu0 %v820
        %v1433 = vpop.f32.mrf.mxu0
        %v1434 = vadd.f32 %v870, %v1433
        %v1435 = vpop.f32.mrf.mxu0
        %1436 = vmatprep.mubr.f32.mxu0 0.0
        %1437 = vmatmul.mubr.f32.gmra.mxu0 %v821
        %v1438 = vpop.f32.mrf.mxu0
        %v1439 = vadd.f32 %v870, %v1438
        %v1440 = vpop.f32.mrf.mxu0
        %1441 = vmatprep.mubr.f32.mxu0 0.0
        %1442 = vmatmul.mubr.f32.gmra.mxu0 %v822
        %v1443 = vpop.f32.mrf.mxu0
        %v1444 = vadd.f32 %v870, %v1443
        %v1445 = vpop.f32.mrf.mxu0
        %1446 = vmatprep.mubr.f32.mxu0 0.0
        %1447 = vmatmul.mubr.f32.gmra.mxu0 %v823
        %v1448 = vpop.f32.mrf.mxu0
        %v1449 = vadd.f32 %v870, %v1448
        %v1450 = vpop.f32.mrf.mxu0
        %1451 = vmatprep.mubr.f32.mxu0 0.0
        %1452 = vmatmul.mubr.f32.gmra.mxu0 %v824
        %v1453 = vpop.f32.mrf.mxu0
        %v1454 = vadd.f32 %v870, %v1453
        %v1455 = vpop.f32.mrf.mxu0
        %1456 = vmatprep.mubr.f32.mxu0 0.0
        %1457 = vmatmul.mubr.f32.gmra.mxu0 %v825
        %v1458 = vpop.f32.mrf.mxu0
        %v1459 = vadd.f32 %v870, %v1458
        %v1460 = vpop.f32.mrf.mxu0
        %1461 = vmatprep.mubr.f32.mxu0 0.0
        %1462 = vmatmul.mubr.f32.gmra.mxu0 %v826
        %v1463 = vpop.f32.mrf.mxu0
        %v1464 = vadd.f32 %v870, %v1463
        %v1465 = vpop.f32.mrf.mxu0
        %1466 = vmatprep.mubr.f32.mxu0 0.0
        %1467 = vmatmul.mubr.f32.gmra.mxu0 %v827
        %v1468 = vpop.f32.mrf.mxu0
        %v1469 = vadd.f32 %v870, %v1468
        %v1470 = vpop.f32.mrf.mxu0
        %1471 = vmatprep.mubr.f32.mxu0 0.0
        %1472 = vmatmul.mubr.f32.gmra.mxu0 %v828
        %v1473 = vpop.f32.mrf.mxu0
        %v1474 = vadd.f32 %v870, %v1473
        %v1475 = vpop.f32.mrf.mxu0
        %1476 = vmatprep.mubr.f32.mxu0 0.0
        %1477 = vmatmul.mubr.f32.gmra.mxu0 %v829
        %v1478 = vpop.f32.mrf.mxu0
        %v1479 = vadd.f32 %v870, %v1478
        %v1480 = vpop.f32.mrf.mxu0
        %1481 = vmatprep.mubr.f32.mxu0 0.0
        %1482 = vmatmul.mubr.f32.gmra.mxu0 %v830
        %v1483 = vpop.f32.mrf.mxu0
        %v1484 = vadd.f32 %v870, %v1483
        %v1485 = vpop.f32.mrf.mxu0
        %1486 = vmatprep.mubr.f32.mxu0 0.0
        %1487 = vmatmul.mubr.f32.gmra.mxu0 %v831
        %v1488 = vpop.f32.mrf.mxu0
        %v1489 = vadd.f32 %v870, %v1488
        %v1490 = vpop.f32.mrf.mxu0
        %1491 = vmatprep.mubr.f32.mxu0 0.0
        %1492 = vmatmul.mubr.f32.gmra.mxu0 %v832
        %v1493 = vpop.f32.mrf.mxu0
        %v1494 = vadd.f32 %v870, %v1493
        %v1495 = vpop.f32.mrf.mxu0
        %1496 = vmatprep.mubr.f32.mxu0 0.0
        %1497 = vmatmul.mubr.f32.gmra.mxu0 %v833
        %v1498 = vpop.f32.mrf.mxu0
        %v1499 = vadd.f32 %v870, %v1498
        %v1500 = vpop.f32.mrf.mxu0
        %1501 = vmatprep.mubr.f32.mxu0 0.0
        %1502 = vmatmul.mubr.f32.gmra.mxu0 %v834
        %v1503 = vpop.f32.mrf.mxu0
        %v1504 = vadd.f32 %v870, %v1503
        %v1505 = vpop.f32.mrf.mxu0
        %1506 = vmatprep.mubr.f32.mxu0 0.0
        %1507 = vmatmul.mubr.f32.gmra.mxu0 %v835
        %v1508 = vpop.f32.mrf.mxu0
        %v1509 = vadd.f32 %v870, %v1508
        %v1510 = vpop.f32.mrf.mxu0
        %1511 = vmatprep.mubr.f32.mxu0 0.0
        %1512 = vmatmul.mubr.f32.gmra.mxu0 %v836
        %v1513 = vpop.f32.mrf.mxu0
        %v1514 = vadd.f32 %v870, %v1513
        %v1515 = vpop.f32.mrf.mxu0
        %1516 = vmatprep.mubr.f32.mxu0 0.0
        %1517 = vmatmul.mubr.f32.gmra.mxu0 %v837
        %v1518 = vpop.f32.mrf.mxu0
        %v1519 = vadd.f32 %v870, %v1518
        %v1520 = vpop.f32.mrf.mxu0
        %1521 = vmatprep.mubr.f32.mxu0 0.0
        %1522 = vmatmul.mubr.f32.gmra.mxu0 %v838
        %v1523 = vpop.f32.mrf.mxu0
        %v1524 = vadd.f32 %v870, %v1523
        %v1525 = vpop.f32.mrf.mxu0
        %1526 = vmatprep.mubr.f32.mxu0 0.0
        %1527 = vmatmul.mubr.f32.gmra.mxu0 %v839
        %v1528 = vpop.f32.mrf.mxu0
        %v1529 = vadd.f32 %v870, %v1528
        %v1530 = vpop.f32.mrf.mxu0
        %1531 = vmatprep.mubr.f32.mxu0 0.0
        %1532 = vmatmul.mubr.f32.gmra.mxu0 %v840
        %v1533 = vpop.f32.mrf.mxu0
        %v1534 = vadd.f32 %v870, %v1533
        %v1535 = vpop.f32.mrf.mxu0
        %1536 = vmatprep.mubr.f32.mxu0 0.0
        %1537 = vmatmul.mubr.f32.gmra.mxu0 %v841
        %v1538 = vpop.f32.mrf.mxu0
        %v1539 = vadd.f32 %v870, %v1538
        %v1540 = vpop.f32.mrf.mxu0
        %1541 = vmatprep.mubr.f32.mxu0 0.0
        %1542 = vmatmul.mubr.f32.gmra.mxu0 %v842
        %v1543 = vpop.f32.mrf.mxu0
        %v1544 = vadd.f32 %v870, %v1543
        %v1545 = vpop.f32.mrf.mxu0
        %1546 = vmatprep.mubr.f32.mxu0 0.0
        %1547 = vmatmul.mubr.f32.gmra.mxu0 %v843
        %v1548 = vpop.f32.mrf.mxu0
        %v1549 = vadd.f32 %v870, %v1548
        %v1550 = vpop.f32.mrf.mxu0
        %1551 = vmatprep.mubr.f32.mxu0 0.0
        %1552 = vmatmul.mubr.f32.gmra.mxu0 %v844
        %v1553 = vpop.f32.mrf.mxu0
        %v1554 = vadd.f32 %v870, %v1553
        %v1555 = vpop.f32.mrf.mxu0
        %1556 = vmatprep.mubr.f32.mxu0 0.0
        %1557 = vmatmul.mubr.f32.gmra.mxu0 %v845
        %v1558 = vpop.f32.mrf.mxu0
        %v1559 = vadd.f32 %v870, %v1558
        %v1560 = vpop.f32.mrf.mxu0
        %1561 = vmatprep.mubr.f32.mxu0 0.0
        %1562 = vmatmul.mubr.f32.gmra.mxu0 %v846
        %v1563 = vpop.f32.mrf.mxu0
        %v1564 = vadd.f32 %v870, %v1563
        %v1565 = vpop.f32.mrf.mxu0
        %1566 = vmatprep.mubr.f32.mxu0 0.0
        %1567 = vmatmul.mubr.f32.gmra.mxu0 %v847
        %v1568 = vpop.f32.mrf.mxu0
        %v1569 = vadd.f32 %v870, %v1568
        %v1570 = vpop.f32.mrf.mxu0
        %1571 = vmatprep.mubr.f32.mxu0 0.0
        %1572 = vmatmul.mubr.f32.gmra.mxu0 %v848
        %v1573 = vpop.f32.mrf.mxu0
        %v1574 = vadd.f32 %v870, %v1573
        %v1575 = vpop.f32.mrf.mxu0
        %1576 = vdwg.mxu0
        %v1577 = vld [vmem:[%s601] sm:$0xff]
        %v1579 = vcombine.high %v1577, %v1577
        %v1581 = vunpack.c.l.s4 1966171168
        %v1582 = vunpack.c.0.s8 %v1581
        %v1583 = vlaneseq
        %v1584 = vshrl.u32 %v1583, 7
        %v1585 = vsub.s32 %v1582, %v1584
        %v1586 = vrot.slane %v1577, %v1585
        %v1588 = vunpack.c.l.s4 1966171168
        %v1589 = vunpack.c.0.s8 %v1588
        %v1590 = vlaneseq
        %v1591 = vshrl.u32 %v1590, 7
        %v1592 = vsub.s32 %v1589, %v1591
        %v1593 = vrot.slane %v1579, %v1592
        %v1594 = vcombine.high %v1586, %v1586
        %v1595 = vcombine.high %v1593, %v1593
        %v1597 = vunpack.c.l.s4 1966171168
        %v1598 = vunpack.c.0.s8 %v1597
        %v1599 = vlaneseq
        %v1600 = vshrl.u32 %v1599, 7
        %v1601 = vsub.s32 %v1598, %v1600
        %v1602 = vrot.slane %v1586, %v1601
        %v1604 = vunpack.c.l.s4 1966171168
        %v1605 = vunpack.c.0.s8 %v1604
        %v1606 = vlaneseq
        %v1607 = vshrl.u32 %v1606, 7
        %v1608 = vsub.s32 %v1605, %v1607
        %v1609 = vrot.slane %v1593, %v1608
        %v1611 = vunpack.c.l.s4 1966171168
        %v1612 = vunpack.c.0.s8 %v1611
        %v1613 = vlaneseq
        %v1614 = vshrl.u32 %v1613, 7
        %v1615 = vsub.s32 %v1612, %v1614
        %v1616 = vrot.slane %v1594, %v1615
        %v1618 = vunpack.c.l.s4 1966171168
        %v1619 = vunpack.c.0.s8 %v1618
        %v1620 = vlaneseq
        %v1621 = vshrl.u32 %v1620, 7
        %v1622 = vsub.s32 %v1619, %v1621
        %v1623 = vrot.slane %v1595, %v1622
        %v1624 = vcombine.high %v1602, %v1602
        %v1625 = vcombine.high %v1609, %v1609
        %v1626 = vcombine.high %v1616, %v1616
        %v1627 = vcombine.high %v1623, %v1623
        %v1628 = vlaneseq
        %v1629 = vshrl.u32 %v1628, 7
        %v1630 = vsub.s32 0, %v1629
        %v1631 = vrot.slane %v1602, %v1630
        %v1632 = vlaneseq
        %v1633 = vshrl.u32 %v1632, 7
        %v1634 = vsub.s32 0, %v1633
        %v1635 = vrot.slane %v1616, %v1634
        %v1636 = vlaneseq
        %v1637 = vshrl.u32 %v1636, 7
        %v1638 = vsub.s32 0, %v1637
        %v1639 = vrot.slane %v1624, %v1638
        %v1640 = vlaneseq
        %v1641 = vshrl.u32 %v1640, 7
        %v1642 = vsub.s32 0, %v1641
        %v1643 = vrot.slane %v1626, %v1642
        %v1644 = vlaneseq
        %v1645 = vshrl.u32 %v1644, 7
        %v1646 = vsub.s32 0, %v1645
        %v1647 = vrot.slane %v1609, %v1646
        %v1648 = vlaneseq
        %v1649 = vshrl.u32 %v1648, 7
        %v1650 = vsub.s32 0, %v1649
        %v1651 = vrot.slane %v1623, %v1650
        %v1652 = vlaneseq
        %v1653 = vshrl.u32 %v1652, 7
        %v1654 = vsub.s32 0, %v1653
        %v1655 = vrot.slane %v1625, %v1654
        %v1656 = vlaneseq
        %v1657 = vshrl.u32 %v1656, 7
        %v1658 = vsub.s32 0, %v1657
        %v1659 = vrot.slane %v1627, %v1658
        %v1668 = vadd.f32 %v939, %v1631
        %v1669 = vadd.f32 %v944, %v1631
        %v1670 = vadd.f32 %v949, %v1631
        %v1671 = vadd.f32 %v954, %v1631
        %v1672 = vadd.f32 %v959, %v1631
        %v1673 = vadd.f32 %v964, %v1631
        %v1674 = vadd.f32 %v969, %v1631
        %v1675 = vadd.f32 %v974, %v1631
        %v1676 = vadd.f32 %v979, %v1631
        %v1677 = vadd.f32 %v984, %v1631
        %v1678 = vadd.f32 %v989, %v1631
        %v1679 = vadd.f32 %v994, %v1631
        %v1680 = vadd.f32 %v999, %v1631
        %v1681 = vadd.f32 %v1004, %v1631
        %v1682 = vadd.f32 %v1009, %v1631
        %v1683 = vadd.f32 %v1014, %v1631
        %v1684 = vadd.f32 %v1019, %v1635
        %v1685 = vadd.f32 %v1024, %v1635
        %v1686 = vadd.f32 %v1029, %v1635
        %v1687 = vadd.f32 %v1034, %v1635
        %v1688 = vadd.f32 %v1039, %v1635
        %v1689 = vadd.f32 %v1044, %v1635
        %v1690 = vadd.f32 %v1049, %v1635
        %v1691 = vadd.f32 %v1054, %v1635
        %v1692 = vadd.f32 %v1059, %v1635
        %v1693 = vadd.f32 %v1064, %v1635
        %v1694 = vadd.f32 %v1069, %v1635
        %v1695 = vadd.f32 %v1074, %v1635
        %v1696 = vadd.f32 %v1079, %v1635
        %v1697 = vadd.f32 %v1084, %v1635
        %v1698 = vadd.f32 %v1089, %v1635
        %v1699 = vadd.f32 %v1094, %v1635
        %v1700 = vadd.f32 %v1099, %v1639
        %v1701 = vadd.f32 %v1104, %v1639
        %v1702 = vadd.f32 %v1109, %v1639
        %v1703 = vadd.f32 %v1114, %v1639
        %v1704 = vadd.f32 %v1119, %v1639
        %v1705 = vadd.f32 %v1124, %v1639
        %v1706 = vadd.f32 %v1129, %v1639
        %v1707 = vadd.f32 %v1134, %v1639
        %v1708 = vadd.f32 %v1139, %v1639
        %v1709 = vadd.f32 %v1144, %v1639
        %v1710 = vadd.f32 %v1149, %v1639
        %v1711 = vadd.f32 %v1154, %v1639
        %v1712 = vadd.f32 %v1159, %v1639
        %v1713 = vadd.f32 %v1164, %v1639
        %v1714 = vadd.f32 %v1169, %v1639
        %v1715 = vadd.f32 %v1174, %v1639
        %v1716 = vadd.f32 %v1179, %v1643
        %v1717 = vadd.f32 %v1184, %v1643
        %v1718 = vadd.f32 %v1189, %v1643
        %v1719 = vadd.f32 %v1194, %v1643
        %v1720 = vadd.f32 %v1199, %v1643
        %v1721 = vadd.f32 %v1204, %v1643
        %v1722 = vadd.f32 %v1209, %v1643
        %v1723 = vadd.f32 %v1214, %v1643
        %v1724 = vadd.f32 %v1219, %v1643
        %v1725 = vadd.f32 %v1224, %v1643
        %v1726 = vadd.f32 %v1229, %v1643
        %v1727 = vadd.f32 %v1234, %v1643
        %v1728 = vadd.f32 %v1239, %v1643
        %v1729 = vadd.f32 %v1244, %v1643
        %v1730 = vadd.f32 %v1249, %v1643
        %v1731 = vadd.f32 %v1254, %v1643
        %v1732 = vadd.f32 %v1259, %v1647
        %v1733 = vadd.f32 %v1264, %v1647
        %v1734 = vadd.f32 %v1269, %v1647
        %v1735 = vadd.f32 %v1274, %v1647
        %v1736 = vadd.f32 %v1279, %v1647
        %v1737 = vadd.f32 %v1284, %v1647
        %v1738 = vadd.f32 %v1289, %v1647
        %v1739 = vadd.f32 %v1294, %v1647
        %v1740 = vadd.f32 %v1299, %v1647
        %v1741 = vadd.f32 %v1304, %v1647
        %v1742 = vadd.f32 %v1309, %v1647
        %v1743 = vadd.f32 %v1314, %v1647
        %v1744 = vadd.f32 %v1319, %v1647
        %v1745 = vadd.f32 %v1324, %v1647
        %v1746 = vadd.f32 %v1329, %v1647
        %v1747 = vadd.f32 %v1334, %v1647
        %v1748 = vadd.f32 %v1339, %v1651
        %v1749 = vadd.f32 %v1344, %v1651
        %v1750 = vadd.f32 %v1349, %v1651
        %v1751 = vadd.f32 %v1354, %v1651
        %v1752 = vadd.f32 %v1359, %v1651
        %v1753 = vadd.f32 %v1364, %v1651
        %v1754 = vadd.f32 %v1369, %v1651
        %v1755 = vadd.f32 %v1374, %v1651
        %v1756 = vadd.f32 %v1379, %v1651
        %v1757 = vadd.f32 %v1384, %v1651
        %v1758 = vadd.f32 %v1389, %v1651
        %v1759 = vadd.f32 %v1394, %v1651
        %v1760 = vadd.f32 %v1399, %v1651
        %v1761 = vadd.f32 %v1404, %v1651
        %v1762 = vadd.f32 %v1409, %v1651
        %v1763 = vadd.f32 %v1414, %v1651
        %v1764 = vadd.f32 %v1419, %v1655
        %v1765 = vadd.f32 %v1424, %v1655
        %v1766 = vadd.f32 %v1429, %v1655
        %v1767 = vadd.f32 %v1434, %v1655
        %v1768 = vadd.f32 %v1439, %v1655
        %v1769 = vadd.f32 %v1444, %v1655
        %v1770 = vadd.f32 %v1449, %v1655
        %v1771 = vadd.f32 %v1454, %v1655
        %v1772 = vadd.f32 %v1459, %v1655
        %v1773 = vadd.f32 %v1464, %v1655
        %v1774 = vadd.f32 %v1469, %v1655
        %v1775 = vadd.f32 %v1474, %v1655
        %v1776 = vadd.f32 %v1479, %v1655
        %v1777 = vadd.f32 %v1484, %v1655
        %v1778 = vadd.f32 %v1489, %v1655
        %v1779 = vadd.f32 %v1494, %v1655
        %v1780 = vadd.f32 %v1499, %v1659
        %v1781 = vadd.f32 %v1504, %v1659
        %v1782 = vadd.f32 %v1509, %v1659
        %v1783 = vadd.f32 %v1514, %v1659
        %v1784 = vadd.f32 %v1519, %v1659
        %v1785 = vadd.f32 %v1524, %v1659
        %v1786 = vadd.f32 %v1529, %v1659
        %v1787 = vadd.f32 %v1534, %v1659
        %v1788 = vadd.f32 %v1539, %v1659
        %v1789 = vadd.f32 %v1544, %v1659
        %v1790 = vadd.f32 %v1549, %v1659
        %v1791 = vadd.f32 %v1554, %v1659
        %v1792 = vadd.f32 %v1559, %v1659
        %v1793 = vadd.f32 %v1564, %v1659
        %v1794 = vadd.f32 %v1569, %v1659
        %v1795 = vadd.f32 %v1574, %v1659
        %v1796 = vtanh.pop %v1668
        %v1797 = vtanh.pop %v1669
        %v1798 = vtanh.pop %v1670
        %v1799 = vtanh.pop %v1671
        %v1800 = vtanh.pop %v1672
        %v1801 = vtanh.pop %v1673
        %v1802 = vtanh.pop %v1674
        %v1803 = vtanh.pop %v1675
        %v1804 = vtanh.pop %v1676
        %v1805 = vtanh.pop %v1677
        %v1806 = vtanh.pop %v1678
        %v1807 = vtanh.pop %v1679
        %v1808 = vtanh.pop %v1680
        %v1809 = vtanh.pop %v1681
        %v1810 = vtanh.pop %v1682
        %v1811 = vtanh.pop %v1683
        %v1812 = vtanh.pop %v1684
        %v1813 = vtanh.pop %v1685
        %v1814 = vtanh.pop %v1686
        %v1815 = vtanh.pop %v1687
        %v1816 = vtanh.pop %v1688
        %v1817 = vtanh.pop %v1689
        %v1818 = vtanh.pop %v1690
        %v1819 = vtanh.pop %v1691
        %v1820 = vtanh.pop %v1692
        %v1821 = vtanh.pop %v1693
        %v1822 = vtanh.pop %v1694
        %v1823 = vtanh.pop %v1695
        %v1824 = vtanh.pop %v1696
        %v1825 = vtanh.pop %v1697
        %v1826 = vtanh.pop %v1698
        %v1827 = vtanh.pop %v1699
        %v1828 = vtanh.pop %v1700
        %v1829 = vtanh.pop %v1701
        %v1830 = vtanh.pop %v1702
        %v1831 = vtanh.pop %v1703
        %v1832 = vtanh.pop %v1704
        %v1833 = vtanh.pop %v1705
        %v1834 = vtanh.pop %v1706
        %v1835 = vtanh.pop %v1707
        %v1836 = vtanh.pop %v1708
        %v1837 = vtanh.pop %v1709
        %v1838 = vtanh.pop %v1710
        %v1839 = vtanh.pop %v1711
        %v1840 = vtanh.pop %v1712
        %v1841 = vtanh.pop %v1713
        %v1842 = vtanh.pop %v1714
        %v1843 = vtanh.pop %v1715
        %v1844 = vtanh.pop %v1716
        %v1845 = vtanh.pop %v1717
        %v1846 = vtanh.pop %v1718
        %v1847 = vtanh.pop %v1719
        %v1848 = vtanh.pop %v1720
        %v1849 = vtanh.pop %v1721
        %v1850 = vtanh.pop %v1722
        %v1851 = vtanh.pop %v1723
        %v1852 = vtanh.pop %v1724
        %v1853 = vtanh.pop %v1725
        %v1854 = vtanh.pop %v1726
        %v1855 = vtanh.pop %v1727
        %v1856 = vtanh.pop %v1728
        %v1857 = vtanh.pop %v1729
        %v1858 = vtanh.pop %v1730
        %v1859 = vtanh.pop %v1731
        %v1860 = vtanh.pop %v1732
        %v1861 = vtanh.pop %v1733
        %v1862 = vtanh.pop %v1734
        %v1863 = vtanh.pop %v1735
        %v1864 = vtanh.pop %v1736
        %v1865 = vtanh.pop %v1737
        %v1866 = vtanh.pop %v1738
        %v1867 = vtanh.pop %v1739
        %v1868 = vtanh.pop %v1740
        %v1869 = vtanh.pop %v1741
        %v1870 = vtanh.pop %v1742
        %v1871 = vtanh.pop %v1743
        %v1872 = vtanh.pop %v1744
        %v1873 = vtanh.pop %v1745
        %v1874 = vtanh.pop %v1746
        %v1875 = vtanh.pop %v1747
        %v1876 = vtanh.pop %v1748
        %v1877 = vtanh.pop %v1749
        %v1878 = vtanh.pop %v1750
        %v1879 = vtanh.pop %v1751
        %v1880 = vtanh.pop %v1752
        %v1881 = vtanh.pop %v1753
        %v1882 = vtanh.pop %v1754
        %v1883 = vtanh.pop %v1755
        %v1884 = vtanh.pop %v1756
        %v1885 = vtanh.pop %v1757
        %v1886 = vtanh.pop %v1758
        %v1887 = vtanh.pop %v1759
        %v1888 = vtanh.pop %v1760
        %v1889 = vtanh.pop %v1761
        %v1890 = vtanh.pop %v1762
        %v1891 = vtanh.pop %v1763
        %v1892 = vtanh.pop %v1764
        %v1893 = vtanh.pop %v1765
        %v1894 = vtanh.pop %v1766
        %v1895 = vtanh.pop %v1767
        %v1896 = vtanh.pop %v1768
        %v1897 = vtanh.pop %v1769
        %v1898 = vtanh.pop %v1770
        %v1899 = vtanh.pop %v1771
        %v1900 = vtanh.pop %v1772
        %v1901 = vtanh.pop %v1773
        %v1902 = vtanh.pop %v1774
        %v1903 = vtanh.pop %v1775
        %v1904 = vtanh.pop %v1776
        %v1905 = vtanh.pop %v1777
        %v1906 = vtanh.pop %v1778
        %v1907 = vtanh.pop %v1779
        %v1908 = vtanh.pop %v1780
        %v1909 = vtanh.pop %v1781
        %v1910 = vtanh.pop %v1782
        %v1911 = vtanh.pop %v1783
        %v1912 = vtanh.pop %v1784
        %v1913 = vtanh.pop %v1785
        %v1914 = vtanh.pop %v1786
        %v1915 = vtanh.pop %v1787
        %v1916 = vtanh.pop %v1788
        %v1917 = vtanh.pop %v1789
        %v1918 = vtanh.pop %v1790
        %v1919 = vtanh.pop %v1791
        %v1920 = vtanh.pop %v1792
        %v1921 = vtanh.pop %v1793
        %v1922 = vtanh.pop %v1794
        %v1923 = vtanh.pop %v1795
        %v1924 = vld [vmem:[#allocation17] sm:$0x1]
        %v1926 = vlaneseq
        %v1927 = vshrl.u32 %v1926, 7
        %v1928 = vsub.s32 0, %v1927
        %v1929 = vrot.slane %v1924, %v1928
        %v1931 = vmul.f32 %v1796, %v1929
        %v1932 = vmul.f32 %v1797, %v1929
        %v1933 = vmul.f32 %v1798, %v1929
        %v1934 = vmul.f32 %v1799, %v1929
        %v1935 = vmul.f32 %v1800, %v1929
        %v1936 = vmul.f32 %v1801, %v1929
        %v1937 = vmul.f32 %v1802, %v1929
        %v1938 = vmul.f32 %v1803, %v1929
        %v1939 = vmul.f32 %v1804, %v1929
        %v1940 = vmul.f32 %v1805, %v1929
        %v1941 = vmul.f32 %v1806, %v1929
        %v1942 = vmul.f32 %v1807, %v1929
        %v1943 = vmul.f32 %v1808, %v1929
        %v1944 = vmul.f32 %v1809, %v1929
        %v1945 = vmul.f32 %v1810, %v1929
        %v1946 = vmul.f32 %v1811, %v1929
        %v1947 = vmul.f32 %v1812, %v1929
        %v1948 = vmul.f32 %v1813, %v1929
        %v1949 = vmul.f32 %v1814, %v1929
        %v1950 = vmul.f32 %v1815, %v1929
        %v1951 = vmul.f32 %v1816, %v1929
        %v1952 = vmul.f32 %v1817, %v1929
        %v1953 = vmul.f32 %v1818, %v1929
        %v1954 = vmul.f32 %v1819, %v1929
        %v1955 = vmul.f32 %v1820, %v1929
        %v1956 = vmul.f32 %v1821, %v1929
        %v1957 = vmul.f32 %v1822, %v1929
        %v1958 = vmul.f32 %v1823, %v1929
        %v1959 = vmul.f32 %v1824, %v1929
        %v1960 = vmul.f32 %v1825, %v1929
        %v1961 = vmul.f32 %v1826, %v1929
        %v1962 = vmul.f32 %v1827, %v1929
        %v1963 = vmul.f32 %v1828, %v1929
        %v1964 = vmul.f32 %v1829, %v1929
        %v1965 = vmul.f32 %v1830, %v1929
        %v1966 = vmul.f32 %v1831, %v1929
        %v1967 = vmul.f32 %v1832, %v1929
        %v1968 = vmul.f32 %v1833, %v1929
        %v1969 = vmul.f32 %v1834, %v1929
        %v1970 = vmul.f32 %v1835, %v1929
        %v1971 = vmul.f32 %v1836, %v1929
        %v1972 = vmul.f32 %v1837, %v1929
        %v1973 = vmul.f32 %v1838, %v1929
        %v1974 = vmul.f32 %v1839, %v1929
        %v1975 = vmul.f32 %v1840, %v1929
        %v1976 = vmul.f32 %v1841, %v1929
        %v1977 = vmul.f32 %v1842, %v1929
        %v1978 = vmul.f32 %v1843, %v1929
        %v1979 = vmul.f32 %v1844, %v1929
        %v1980 = vmul.f32 %v1845, %v1929
        %v1981 = vmul.f32 %v1846, %v1929
        %v1982 = vmul.f32 %v1847, %v1929
        %v1983 = vmul.f32 %v1848, %v1929
        %v1984 = vmul.f32 %v1849, %v1929
        %v1985 = vmul.f32 %v1850, %v1929
        %v1986 = vmul.f32 %v1851, %v1929
        %v1987 = vmul.f32 %v1852, %v1929
        %v1988 = vmul.f32 %v1853, %v1929
        %v1989 = vmul.f32 %v1854, %v1929
        %v1990 = vmul.f32 %v1855, %v1929
        %v1991 = vmul.f32 %v1856, %v1929
        %v1992 = vmul.f32 %v1857, %v1929
        %v1993 = vmul.f32 %v1858, %v1929
        %v1994 = vmul.f32 %v1859, %v1929
        %v1995 = vmul.f32 %v1860, %v1929
        %v1996 = vmul.f32 %v1861, %v1929
        %v1997 = vmul.f32 %v1862, %v1929
        %v1998 = vmul.f32 %v1863, %v1929
        %v1999 = vmul.f32 %v1864, %v1929
        %v2000 = vmul.f32 %v1865, %v1929
        %v2001 = vmul.f32 %v1866, %v1929
        %v2002 = vmul.f32 %v1867, %v1929
        %v2003 = vmul.f32 %v1868, %v1929
        %v2004 = vmul.f32 %v1869, %v1929
        %v2005 = vmul.f32 %v1870, %v1929
        %v2006 = vmul.f32 %v1871, %v1929
        %v2007 = vmul.f32 %v1872, %v1929
        %v2008 = vmul.f32 %v1873, %v1929
        %v2009 = vmul.f32 %v1874, %v1929
        %v2010 = vmul.f32 %v1875, %v1929
        %v2011 = vmul.f32 %v1876, %v1929
        %v2012 = vmul.f32 %v1877, %v1929
        %v2013 = vmul.f32 %v1878, %v1929
        %v2014 = vmul.f32 %v1879, %v1929
        %v2015 = vmul.f32 %v1880, %v1929
        %v2016 = vmul.f32 %v1881, %v1929
        %v2017 = vmul.f32 %v1882, %v1929
        %v2018 = vmul.f32 %v1883, %v1929
        %v2019 = vmul.f32 %v1884, %v1929
        %v2020 = vmul.f32 %v1885, %v1929
        %v2021 = vmul.f32 %v1886, %v1929
        %v2022 = vmul.f32 %v1887, %v1929
        %v2023 = vmul.f32 %v1888, %v1929
        %v2024 = vmul.f32 %v1889, %v1929
        %v2025 = vmul.f32 %v1890, %v1929
        %v2026 = vmul.f32 %v1891, %v1929
        %v2027 = vmul.f32 %v1892, %v1929
        %v2028 = vmul.f32 %v1893, %v1929
        %v2029 = vmul.f32 %v1894, %v1929
        %v2030 = vmul.f32 %v1895, %v1929
        %v2031 = vmul.f32 %v1896, %v1929
        %v2032 = vmul.f32 %v1897, %v1929
        %v2033 = vmul.f32 %v1898, %v1929
        %v2034 = vmul.f32 %v1899, %v1929
        %v2035 = vmul.f32 %v1900, %v1929
        %v2036 = vmul.f32 %v1901, %v1929
        %v2037 = vmul.f32 %v1902, %v1929
        %v2038 = vmul.f32 %v1903, %v1929
        %v2039 = vmul.f32 %v1904, %v1929
        %v2040 = vmul.f32 %v1905, %v1929
        %v2041 = vmul.f32 %v1906, %v1929
        %v2042 = vmul.f32 %v1907, %v1929
        %v2043 = vmul.f32 %v1908, %v1929
        %v2044 = vmul.f32 %v1909, %v1929
        %v2045 = vmul.f32 %v1910, %v1929
        %v2046 = vmul.f32 %v1911, %v1929
        %v2047 = vmul.f32 %v1912, %v1929
        %v2048 = vmul.f32 %v1913, %v1929
        %v2049 = vmul.f32 %v1914, %v1929
        %v2050 = vmul.f32 %v1915, %v1929
        %v2051 = vmul.f32 %v1916, %v1929
        %v2052 = vmul.f32 %v1917, %v1929
        %v2053 = vmul.f32 %v1918, %v1929
        %v2054 = vmul.f32 %v1919, %v1929
        %v2055 = vmul.f32 %v1920, %v1929
        %v2056 = vmul.f32 %v1921, %v1929
        %v2057 = vmul.f32 %v1922, %v1929
        %v2058 = vmul.f32 %v1923, %v1929
        %2059 = vadd.xlane.f32.xlu0 %v1931
        %v2060 = vpop.xlane.xlu0 %2059
        %2061 = vadd.xlane.f32.xlu0 %v1932
        %v2062 = vpop.xlane.xlu0 %2061
        %2063 = vadd.xlane.f32.xlu0 %v1933
        %v2064 = vpop.xlane.xlu0 %2063
        %2065 = vadd.xlane.f32.xlu0 %v1934
        %v2066 = vpop.xlane.xlu0 %2065
        %2067 = vadd.xlane.f32.xlu0 %v1935
        %v2068 = vpop.xlane.xlu0 %2067
        %2069 = vadd.xlane.f32.xlu0 %v1936
        %v2070 = vpop.xlane.xlu0 %2069
        %2071 = vadd.xlane.f32.xlu0 %v1937
        %v2072 = vpop.xlane.xlu0 %2071
        %2073 = vadd.xlane.f32.xlu0 %v1938
        %v2074 = vpop.xlane.xlu0 %2073
        %2075 = vadd.xlane.f32.xlu0 %v1939
        %v2076 = vpop.xlane.xlu0 %2075
        %2077 = vadd.xlane.f32.xlu0 %v1940
        %v2078 = vpop.xlane.xlu0 %2077
        %2079 = vadd.xlane.f32.xlu0 %v1941
        %v2080 = vpop.xlane.xlu0 %2079
        %2081 = vadd.xlane.f32.xlu0 %v1942
        %v2082 = vpop.xlane.xlu0 %2081
        %2083 = vadd.xlane.f32.xlu0 %v1943
        %v2084 = vpop.xlane.xlu0 %2083
        %2085 = vadd.xlane.f32.xlu0 %v1944
        %v2086 = vpop.xlane.xlu0 %2085
        %2087 = vadd.xlane.f32.xlu0 %v1945
        %v2088 = vpop.xlane.xlu0 %2087
        %2089 = vadd.xlane.f32.xlu0 %v1946
        %v2090 = vpop.xlane.xlu0 %2089
        %2091 = vadd.xlane.f32.xlu0 %v1947
        %v2092 = vpop.xlane.xlu0 %2091
        %2093 = vadd.xlane.f32.xlu0 %v1948
        %v2094 = vpop.xlane.xlu0 %2093
        %2095 = vadd.xlane.f32.xlu0 %v1949
        %v2096 = vpop.xlane.xlu0 %2095
        %2097 = vadd.xlane.f32.xlu0 %v1950
        %v2098 = vpop.xlane.xlu0 %2097
        %2099 = vadd.xlane.f32.xlu0 %v1951
        %v2100 = vpop.xlane.xlu0 %2099
        %2101 = vadd.xlane.f32.xlu0 %v1952
        %v2102 = vpop.xlane.xlu0 %2101
        %2103 = vadd.xlane.f32.xlu0 %v1953
        %v2104 = vpop.xlane.xlu0 %2103
        %2105 = vadd.xlane.f32.xlu0 %v1954
        %v2106 = vpop.xlane.xlu0 %2105
        %2107 = vadd.xlane.f32.xlu0 %v1955
        %v2108 = vpop.xlane.xlu0 %2107
        %2109 = vadd.xlane.f32.xlu0 %v1956
        %v2110 = vpop.xlane.xlu0 %2109
        %2111 = vadd.xlane.f32.xlu0 %v1957
        %v2112 = vpop.xlane.xlu0 %2111
        %2113 = vadd.xlane.f32.xlu0 %v1958
        %v2114 = vpop.xlane.xlu0 %2113
        %2115 = vadd.xlane.f32.xlu0 %v1959
        %v2116 = vpop.xlane.xlu0 %2115
        %2117 = vadd.xlane.f32.xlu0 %v1960
        %v2118 = vpop.xlane.xlu0 %2117
        %2119 = vadd.xlane.f32.xlu0 %v1961
        %v2120 = vpop.xlane.xlu0 %2119
        %2121 = vadd.xlane.f32.xlu0 %v1962
        %v2122 = vpop.xlane.xlu0 %2121
        %2123 = vadd.xlane.f32.xlu0 %v1963
        %v2124 = vpop.xlane.xlu0 %2123
        %2125 = vadd.xlane.f32.xlu0 %v1964
        %v2126 = vpop.xlane.xlu0 %2125
        %2127 = vadd.xlane.f32.xlu0 %v1965
        %v2128 = vpop.xlane.xlu0 %2127
        %2129 = vadd.xlane.f32.xlu0 %v1966
        %v2130 = vpop.xlane.xlu0 %2129
        %2131 = vadd.xlane.f32.xlu0 %v1967
        %v2132 = vpop.xlane.xlu0 %2131
        %2133 = vadd.xlane.f32.xlu0 %v1968
        %v2134 = vpop.xlane.xlu0 %2133
        %2135 = vadd.xlane.f32.xlu0 %v1969
        %v2136 = vpop.xlane.xlu0 %2135
        %2137 = vadd.xlane.f32.xlu0 %v1970
        %v2138 = vpop.xlane.xlu0 %2137
        %2139 = vadd.xlane.f32.xlu0 %v1971
        %v2140 = vpop.xlane.xlu0 %2139
        %2141 = vadd.xlane.f32.xlu0 %v1972
        %v2142 = vpop.xlane.xlu0 %2141
        %2143 = vadd.xlane.f32.xlu0 %v1973
        %v2144 = vpop.xlane.xlu0 %2143
        %2145 = vadd.xlane.f32.xlu0 %v1974
        %v2146 = vpop.xlane.xlu0 %2145
        %2147 = vadd.xlane.f32.xlu0 %v1975
        %v2148 = vpop.xlane.xlu0 %2147
        %2149 = vadd.xlane.f32.xlu0 %v1976
        %v2150 = vpop.xlane.xlu0 %2149
        %2151 = vadd.xlane.f32.xlu0 %v1977
        %v2152 = vpop.xlane.xlu0 %2151
        %2153 = vadd.xlane.f32.xlu0 %v1978
        %v2154 = vpop.xlane.xlu0 %2153
        %2155 = vadd.xlane.f32.xlu0 %v1979
        %v2156 = vpop.xlane.xlu0 %2155
        %2157 = vadd.xlane.f32.xlu0 %v1980
        %v2158 = vpop.xlane.xlu0 %2157
        %2159 = vadd.xlane.f32.xlu0 %v1981
        %v2160 = vpop.xlane.xlu0 %2159
        %2161 = vadd.xlane.f32.xlu0 %v1982
        %v2162 = vpop.xlane.xlu0 %2161
        %2163 = vadd.xlane.f32.xlu0 %v1983
        %v2164 = vpop.xlane.xlu0 %2163
        %2165 = vadd.xlane.f32.xlu0 %v1984
        %v2166 = vpop.xlane.xlu0 %2165
        %2167 = vadd.xlane.f32.xlu0 %v1985
        %v2168 = vpop.xlane.xlu0 %2167
        %2169 = vadd.xlane.f32.xlu0 %v1986
        %v2170 = vpop.xlane.xlu0 %2169
        %2171 = vadd.xlane.f32.xlu0 %v1987
        %v2172 = vpop.xlane.xlu0 %2171
        %2173 = vadd.xlane.f32.xlu0 %v1988
        %v2174 = vpop.xlane.xlu0 %2173
        %2175 = vadd.xlane.f32.xlu0 %v1989
        %v2176 = vpop.xlane.xlu0 %2175
        %2177 = vadd.xlane.f32.xlu0 %v1990
        %v2178 = vpop.xlane.xlu0 %2177
        %2179 = vadd.xlane.f32.xlu0 %v1991
        %v2180 = vpop.xlane.xlu0 %2179
        %2181 = vadd.xlane.f32.xlu0 %v1992
        %v2182 = vpop.xlane.xlu0 %2181
        %2183 = vadd.xlane.f32.xlu0 %v1993
        %v2184 = vpop.xlane.xlu0 %2183
        %2185 = vadd.xlane.f32.xlu0 %v1994
        %v2186 = vpop.xlane.xlu0 %2185
        %2187 = vadd.xlane.f32.xlu0 %v1995
        %v2188 = vpop.xlane.xlu0 %2187
        %2189 = vadd.xlane.f32.xlu0 %v1996
        %v2190 = vpop.xlane.xlu0 %2189
        %2191 = vadd.xlane.f32.xlu0 %v1997
        %v2192 = vpop.xlane.xlu0 %2191
        %2193 = vadd.xlane.f32.xlu0 %v1998
        %v2194 = vpop.xlane.xlu0 %2193
        %2195 = vadd.xlane.f32.xlu0 %v1999
        %v2196 = vpop.xlane.xlu0 %2195
        %2197 = vadd.xlane.f32.xlu0 %v2000
        %v2198 = vpop.xlane.xlu0 %2197
        %2199 = vadd.xlane.f32.xlu0 %v2001
        %v2200 = vpop.xlane.xlu0 %2199
        %2201 = vadd.xlane.f32.xlu0 %v2002
        %v2202 = vpop.xlane.xlu0 %2201
        %2203 = vadd.xlane.f32.xlu0 %v2003
        %v2204 = vpop.xlane.xlu0 %2203
        %2205 = vadd.xlane.f32.xlu0 %v2004
        %v2206 = vpop.xlane.xlu0 %2205
        %2207 = vadd.xlane.f32.xlu0 %v2005
        %v2208 = vpop.xlane.xlu0 %2207
        %2209 = vadd.xlane.f32.xlu0 %v2006
        %v2210 = vpop.xlane.xlu0 %2209
        %2211 = vadd.xlane.f32.xlu0 %v2007
        %v2212 = vpop.xlane.xlu0 %2211
        %2213 = vadd.xlane.f32.xlu0 %v2008
        %v2214 = vpop.xlane.xlu0 %2213
        %2215 = vadd.xlane.f32.xlu0 %v2009
        %v2216 = vpop.xlane.xlu0 %2215
        %2217 = vadd.xlane.f32.xlu0 %v2010
        %v2218 = vpop.xlane.xlu0 %2217
        %2219 = vadd.xlane.f32.xlu0 %v2011
        %v2220 = vpop.xlane.xlu0 %2219
        %2221 = vadd.xlane.f32.xlu0 %v2012
        %v2222 = vpop.xlane.xlu0 %2221
        %2223 = vadd.xlane.f32.xlu0 %v2013
        %v2224 = vpop.xlane.xlu0 %2223
        %2225 = vadd.xlane.f32.xlu0 %v2014
        %v2226 = vpop.xlane.xlu0 %2225
        %2227 = vadd.xlane.f32.xlu0 %v2015
        %v2228 = vpop.xlane.xlu0 %2227
        %2229 = vadd.xlane.f32.xlu0 %v2016
        %v2230 = vpop.xlane.xlu0 %2229
        %2231 = vadd.xlane.f32.xlu0 %v2017
        %v2232 = vpop.xlane.xlu0 %2231
        %2233 = vadd.xlane.f32.xlu0 %v2018
        %v2234 = vpop.xlane.xlu0 %2233
        %2235 = vadd.xlane.f32.xlu0 %v2019
        %v2236 = vpop.xlane.xlu0 %2235
        %2237 = vadd.xlane.f32.xlu0 %v2020
        %v2238 = vpop.xlane.xlu0 %2237
        %2239 = vadd.xlane.f32.xlu0 %v2021
        %v2240 = vpop.xlane.xlu0 %2239
        %2241 = vadd.xlane.f32.xlu0 %v2022
        %v2242 = vpop.xlane.xlu0 %2241
        %2243 = vadd.xlane.f32.xlu0 %v2023
        %v2244 = vpop.xlane.xlu0 %2243
        %2245 = vadd.xlane.f32.xlu0 %v2024
        %v2246 = vpop.xlane.xlu0 %2245
        %2247 = vadd.xlane.f32.xlu0 %v2025
        %v2248 = vpop.xlane.xlu0 %2247
        %2249 = vadd.xlane.f32.xlu0 %v2026
        %v2250 = vpop.xlane.xlu0 %2249
        %2251 = vadd.xlane.f32.xlu0 %v2027
        %v2252 = vpop.xlane.xlu0 %2251
        %2253 = vadd.xlane.f32.xlu0 %v2028
        %v2254 = vpop.xlane.xlu0 %2253
        %2255 = vadd.xlane.f32.xlu0 %v2029
        %v2256 = vpop.xlane.xlu0 %2255
        %2257 = vadd.xlane.f32.xlu0 %v2030
        %v2258 = vpop.xlane.xlu0 %2257
        %2259 = vadd.xlane.f32.xlu0 %v2031
        %v2260 = vpop.xlane.xlu0 %2259
        %2261 = vadd.xlane.f32.xlu0 %v2032
        %v2262 = vpop.xlane.xlu0 %2261
        %2263 = vadd.xlane.f32.xlu0 %v2033
        %v2264 = vpop.xlane.xlu0 %2263
        %2265 = vadd.xlane.f32.xlu0 %v2034
        %v2266 = vpop.xlane.xlu0 %2265
        %2267 = vadd.xlane.f32.xlu0 %v2035
        %v2268 = vpop.xlane.xlu0 %2267
        %2269 = vadd.xlane.f32.xlu0 %v2036
        %v2270 = vpop.xlane.xlu0 %2269
        %2271 = vadd.xlane.f32.xlu0 %v2037
        %v2272 = vpop.xlane.xlu0 %2271
        %2273 = vadd.xlane.f32.xlu0 %v2038
        %v2274 = vpop.xlane.xlu0 %2273
        %2275 = vadd.xlane.f32.xlu0 %v2039
        %v2276 = vpop.xlane.xlu0 %2275
        %2277 = vadd.xlane.f32.xlu0 %v2040
        %v2278 = vpop.xlane.xlu0 %2277
        %2279 = vadd.xlane.f32.xlu0 %v2041
        %v2280 = vpop.xlane.xlu0 %2279
        %2281 = vadd.xlane.f32.xlu0 %v2042
        %v2282 = vpop.xlane.xlu0 %2281
        %2283 = vadd.xlane.f32.xlu0 %v2043
        %v2284 = vpop.xlane.xlu0 %2283
        %2285 = vadd.xlane.f32.xlu0 %v2044
        %v2286 = vpop.xlane.xlu0 %2285
        %2287 = vadd.xlane.f32.xlu0 %v2045
        %v2288 = vpop.xlane.xlu0 %2287
        %2289 = vadd.xlane.f32.xlu0 %v2046
        %v2290 = vpop.xlane.xlu0 %2289
        %2291 = vadd.xlane.f32.xlu0 %v2047
        %v2292 = vpop.xlane.xlu0 %2291
        %2293 = vadd.xlane.f32.xlu0 %v2048
        %v2294 = vpop.xlane.xlu0 %2293
        %2295 = vadd.xlane.f32.xlu0 %v2049
        %v2296 = vpop.xlane.xlu0 %2295
        %2297 = vadd.xlane.f32.xlu0 %v2050
        %v2298 = vpop.xlane.xlu0 %2297
        %2299 = vadd.xlane.f32.xlu0 %v2051
        %v2300 = vpop.xlane.xlu0 %2299
        %2301 = vadd.xlane.f32.xlu0 %v2052
        %v2302 = vpop.xlane.xlu0 %2301
        %2303 = vadd.xlane.f32.xlu0 %v2053
        %v2304 = vpop.xlane.xlu0 %2303
        %2305 = vadd.xlane.f32.xlu0 %v2054
        %v2306 = vpop.xlane.xlu0 %2305
        %2307 = vadd.xlane.f32.xlu0 %v2055
        %v2308 = vpop.xlane.xlu0 %2307
        %2309 = vadd.xlane.f32.xlu0 %v2056
        %v2310 = vpop.xlane.xlu0 %2309
        %2311 = vadd.xlane.f32.xlu0 %v2057
        %v2312 = vpop.xlane.xlu0 %2311
        %2313 = vadd.xlane.f32.xlu0 %v2058
        %v2314 = vpop.xlane.xlu0 %2313
        %v2315 = vld [vmem:[#allocation5] sm:$0x1]
        %v2317 = vlaneseq
        %v2318 = vshrl.u32 %v2317, 7
        %v2319 = vsub.s32 0, %v2318
        %v2320 = vrot.slane %v2315, %v2319
        %2321 = vset.pattern.permute.xlu0 0
        %2322 = vperm.xlu0 %2321, %v2320
        %v2323 = vpop.permute.xlu0 %2322
        %v2325 = vadd.f32 %v2060, %v2323
        %v2326 = vadd.f32 %v2062, %v2323
        %v2327 = vadd.f32 %v2064, %v2323
        %v2328 = vadd.f32 %v2066, %v2323
        %v2329 = vadd.f32 %v2068, %v2323
        %v2330 = vadd.f32 %v2070, %v2323
        %v2331 = vadd.f32 %v2072, %v2323
        %v2332 = vadd.f32 %v2074, %v2323
        %v2333 = vadd.f32 %v2076, %v2323
        %v2334 = vadd.f32 %v2078, %v2323
        %v2335 = vadd.f32 %v2080, %v2323
        %v2336 = vadd.f32 %v2082, %v2323
        %v2337 = vadd.f32 %v2084, %v2323
        %v2338 = vadd.f32 %v2086, %v2323
        %v2339 = vadd.f32 %v2088, %v2323
        %v2340 = vadd.f32 %v2090, %v2323
        %v2341 = vadd.f32 %v2092, %v2323
        %v2342 = vadd.f32 %v2094, %v2323
        %v2343 = vadd.f32 %v2096, %v2323
        %v2344 = vadd.f32 %v2098, %v2323
        %v2345 = vadd.f32 %v2100, %v2323
        %v2346 = vadd.f32 %v2102, %v2323
        %v2347 = vadd.f32 %v2104, %v2323
        %v2348 = vadd.f32 %v2106, %v2323
        %v2349 = vadd.f32 %v2108, %v2323
        %v2350 = vadd.f32 %v2110, %v2323
        %v2351 = vadd.f32 %v2112, %v2323
        %v2352 = vadd.f32 %v2114, %v2323
        %v2353 = vadd.f32 %v2116, %v2323
        %v2354 = vadd.f32 %v2118, %v2323
        %v2355 = vadd.f32 %v2120, %v2323
        %v2356 = vadd.f32 %v2122, %v2323
        %v2357 = vadd.f32 %v2124, %v2323
        %v2358 = vadd.f32 %v2126, %v2323
        %v2359 = vadd.f32 %v2128, %v2323
        %v2360 = vadd.f32 %v2130, %v2323
        %v2361 = vadd.f32 %v2132, %v2323
        %v2362 = vadd.f32 %v2134, %v2323
        %v2363 = vadd.f32 %v2136, %v2323
        %v2364 = vadd.f32 %v2138, %v2323
        %v2365 = vadd.f32 %v2140, %v2323
        %v2366 = vadd.f32 %v2142, %v2323
        %v2367 = vadd.f32 %v2144, %v2323
        %v2368 = vadd.f32 %v2146, %v2323
        %v2369 = vadd.f32 %v2148, %v2323
        %v2370 = vadd.f32 %v2150, %v2323
        %v2371 = vadd.f32 %v2152, %v2323
        %v2372 = vadd.f32 %v2154, %v2323
        %v2373 = vadd.f32 %v2156, %v2323
        %v2374 = vadd.f32 %v2158, %v2323
        %v2375 = vadd.f32 %v2160, %v2323
        %v2376 = vadd.f32 %v2162, %v2323
        %v2377 = vadd.f32 %v2164, %v2323
        %v2378 = vadd.f32 %v2166, %v2323
        %v2379 = vadd.f32 %v2168, %v2323
        %v2380 = vadd.f32 %v2170, %v2323
        %v2381 = vadd.f32 %v2172, %v2323
        %v2382 = vadd.f32 %v2174, %v2323
        %v2383 = vadd.f32 %v2176, %v2323
        %v2384 = vadd.f32 %v2178, %v2323
        %v2385 = vadd.f32 %v2180, %v2323
        %v2386 = vadd.f32 %v2182, %v2323
        %v2387 = vadd.f32 %v2184, %v2323
        %v2388 = vadd.f32 %v2186, %v2323
        %v2389 = vadd.f32 %v2188, %v2323
        %v2390 = vadd.f32 %v2190, %v2323
        %v2391 = vadd.f32 %v2192, %v2323
        %v2392 = vadd.f32 %v2194, %v2323
        %v2393 = vadd.f32 %v2196, %v2323
        %v2394 = vadd.f32 %v2198, %v2323
        %v2395 = vadd.f32 %v2200, %v2323
        %v2396 = vadd.f32 %v2202, %v2323
        %v2397 = vadd.f32 %v2204, %v2323
        %v2398 = vadd.f32 %v2206, %v2323
        %v2399 = vadd.f32 %v2208, %v2323
        %v2400 = vadd.f32 %v2210, %v2323
        %v2401 = vadd.f32 %v2212, %v2323
        %v2402 = vadd.f32 %v2214, %v2323
        %v2403 = vadd.f32 %v2216, %v2323
        %v2404 = vadd.f32 %v2218, %v2323
        %v2405 = vadd.f32 %v2220, %v2323
        %v2406 = vadd.f32 %v2222, %v2323
        %v2407 = vadd.f32 %v2224, %v2323
        %v2408 = vadd.f32 %v2226, %v2323
        %v2409 = vadd.f32 %v2228, %v2323
        %v2410 = vadd.f32 %v2230, %v2323
        %v2411 = vadd.f32 %v2232, %v2323
        %v2412 = vadd.f32 %v2234, %v2323
        %v2413 = vadd.f32 %v2236, %v2323
        %v2414 = vadd.f32 %v2238, %v2323
        %v2415 = vadd.f32 %v2240, %v2323
        %v2416 = vadd.f32 %v2242, %v2323
        %v2417 = vadd.f32 %v2244, %v2323
        %v2418 = vadd.f32 %v2246, %v2323
        %v2419 = vadd.f32 %v2248, %v2323
        %v2420 = vadd.f32 %v2250, %v2323
        %v2421 = vadd.f32 %v2252, %v2323
        %v2422 = vadd.f32 %v2254, %v2323
        %v2423 = vadd.f32 %v2256, %v2323
        %v2424 = vadd.f32 %v2258, %v2323
        %v2425 = vadd.f32 %v2260, %v2323
        %v2426 = vadd.f32 %v2262, %v2323
        %v2427 = vadd.f32 %v2264, %v2323
        %v2428 = vadd.f32 %v2266, %v2323
        %v2429 = vadd.f32 %v2268, %v2323
        %v2430 = vadd.f32 %v2270, %v2323
        %v2431 = vadd.f32 %v2272, %v2323
        %v2432 = vadd.f32 %v2274, %v2323
        %v2433 = vadd.f32 %v2276, %v2323
        %v2434 = vadd.f32 %v2278, %v2323
        %v2435 = vadd.f32 %v2280, %v2323
        %v2436 = vadd.f32 %v2282, %v2323
        %v2437 = vadd.f32 %v2284, %v2323
        %v2438 = vadd.f32 %v2286, %v2323
        %v2439 = vadd.f32 %v2288, %v2323
        %v2440 = vadd.f32 %v2290, %v2323
        %v2441 = vadd.f32 %v2292, %v2323
        %v2442 = vadd.f32 %v2294, %v2323
        %v2443 = vadd.f32 %v2296, %v2323
        %v2444 = vadd.f32 %v2298, %v2323
        %v2445 = vadd.f32 %v2300, %v2323
        %v2446 = vadd.f32 %v2302, %v2323
        %v2447 = vadd.f32 %v2304, %v2323
        %v2448 = vadd.f32 %v2306, %v2323
        %v2449 = vadd.f32 %v2308, %v2323
        %v2450 = vadd.f32 %v2310, %v2323
        %v2451 = vadd.f32 %v2312, %v2323
        %v2452 = vadd.f32 %v2314, %v2323
        %v2453 = vld [vmem:[#allocation2] sm:$0xff]
        %v2582 = vlaneseq
        %v2583 = vand.u32 %v2582, 127
        %v2584 = vlaneseq
        %v2585 = vshrl.u32 %v2584, 7
        %v2586 = vsub.s32 %v2583, %v2585
        %v2587 = vrot.slane %v2325, %v2586
        %v2588 = vadd.s32 %v2583, 4294967288
        %v2589 = vlaneseq
        %v2590 = vshrl.u32 %v2589, 7
        %v2591 = vsub.s32 %v2588, %v2590
        %v2592 = vrot.slane %v2326, %v2591
        %vm2593 = vcmask 130112
        %v2594 = vsel %vm2593, %v2592, %v2587
        %v2595 = vadd.s32 %v2583, 4294967280
        %v2596 = vlaneseq
        %v2597 = vshrl.u32 %v2596, 7
        %v2598 = vsub.s32 %v2595, %v2597
        %v2599 = vrot.slane %v2327, %v2598
        %vm2600 = vcmask 195712
        %v2601 = vsel %vm2600, %v2599, %v2594
        %v2602 = vadd.s32 %v2583, 4294967272
        %v2603 = vlaneseq
        %v2604 = vshrl.u32 %v2603, 7
        %v2605 = vsub.s32 %v2602, %v2604
        %v2606 = vrot.slane %v2328, %v2605
        %vm2607 = vcmask 261312
        %v2608 = vsel %vm2607, %v2606, %v2601
        %v2609 = vadd.s32 %v2583, 4294967264
        %v2610 = vlaneseq
        %v2611 = vshrl.u32 %v2610, 7
        %v2612 = vsub.s32 %v2609, %v2611
        %v2613 = vrot.slane %v2329, %v2612
        %vm2614 = vcmask 326912
        %v2615 = vsel %vm2614, %v2613, %v2608
        %v2616 = vadd.s32 %v2583, 4294967256
        %v2617 = vlaneseq
        %v2618 = vshrl.u32 %v2617, 7
        %v2619 = vsub.s32 %v2616, %v2618
        %v2620 = vrot.slane %v2330, %v2619
        %vm2621 = vcmask 392512
        %v2622 = vsel %vm2621, %v2620, %v2615
        %v2623 = vadd.s32 %v2583, 4294967248
        %v2624 = vlaneseq
        %v2625 = vshrl.u32 %v2624, 7
        %v2626 = vsub.s32 %v2623, %v2625
        %v2627 = vrot.slane %v2331, %v2626
        %vm2628 = vcmask 458112
        %v2629 = vsel %vm2628, %v2627, %v2622
        %v2630 = vadd.s32 %v2583, 4294967240
        %v2631 = vlaneseq
        %v2632 = vshrl.u32 %v2631, 7
        %v2633 = vsub.s32 %v2630, %v2632
        %v2634 = vrot.slane %v2332, %v2633
        %vm2635 = vcmask 523712
        %v2636 = vsel %vm2635, %v2634, %v2629
        %v2637 = vadd.s32 %v2583, 4294967232
        %v2638 = vlaneseq
        %v2639 = vshrl.u32 %v2638, 7
        %v2640 = vsub.s32 %v2637, %v2639
        %v2641 = vrot.slane %v2333, %v2640
        %vm2642 = vcmask 589312
        %v2643 = vsel %vm2642, %v2641, %v2636
        %v2644 = vadd.s32 %v2583, 4294967224
        %v2645 = vlaneseq
        %v2646 = vshrl.u32 %v2645, 7
        %v2647 = vsub.s32 %v2644, %v2646
        %v2648 = vrot.slane %v2334, %v2647
        %vm2649 = vcmask 654912
        %v2650 = vsel %vm2649, %v2648, %v2643
        %v2651 = vadd.s32 %v2583, 4294967216
        %v2652 = vlaneseq
        %v2653 = vshrl.u32 %v2652, 7
        %v2654 = vsub.s32 %v2651, %v2653
        %v2655 = vrot.slane %v2335, %v2654
        %vm2656 = vcmask 720512
        %v2657 = vsel %vm2656, %v2655, %v2650
        %v2658 = vadd.s32 %v2583, 4294967208
        %v2659 = vlaneseq
        %v2660 = vshrl.u32 %v2659, 7
        %v2661 = vsub.s32 %v2658, %v2660
        %v2662 = vrot.slane %v2336, %v2661
        %vm2663 = vcmask 786112
        %v2664 = vsel %vm2663, %v2662, %v2657
        %v2665 = vadd.s32 %v2583, 4294967200
        %v2666 = vlaneseq
        %v2667 = vshrl.u32 %v2666, 7
        %v2668 = vsub.s32 %v2665, %v2667
        %v2669 = vrot.slane %v2337, %v2668
        %vm2670 = vcmask 851712
        %v2671 = vsel %vm2670, %v2669, %v2664
        %v2672 = vadd.s32 %v2583, 4294967192
        %v2673 = vlaneseq
        %v2674 = vshrl.u32 %v2673, 7
        %v2675 = vsub.s32 %v2672, %v2674
        %v2676 = vrot.slane %v2338, %v2675
        %vm2677 = vcmask 917312
        %v2678 = vsel %vm2677, %v2676, %v2671
        %v2679 = vadd.s32 %v2583, 4294967184
        %v2680 = vlaneseq
        %v2681 = vshrl.u32 %v2680, 7
        %v2682 = vsub.s32 %v2679, %v2681
        %v2683 = vrot.slane %v2339, %v2682
        %vm2684 = vcmask 982912
        %v2685 = vsel %vm2684, %v2683, %v2678
        %v2686 = vadd.s32 %v2583, 4294967176
        %v2687 = vlaneseq
        %v2688 = vshrl.u32 %v2687, 7
        %v2689 = vsub.s32 %v2686, %v2688
        %v2690 = vrot.slane %v2340, %v2689
        %vm2691 = vcmask 1048512
        %v2692 = vsel %vm2691, %v2690, %v2685
        %v2693 = vlaneseq
        %v2694 = vshrl.u32 %v2693, 7
        %v2695 = vsub.s32 %v2583, %v2694
        %v2696 = vrot.slane %v2341, %v2695
        %v2697 = vlaneseq
        %v2698 = vshrl.u32 %v2697, 7
        %v2699 = vsub.s32 %v2588, %v2698
        %v2700 = vrot.slane %v2342, %v2699
        %v2701 = vsel %vm2593, %v2700, %v2696
        %v2702 = vlaneseq
        %v2703 = vshrl.u32 %v2702, 7
        %v2704 = vsub.s32 %v2595, %v2703
        %v2705 = vrot.slane %v2343, %v2704
        %v2706 = vsel %vm2600, %v2705, %v2701
        %v2707 = vlaneseq
        %v2708 = vshrl.u32 %v2707, 7
        %v2709 = vsub.s32 %v2602, %v2708
        %v2710 = vrot.slane %v2344, %v2709
        %v2711 = vsel %vm2607, %v2710, %v2706
        %v2712 = vlaneseq
        %v2713 = vshrl.u32 %v2712, 7
        %v2714 = vsub.s32 %v2609, %v2713
        %v2715 = vrot.slane %v2345, %v2714
        %v2716 = vsel %vm2614, %v2715, %v2711
        %v2717 = vlaneseq
        %v2718 = vshrl.u32 %v2717, 7
        %v2719 = vsub.s32 %v2616, %v2718
        %v2720 = vrot.slane %v2346, %v2719
        %v2721 = vsel %vm2621, %v2720, %v2716
        %v2722 = vlaneseq
        %v2723 = vshrl.u32 %v2722, 7
        %v2724 = vsub.s32 %v2623, %v2723
        %v2725 = vrot.slane %v2347, %v2724
        %v2726 = vsel %vm2628, %v2725, %v2721
        %v2727 = vlaneseq
        %v2728 = vshrl.u32 %v2727, 7
        %v2729 = vsub.s32 %v2630, %v2728
        %v2730 = vrot.slane %v2348, %v2729
        %v2731 = vsel %vm2635, %v2730, %v2726
        %v2732 = vlaneseq
        %v2733 = vshrl.u32 %v2732, 7
        %v2734 = vsub.s32 %v2637, %v2733
        %v2735 = vrot.slane %v2349, %v2734
        %v2736 = vsel %vm2642, %v2735, %v2731
        %v2737 = vlaneseq
        %v2738 = vshrl.u32 %v2737, 7
        %v2739 = vsub.s32 %v2644, %v2738
        %v2740 = vrot.slane %v2350, %v2739
        %v2741 = vsel %vm2649, %v2740, %v2736
        %v2742 = vlaneseq
        %v2743 = vshrl.u32 %v2742, 7
        %v2744 = vsub.s32 %v2651, %v2743
        %v2745 = vrot.slane %v2351, %v2744
        %v2746 = vsel %vm2656, %v2745, %v2741
        %v2747 = vlaneseq
        %v2748 = vshrl.u32 %v2747, 7
        %v2749 = vsub.s32 %v2658, %v2748
        %v2750 = vrot.slane %v2352, %v2749
        %v2751 = vsel %vm2663, %v2750, %v2746
        %v2752 = vlaneseq
        %v2753 = vshrl.u32 %v2752, 7
        %v2754 = vsub.s32 %v2665, %v2753
        %v2755 = vrot.slane %v2353, %v2754
        %v2756 = vsel %vm2670, %v2755, %v2751
        %v2757 = vlaneseq
        %v2758 = vshrl.u32 %v2757, 7
        %v2759 = vsub.s32 %v2672, %v2758
        %v2760 = vrot.slane %v2354, %v2759
        %v2761 = vsel %vm2677, %v2760, %v2756
        %v2762 = vlaneseq
        %v2763 = vshrl.u32 %v2762, 7
        %v2764 = vsub.s32 %v2679, %v2763
        %v2765 = vrot.slane %v2355, %v2764
        %v2766 = vsel %vm2684, %v2765, %v2761
        %v2767 = vlaneseq
        %v2768 = vshrl.u32 %v2767, 7
        %v2769 = vsub.s32 %v2686, %v2768
        %v2770 = vrot.slane %v2356, %v2769
        %v2771 = vsel %vm2691, %v2770, %v2766
        %v2772 = vlaneseq
        %v2773 = vshrl.u32 %v2772, 7
        %v2774 = vsub.s32 %v2583, %v2773
        %v2775 = vrot.slane %v2357, %v2774
        %v2776 = vlaneseq
        %v2777 = vshrl.u32 %v2776, 7
        %v2778 = vsub.s32 %v2588, %v2777
        %v2779 = vrot.slane %v2358, %v2778
        %v2780 = vsel %vm2593, %v2779, %v2775
        %v2781 = vlaneseq
        %v2782 = vshrl.u32 %v2781, 7
        %v2783 = vsub.s32 %v2595, %v2782
        %v2784 = vrot.slane %v2359, %v2783
        %v2785 = vsel %vm2600, %v2784, %v2780
        %v2786 = vlaneseq
        %v2787 = vshrl.u32 %v2786, 7
        %v2788 = vsub.s32 %v2602, %v2787
        %v2789 = vrot.slane %v2360, %v2788
        %v2790 = vsel %vm2607, %v2789, %v2785
        %v2791 = vlaneseq
        %v2792 = vshrl.u32 %v2791, 7
        %v2793 = vsub.s32 %v2609, %v2792
        %v2794 = vrot.slane %v2361, %v2793
        %v2795 = vsel %vm2614, %v2794, %v2790
        %v2796 = vlaneseq
        %v2797 = vshrl.u32 %v2796, 7
        %v2798 = vsub.s32 %v2616, %v2797
        %v2799 = vrot.slane %v2362, %v2798
        %v2800 = vsel %vm2621, %v2799, %v2795
        %v2801 = vlaneseq
        %v2802 = vshrl.u32 %v2801, 7
        %v2803 = vsub.s32 %v2623, %v2802
        %v2804 = vrot.slane %v2363, %v2803
        %v2805 = vsel %vm2628, %v2804, %v2800
        %v2806 = vlaneseq
        %v2807 = vshrl.u32 %v2806, 7
        %v2808 = vsub.s32 %v2630, %v2807
        %v2809 = vrot.slane %v2364, %v2808
        %v2810 = vsel %vm2635, %v2809, %v2805
        %v2811 = vlaneseq
        %v2812 = vshrl.u32 %v2811, 7
        %v2813 = vsub.s32 %v2637, %v2812
        %v2814 = vrot.slane %v2365, %v2813
        %v2815 = vsel %vm2642, %v2814, %v2810
        %v2816 = vlaneseq
        %v2817 = vshrl.u32 %v2816, 7
        %v2818 = vsub.s32 %v2644, %v2817
        %v2819 = vrot.slane %v2366, %v2818
        %v2820 = vsel %vm2649, %v2819, %v2815
        %v2821 = vlaneseq
        %v2822 = vshrl.u32 %v2821, 7
        %v2823 = vsub.s32 %v2651, %v2822
        %v2824 = vrot.slane %v2367, %v2823
        %v2825 = vsel %vm2656, %v2824, %v2820
        %v2826 = vlaneseq
        %v2827 = vshrl.u32 %v2826, 7
        %v2828 = vsub.s32 %v2658, %v2827
        %v2829 = vrot.slane %v2368, %v2828
        %v2830 = vsel %vm2663, %v2829, %v2825
        %v2831 = vlaneseq
        %v2832 = vshrl.u32 %v2831, 7
        %v2833 = vsub.s32 %v2665, %v2832
        %v2834 = vrot.slane %v2369, %v2833
        %v2835 = vsel %vm2670, %v2834, %v2830
        %v2836 = vlaneseq
        %v2837 = vshrl.u32 %v2836, 7
        %v2838 = vsub.s32 %v2672, %v2837
        %v2839 = vrot.slane %v2370, %v2838
        %v2840 = vsel %vm2677, %v2839, %v2835
        %v2841 = vlaneseq
        %v2842 = vshrl.u32 %v2841, 7
        %v2843 = vsub.s32 %v2679, %v2842
        %v2844 = vrot.slane %v2371, %v2843
        %v2845 = vsel %vm2684, %v2844, %v2840
        %v2846 = vlaneseq
        %v2847 = vshrl.u32 %v2846, 7
        %v2848 = vsub.s32 %v2686, %v2847
        %v2849 = vrot.slane %v2372, %v2848
        %v2850 = vsel %vm2691, %v2849, %v2845
        %v2851 = vlaneseq
        %v2852 = vshrl.u32 %v2851, 7
        %v2853 = vsub.s32 %v2583, %v2852
        %v2854 = vrot.slane %v2373, %v2853
        %v2855 = vlaneseq
        %v2856 = vshrl.u32 %v2855, 7
        %v2857 = vsub.s32 %v2588, %v2856
        %v2858 = vrot.slane %v2374, %v2857
        %v2859 = vsel %vm2593, %v2858, %v2854
        %v2860 = vlaneseq
        %v2861 = vshrl.u32 %v2860, 7
        %v2862 = vsub.s32 %v2595, %v2861
        %v2863 = vrot.slane %v2375, %v2862
        %v2864 = vsel %vm2600, %v2863, %v2859
        %v2865 = vlaneseq
        %v2866 = vshrl.u32 %v2865, 7
        %v2867 = vsub.s32 %v2602, %v2866
        %v2868 = vrot.slane %v2376, %v2867
        %v2869 = vsel %vm2607, %v2868, %v2864
        %v2870 = vlaneseq
        %v2871 = vshrl.u32 %v2870, 7
        %v2872 = vsub.s32 %v2609, %v2871
        %v2873 = vrot.slane %v2377, %v2872
        %v2874 = vsel %vm2614, %v2873, %v2869
        %v2875 = vlaneseq
        %v2876 = vshrl.u32 %v2875, 7
        %v2877 = vsub.s32 %v2616, %v2876
        %v2878 = vrot.slane %v2378, %v2877
        %v2879 = vsel %vm2621, %v2878, %v2874
        %v2880 = vlaneseq
        %v2881 = vshrl.u32 %v2880, 7
        %v2882 = vsub.s32 %v2623, %v2881
        %v2883 = vrot.slane %v2379, %v2882
        %v2884 = vsel %vm2628, %v2883, %v2879
        %v2885 = vlaneseq
        %v2886 = vshrl.u32 %v2885, 7
        %v2887 = vsub.s32 %v2630, %v2886
        %v2888 = vrot.slane %v2380, %v2887
        %v2889 = vsel %vm2635, %v2888, %v2884
        %v2890 = vlaneseq
        %v2891 = vshrl.u32 %v2890, 7
        %v2892 = vsub.s32 %v2637, %v2891
        %v2893 = vrot.slane %v2381, %v2892
        %v2894 = vsel %vm2642, %v2893, %v2889
        %v2895 = vlaneseq
        %v2896 = vshrl.u32 %v2895, 7
        %v2897 = vsub.s32 %v2644, %v2896
        %v2898 = vrot.slane %v2382, %v2897
        %v2899 = vsel %vm2649, %v2898, %v2894
        %v2900 = vlaneseq
        %v2901 = vshrl.u32 %v2900, 7
        %v2902 = vsub.s32 %v2651, %v2901
        %v2903 = vrot.slane %v2383, %v2902
        %v2904 = vsel %vm2656, %v2903, %v2899
        %v2905 = vlaneseq
        %v2906 = vshrl.u32 %v2905, 7
        %v2907 = vsub.s32 %v2658, %v2906
        %v2908 = vrot.slane %v2384, %v2907
        %v2909 = vsel %vm2663, %v2908, %v2904
        %v2910 = vlaneseq
        %v2911 = vshrl.u32 %v2910, 7
        %v2912 = vsub.s32 %v2665, %v2911
        %v2913 = vrot.slane %v2385, %v2912
        %v2914 = vsel %vm2670, %v2913, %v2909
        %v2915 = vlaneseq
        %v2916 = vshrl.u32 %v2915, 7
        %v2917 = vsub.s32 %v2672, %v2916
        %v2918 = vrot.slane %v2386, %v2917
        %v2919 = vsel %vm2677, %v2918, %v2914
        %v2920 = vlaneseq
        %v2921 = vshrl.u32 %v2920, 7
        %v2922 = vsub.s32 %v2679, %v2921
        %v2923 = vrot.slane %v2387, %v2922
        %v2924 = vsel %vm2684, %v2923, %v2919
        %v2925 = vlaneseq
        %v2926 = vshrl.u32 %v2925, 7
        %v2927 = vsub.s32 %v2686, %v2926
        %v2928 = vrot.slane %v2388, %v2927
        %v2929 = vsel %vm2691, %v2928, %v2924
        %v2930 = vlaneseq
        %v2931 = vshrl.u32 %v2930, 7
        %v2932 = vsub.s32 %v2583, %v2931
        %v2933 = vrot.slane %v2389, %v2932
        %v2934 = vlaneseq
        %v2935 = vshrl.u32 %v2934, 7
        %v2936 = vsub.s32 %v2588, %v2935
        %v2937 = vrot.slane %v2390, %v2936
        %v2938 = vsel %vm2593, %v2937, %v2933
        %v2939 = vlaneseq
        %v2940 = vshrl.u32 %v2939, 7
        %v2941 = vsub.s32 %v2595, %v2940
        %v2942 = vrot.slane %v2391, %v2941
        %v2943 = vsel %vm2600, %v2942, %v2938
        %v2944 = vlaneseq
        %v2945 = vshrl.u32 %v2944, 7
        %v2946 = vsub.s32 %v2602, %v2945
        %v2947 = vrot.slane %v2392, %v2946
        %v2948 = vsel %vm2607, %v2947, %v2943
        %v2949 = vlaneseq
        %v2950 = vshrl.u32 %v2949, 7
        %v2951 = vsub.s32 %v2609, %v2950
        %v2952 = vrot.slane %v2393, %v2951
        %v2953 = vsel %vm2614, %v2952, %v2948
        %v2954 = vlaneseq
        %v2955 = vshrl.u32 %v2954, 7
        %v2956 = vsub.s32 %v2616, %v2955
        %v2957 = vrot.slane %v2394, %v2956
        %v2958 = vsel %vm2621, %v2957, %v2953
        %v2959 = vlaneseq
        %v2960 = vshrl.u32 %v2959, 7
        %v2961 = vsub.s32 %v2623, %v2960
        %v2962 = vrot.slane %v2395, %v2961
        %v2963 = vsel %vm2628, %v2962, %v2958
        %v2964 = vlaneseq
        %v2965 = vshrl.u32 %v2964, 7
        %v2966 = vsub.s32 %v2630, %v2965
        %v2967 = vrot.slane %v2396, %v2966
        %v2968 = vsel %vm2635, %v2967, %v2963
        %v2969 = vlaneseq
        %v2970 = vshrl.u32 %v2969, 7
        %v2971 = vsub.s32 %v2637, %v2970
        %v2972 = vrot.slane %v2397, %v2971
        %v2973 = vsel %vm2642, %v2972, %v2968
        %v2974 = vlaneseq
        %v2975 = vshrl.u32 %v2974, 7
        %v2976 = vsub.s32 %v2644, %v2975
        %v2977 = vrot.slane %v2398, %v2976
        %v2978 = vsel %vm2649, %v2977, %v2973
        %v2979 = vlaneseq
        %v2980 = vshrl.u32 %v2979, 7
        %v2981 = vsub.s32 %v2651, %v2980
        %v2982 = vrot.slane %v2399, %v2981
        %v2983 = vsel %vm2656, %v2982, %v2978
        %v2984 = vlaneseq
        %v2985 = vshrl.u32 %v2984, 7
        %v2986 = vsub.s32 %v2658, %v2985
        %v2987 = vrot.slane %v2400, %v2986
        %v2988 = vsel %vm2663, %v2987, %v2983
        %v2989 = vlaneseq
        %v2990 = vshrl.u32 %v2989, 7
        %v2991 = vsub.s32 %v2665, %v2990
        %v2992 = vrot.slane %v2401, %v2991
        %v2993 = vsel %vm2670, %v2992, %v2988
        %v2994 = vlaneseq
        %v2995 = vshrl.u32 %v2994, 7
        %v2996 = vsub.s32 %v2672, %v2995
        %v2997 = vrot.slane %v2402, %v2996
        %v2998 = vsel %vm2677, %v2997, %v2993
        %v2999 = vlaneseq
        %v3000 = vshrl.u32 %v2999, 7
        %v3001 = vsub.s32 %v2679, %v3000
        %v3002 = vrot.slane %v2403, %v3001
        %v3003 = vsel %vm2684, %v3002, %v2998
        %v3004 = vlaneseq
        %v3005 = vshrl.u32 %v3004, 7
        %v3006 = vsub.s32 %v2686, %v3005
        %v3007 = vrot.slane %v2404, %v3006
        %v3008 = vsel %vm2691, %v3007, %v3003
        %v3009 = vlaneseq
        %v3010 = vshrl.u32 %v3009, 7
        %v3011 = vsub.s32 %v2583, %v3010
        %v3012 = vrot.slane %v2405, %v3011
        %v3013 = vlaneseq
        %v3014 = vshrl.u32 %v3013, 7
        %v3015 = vsub.s32 %v2588, %v3014
        %v3016 = vrot.slane %v2406, %v3015
        %v3017 = vsel %vm2593, %v3016, %v3012
        %v3018 = vlaneseq
        %v3019 = vshrl.u32 %v3018, 7
        %v3020 = vsub.s32 %v2595, %v3019
        %v3021 = vrot.slane %v2407, %v3020
        %v3022 = vsel %vm2600, %v3021, %v3017
        %v3023 = vlaneseq
        %v3024 = vshrl.u32 %v3023, 7
        %v3025 = vsub.s32 %v2602, %v3024
        %v3026 = vrot.slane %v2408, %v3025
        %v3027 = vsel %vm2607, %v3026, %v3022
        %v3028 = vlaneseq
        %v3029 = vshrl.u32 %v3028, 7
        %v3030 = vsub.s32 %v2609, %v3029
        %v3031 = vrot.slane %v2409, %v3030
        %v3032 = vsel %vm2614, %v3031, %v3027
        %v3033 = vlaneseq
        %v3034 = vshrl.u32 %v3033, 7
        %v3035 = vsub.s32 %v2616, %v3034
        %v3036 = vrot.slane %v2410, %v3035
        %v3037 = vsel %vm2621, %v3036, %v3032
        %v3038 = vlaneseq
        %v3039 = vshrl.u32 %v3038, 7
        %v3040 = vsub.s32 %v2623, %v3039
        %v3041 = vrot.slane %v2411, %v3040
        %v3042 = vsel %vm2628, %v3041, %v3037
        %v3043 = vlaneseq
        %v3044 = vshrl.u32 %v3043, 7
        %v3045 = vsub.s32 %v2630, %v3044
        %v3046 = vrot.slane %v2412, %v3045
        %v3047 = vsel %vm2635, %v3046, %v3042
        %v3048 = vlaneseq
        %v3049 = vshrl.u32 %v3048, 7
        %v3050 = vsub.s32 %v2637, %v3049
        %v3051 = vrot.slane %v2413, %v3050
        %v3052 = vsel %vm2642, %v3051, %v3047
        %v3053 = vlaneseq
        %v3054 = vshrl.u32 %v3053, 7
        %v3055 = vsub.s32 %v2644, %v3054
        %v3056 = vrot.slane %v2414, %v3055
        %v3057 = vsel %vm2649, %v3056, %v3052
        %v3058 = vlaneseq
        %v3059 = vshrl.u32 %v3058, 7
        %v3060 = vsub.s32 %v2651, %v3059
        %v3061 = vrot.slane %v2415, %v3060
        %v3062 = vsel %vm2656, %v3061, %v3057
        %v3063 = vlaneseq
        %v3064 = vshrl.u32 %v3063, 7
        %v3065 = vsub.s32 %v2658, %v3064
        %v3066 = vrot.slane %v2416, %v3065
        %v3067 = vsel %vm2663, %v3066, %v3062
        %v3068 = vlaneseq
        %v3069 = vshrl.u32 %v3068, 7
        %v3070 = vsub.s32 %v2665, %v3069
        %v3071 = vrot.slane %v2417, %v3070
        %v3072 = vsel %vm2670, %v3071, %v3067
        %v3073 = vlaneseq
        %v3074 = vshrl.u32 %v3073, 7
        %v3075 = vsub.s32 %v2672, %v3074
        %v3076 = vrot.slane %v2418, %v3075
        %v3077 = vsel %vm2677, %v3076, %v3072
        %v3078 = vlaneseq
        %v3079 = vshrl.u32 %v3078, 7
        %v3080 = vsub.s32 %v2679, %v3079
        %v3081 = vrot.slane %v2419, %v3080
        %v3082 = vsel %vm2684, %v3081, %v3077
        %v3083 = vlaneseq
        %v3084 = vshrl.u32 %v3083, 7
        %v3085 = vsub.s32 %v2686, %v3084
        %v3086 = vrot.slane %v2420, %v3085
        %v3087 = vsel %vm2691, %v3086, %v3082
        %v3088 = vlaneseq
        %v3089 = vshrl.u32 %v3088, 7
        %v3090 = vsub.s32 %v2583, %v3089
        %v3091 = vrot.slane %v2421, %v3090
        %v3092 = vlaneseq
        %v3093 = vshrl.u32 %v3092, 7
        %v3094 = vsub.s32 %v2588, %v3093
        %v3095 = vrot.slane %v2422, %v3094
        %v3096 = vsel %vm2593, %v3095, %v3091
        %v3097 = vlaneseq
        %v3098 = vshrl.u32 %v3097, 7
        %v3099 = vsub.s32 %v2595, %v3098
        %v3100 = vrot.slane %v2423, %v3099
        %v3101 = vsel %vm2600, %v3100, %v3096
        %v3102 = vlaneseq
        %v3103 = vshrl.u32 %v3102, 7
        %v3104 = vsub.s32 %v2602, %v3103
        %v3105 = vrot.slane %v2424, %v3104
        %v3106 = vsel %vm2607, %v3105, %v3101
        %v3107 = vlaneseq
        %v3108 = vshrl.u32 %v3107, 7
        %v3109 = vsub.s32 %v2609, %v3108
        %v3110 = vrot.slane %v2425, %v3109
        %v3111 = vsel %vm2614, %v3110, %v3106
        %v3112 = vlaneseq
        %v3113 = vshrl.u32 %v3112, 7
        %v3114 = vsub.s32 %v2616, %v3113
        %v3115 = vrot.slane %v2426, %v3114
        %v3116 = vsel %vm2621, %v3115, %v3111
        %v3117 = vlaneseq
        %v3118 = vshrl.u32 %v3117, 7
        %v3119 = vsub.s32 %v2623, %v3118
        %v3120 = vrot.slane %v2427, %v3119
        %v3121 = vsel %vm2628, %v3120, %v3116
        %v3122 = vlaneseq
        %v3123 = vshrl.u32 %v3122, 7
        %v3124 = vsub.s32 %v2630, %v3123
        %v3125 = vrot.slane %v2428, %v3124
        %v3126 = vsel %vm2635, %v3125, %v3121
        %v3127 = vlaneseq
        %v3128 = vshrl.u32 %v3127, 7
        %v3129 = vsub.s32 %v2637, %v3128
        %v3130 = vrot.slane %v2429, %v3129
        %v3131 = vsel %vm2642, %v3130, %v3126
        %v3132 = vlaneseq
        %v3133 = vshrl.u32 %v3132, 7
        %v3134 = vsub.s32 %v2644, %v3133
        %v3135 = vrot.slane %v2430, %v3134
        %v3136 = vsel %vm2649, %v3135, %v3131
        %v3137 = vlaneseq
        %v3138 = vshrl.u32 %v3137, 7
        %v3139 = vsub.s32 %v2651, %v3138
        %v3140 = vrot.slane %v2431, %v3139
        %v3141 = vsel %vm2656, %v3140, %v3136
        %v3142 = vlaneseq
        %v3143 = vshrl.u32 %v3142, 7
        %v3144 = vsub.s32 %v2658, %v3143
        %v3145 = vrot.slane %v2432, %v3144
        %v3146 = vsel %vm2663, %v3145, %v3141
        %v3147 = vlaneseq
        %v3148 = vshrl.u32 %v3147, 7
        %v3149 = vsub.s32 %v2665, %v3148
        %v3150 = vrot.slane %v2433, %v3149
        %v3151 = vsel %vm2670, %v3150, %v3146
        %v3152 = vlaneseq
        %v3153 = vshrl.u32 %v3152, 7
        %v3154 = vsub.s32 %v2672, %v3153
        %v3155 = vrot.slane %v2434, %v3154
        %v3156 = vsel %vm2677, %v3155, %v3151
        %v3157 = vlaneseq
        %v3158 = vshrl.u32 %v3157, 7
        %v3159 = vsub.s32 %v2679, %v3158
        %v3160 = vrot.slane %v2435, %v3159
        %v3161 = vsel %vm2684, %v3160, %v3156
        %v3162 = vlaneseq
        %v3163 = vshrl.u32 %v3162, 7
        %v3164 = vsub.s32 %v2686, %v3163
        %v3165 = vrot.slane %v2436, %v3164
        %v3166 = vsel %vm2691, %v3165, %v3161
        %v3167 = vlaneseq
        %v3168 = vshrl.u32 %v3167, 7
        %v3169 = vsub.s32 %v2583, %v3168
        %v3170 = vrot.slane %v2437, %v3169
        %v3171 = vlaneseq
        %v3172 = vshrl.u32 %v3171, 7
        %v3173 = vsub.s32 %v2588, %v3172
        %v3174 = vrot.slane %v2438, %v3173
        %v3175 = vsel %vm2593, %v3174, %v3170
        %v3176 = vlaneseq
        %v3177 = vshrl.u32 %v3176, 7
        %v3178 = vsub.s32 %v2595, %v3177
        %v3179 = vrot.slane %v2439, %v3178
        %v3180 = vsel %vm2600, %v3179, %v3175
        %v3181 = vlaneseq
        %v3182 = vshrl.u32 %v3181, 7
        %v3183 = vsub.s32 %v2602, %v3182
        %v3184 = vrot.slane %v2440, %v3183
        %v3185 = vsel %vm2607, %v3184, %v3180
        %v3186 = vlaneseq
        %v3187 = vshrl.u32 %v3186, 7
        %v3188 = vsub.s32 %v2609, %v3187
        %v3189 = vrot.slane %v2441, %v3188
        %v3190 = vsel %vm2614, %v3189, %v3185
        %v3191 = vlaneseq
        %v3192 = vshrl.u32 %v3191, 7
        %v3193 = vsub.s32 %v2616, %v3192
        %v3194 = vrot.slane %v2442, %v3193
        %v3195 = vsel %vm2621, %v3194, %v3190
        %v3196 = vlaneseq
        %v3197 = vshrl.u32 %v3196, 7
        %v3198 = vsub.s32 %v2623, %v3197
        %v3199 = vrot.slane %v2443, %v3198
        %v3200 = vsel %vm2628, %v3199, %v3195
        %v3201 = vlaneseq
        %v3202 = vshrl.u32 %v3201, 7
        %v3203 = vsub.s32 %v2630, %v3202
        %v3204 = vrot.slane %v2444, %v3203
        %v3205 = vsel %vm2635, %v3204, %v3200
        %v3206 = vlaneseq
        %v3207 = vshrl.u32 %v3206, 7
        %v3208 = vsub.s32 %v2637, %v3207
        %v3209 = vrot.slane %v2445, %v3208
        %v3210 = vsel %vm2642, %v3209, %v3205
        %v3211 = vlaneseq
        %v3212 = vshrl.u32 %v3211, 7
        %v3213 = vsub.s32 %v2644, %v3212
        %v3214 = vrot.slane %v2446, %v3213
        %v3215 = vsel %vm2649, %v3214, %v3210
        %v3216 = vlaneseq
        %v3217 = vshrl.u32 %v3216, 7
        %v3218 = vsub.s32 %v2651, %v3217
        %v3219 = vrot.slane %v2447, %v3218
        %v3220 = vsel %vm2656, %v3219, %v3215
        %v3221 = vlaneseq
        %v3222 = vshrl.u32 %v3221, 7
        %v3223 = vsub.s32 %v2658, %v3222
        %v3224 = vrot.slane %v2448, %v3223
        %v3225 = vsel %vm2663, %v3224, %v3220
        %v3226 = vlaneseq
        %v3227 = vshrl.u32 %v3226, 7
        %v3228 = vsub.s32 %v2665, %v3227
        %v3229 = vrot.slane %v2449, %v3228
        %v3230 = vsel %vm2670, %v3229, %v3225
        %v3231 = vlaneseq
        %v3232 = vshrl.u32 %v3231, 7
        %v3233 = vsub.s32 %v2672, %v3232
        %v3234 = vrot.slane %v2450, %v3233
        %v3235 = vsel %vm2677, %v3234, %v3230
        %v3236 = vlaneseq
        %v3237 = vshrl.u32 %v3236, 7
        %v3238 = vsub.s32 %v2679, %v3237
        %v3239 = vrot.slane %v2451, %v3238
        %v3240 = vsel %vm2684, %v3239, %v3235
        %v3241 = vlaneseq
        %v3242 = vshrl.u32 %v3241, 7
        %v3243 = vsub.s32 %v2686, %v3242
        %v3244 = vrot.slane %v2452, %v3243
        %v3245 = vsel %vm2691, %v3244, %v3240
        %vm3246 = vcmask 1041409
        %v3247 = vsel %vm3246, %v2771, %v2692
        %vm3248 = vcmask 1042434
        %v3249 = vsel %vm3248, %v2850, %v3247
        %vm3250 = vcmask 1043459
        %v3251 = vsel %vm3250, %v2929, %v3249
        %vm3252 = vcmask 1044484
        %v3253 = vsel %vm3252, %v3008, %v3251
        %vm3254 = vcmask 1045509
        %v3255 = vsel %vm3254, %v3087, %v3253
        %vm3256 = vcmask 1046534
        %v3257 = vsel %vm3256, %v3166, %v3255
        %vm3258 = vcmask 1047559
        %v3259 = vsel %vm3258, %v3245, %v3257
        %3261 = vmax.xlane.f32.xlu0 %v3259
        %v3262 = vpop.xlane.xlu0 %3261
        %v3263 = vmax.f32 %v2453, %v3262
        %v3264 = vsub.f32 %v2453, %v3263
        %v3265 = vmul.f32 %v3264, 1.442695
        %v3266 = vpow.pop %v3265
        %3268 = vset.pattern.permute.xlu0 0
        %3269 = vperm.xlu0 %3268, %v3263
        %v3270 = vpop.permute.xlu0 %3269
        %v3271 = vlaneseq
        %v3272 = vshrl.u32 %v3271, 7
        %v3273 = vsub.s32 0, %v3272
        %v3274 = vrot.slane %v3270, %v3273
        %v3275 = vlaneseq
        %v3276 = vshrl.u32 %v3275, 7
        %v3277 = vsub.s32 1, %v3276
        %v3278 = vrot.slane %v3270, %v3277
        %v3279 = vlaneseq
        %v3280 = vshrl.u32 %v3279, 7
        %v3281 = vsub.s32 2, %v3280
        %v3282 = vrot.slane %v3270, %v3281
        %v3283 = vlaneseq
        %v3284 = vshrl.u32 %v3283, 7
        %v3285 = vsub.s32 3, %v3284
        %v3286 = vrot.slane %v3270, %v3285
        %v3287 = vlaneseq
        %v3288 = vshrl.u32 %v3287, 7
        %v3289 = vsub.s32 4, %v3288
        %v3290 = vrot.slane %v3270, %v3289
        %v3291 = vlaneseq
        %v3292 = vshrl.u32 %v3291, 7
        %v3293 = vsub.s32 5, %v3292
        %v3294 = vrot.slane %v3270, %v3293
        %v3295 = vlaneseq
        %v3296 = vshrl.u32 %v3295, 7
        %v3297 = vsub.s32 6, %v3296
        %v3298 = vrot.slane %v3270, %v3297
        %v3299 = vlaneseq
        %v3300 = vshrl.u32 %v3299, 7
        %v3301 = vsub.s32 7, %v3300
        %v3302 = vrot.slane %v3270, %v3301
        %v3311 = vsub.f32 %v2325, %v3274
        %v3312 = vsub.f32 %v2326, %v3274
        %v3313 = vsub.f32 %v2327, %v3274
        %v3314 = vsub.f32 %v2328, %v3274
        %v3315 = vsub.f32 %v2329, %v3274
        %v3316 = vsub.f32 %v2330, %v3274
        %v3317 = vsub.f32 %v2331, %v3274
        %v3318 = vsub.f32 %v2332, %v3274
        %v3319 = vsub.f32 %v2333, %v3274
        %v3320 = vsub.f32 %v2334, %v3274
        %v3321 = vsub.f32 %v2335, %v3274
        %v3322 = vsub.f32 %v2336, %v3274
        %v3323 = vsub.f32 %v2337, %v3274
        %v3324 = vsub.f32 %v2338, %v3274
        %v3325 = vsub.f32 %v2339, %v3274
        %v3326 = vsub.f32 %v2340, %v3274
        %v3327 = vsub.f32 %v2341, %v3278
        %v3328 = vsub.f32 %v2342, %v3278
        %v3329 = vsub.f32 %v2343, %v3278
        %v3330 = vsub.f32 %v2344, %v3278
        %v3331 = vsub.f32 %v2345, %v3278
        %v3332 = vsub.f32 %v2346, %v3278
        %v3333 = vsub.f32 %v2347, %v3278
        %v3334 = vsub.f32 %v2348, %v3278
        %v3335 = vsub.f32 %v2349, %v3278
        %v3336 = vsub.f32 %v2350, %v3278
        %v3337 = vsub.f32 %v2351, %v3278
        %v3338 = vsub.f32 %v2352, %v3278
        %v3339 = vsub.f32 %v2353, %v3278
        %v3340 = vsub.f32 %v2354, %v3278
        %v3341 = vsub.f32 %v2355, %v3278
        %v3342 = vsub.f32 %v2356, %v3278
        %v3343 = vsub.f32 %v2357, %v3282
        %v3344 = vsub.f32 %v2358, %v3282
        %v3345 = vsub.f32 %v2359, %v3282
        %v3346 = vsub.f32 %v2360, %v3282
        %v3347 = vsub.f32 %v2361, %v3282
        %v3348 = vsub.f32 %v2362, %v3282
        %v3349 = vsub.f32 %v2363, %v3282
        %v3350 = vsub.f32 %v2364, %v3282
        %v3351 = vsub.f32 %v2365, %v3282
        %v3352 = vsub.f32 %v2366, %v3282
        %v3353 = vsub.f32 %v2367, %v3282
        %v3354 = vsub.f32 %v2368, %v3282
        %v3355 = vsub.f32 %v2369, %v3282
        %v3356 = vsub.f32 %v2370, %v3282
        %v3357 = vsub.f32 %v2371, %v3282
        %v3358 = vsub.f32 %v2372, %v3282
        %v3359 = vsub.f32 %v2373, %v3286
        %v3360 = vsub.f32 %v2374, %v3286
        %v3361 = vsub.f32 %v2375, %v3286
        %v3362 = vsub.f32 %v2376, %v3286
        %v3363 = vsub.f32 %v2377, %v3286
        %v3364 = vsub.f32 %v2378, %v3286
        %v3365 = vsub.f32 %v2379, %v3286
        %v3366 = vsub.f32 %v2380, %v3286
        %v3367 = vsub.f32 %v2381, %v3286
        %v3368 = vsub.f32 %v2382, %v3286
        %v3369 = vsub.f32 %v2383, %v3286
        %v3370 = vsub.f32 %v2384, %v3286
        %v3371 = vsub.f32 %v2385, %v3286
        %v3372 = vsub.f32 %v2386, %v3286
        %v3373 = vsub.f32 %v2387, %v3286
        %v3374 = vsub.f32 %v2388, %v3286
        %v3375 = vsub.f32 %v2389, %v3290
        %v3376 = vsub.f32 %v2390, %v3290
        %v3377 = vsub.f32 %v2391, %v3290
        %v3378 = vsub.f32 %v2392, %v3290
        %v3379 = vsub.f32 %v2393, %v3290
        %v3380 = vsub.f32 %v2394, %v3290
        %v3381 = vsub.f32 %v2395, %v3290
        %v3382 = vsub.f32 %v2396, %v3290
        %v3383 = vsub.f32 %v2397, %v3290
        %v3384 = vsub.f32 %v2398, %v3290
        %v3385 = vsub.f32 %v2399, %v3290
        %v3386 = vsub.f32 %v2400, %v3290
        %v3387 = vsub.f32 %v2401, %v3290
        %v3388 = vsub.f32 %v2402, %v3290
        %v3389 = vsub.f32 %v2403, %v3290
        %v3390 = vsub.f32 %v2404, %v3290
        %v3391 = vsub.f32 %v2405, %v3294
        %v3392 = vsub.f32 %v2406, %v3294
        %v3393 = vsub.f32 %v2407, %v3294
        %v3394 = vsub.f32 %v2408, %v3294
        %v3395 = vsub.f32 %v2409, %v3294
        %v3396 = vsub.f32 %v2410, %v3294
        %v3397 = vsub.f32 %v2411, %v3294
        %v3398 = vsub.f32 %v2412, %v3294
        %v3399 = vsub.f32 %v2413, %v3294
        %v3400 = vsub.f32 %v2414, %v3294
        %v3401 = vsub.f32 %v2415, %v3294
        %v3402 = vsub.f32 %v2416, %v3294
        %v3403 = vsub.f32 %v2417, %v3294
        %v3404 = vsub.f32 %v2418, %v3294
        %v3405 = vsub.f32 %v2419, %v3294
        %v3406 = vsub.f32 %v2420, %v3294
        %v3407 = vsub.f32 %v2421, %v3298
        %v3408 = vsub.f32 %v2422, %v3298
        %v3409 = vsub.f32 %v2423, %v3298
        %v3410 = vsub.f32 %v2424, %v3298
        %v3411 = vsub.f32 %v2425, %v3298
        %v3412 = vsub.f32 %v2426, %v3298
        %v3413 = vsub.f32 %v2427, %v3298
        %v3414 = vsub.f32 %v2428, %v3298
        %v3415 = vsub.f32 %v2429, %v3298
        %v3416 = vsub.f32 %v2430, %v3298
        %v3417 = vsub.f32 %v2431, %v3298
        %v3418 = vsub.f32 %v2432, %v3298
        %v3419 = vsub.f32 %v2433, %v3298
        %v3420 = vsub.f32 %v2434, %v3298
        %v3421 = vsub.f32 %v2435, %v3298
        %v3422 = vsub.f32 %v2436, %v3298
        %v3423 = vsub.f32 %v2437, %v3302
        %v3424 = vsub.f32 %v2438, %v3302
        %v3425 = vsub.f32 %v2439, %v3302
        %v3426 = vsub.f32 %v2440, %v3302
        %v3427 = vsub.f32 %v2441, %v3302
        %v3428 = vsub.f32 %v2442, %v3302
        %v3429 = vsub.f32 %v2443, %v3302
        %v3430 = vsub.f32 %v2444, %v3302
        %v3431 = vsub.f32 %v2445, %v3302
        %v3432 = vsub.f32 %v2446, %v3302
        %v3433 = vsub.f32 %v2447, %v3302
        %v3434 = vsub.f32 %v2448, %v3302
        %v3435 = vsub.f32 %v2449, %v3302
        %v3436 = vsub.f32 %v2450, %v3302
        %v3437 = vsub.f32 %v2451, %v3302
        %v3438 = vsub.f32 %v2452, %v3302
        %v3439 = vmul.f32 %v3311, 1.442695
        %v3440 = vpow.pop %v3439
        %v3441 = vmul.f32 %v3312, 1.442695
        %v3442 = vpow.pop %v3441
        %v3443 = vmul.f32 %v3313, 1.442695
        %v3444 = vpow.pop %v3443
        %v3445 = vmul.f32 %v3314, 1.442695
        %v3446 = vpow.pop %v3445
        %v3447 = vmul.f32 %v3315, 1.442695
        %v3448 = vpow.pop %v3447
        %v3449 = vmul.f32 %v3316, 1.442695
        %v3450 = vpow.pop %v3449
        %v3451 = vmul.f32 %v3317, 1.442695
        %v3452 = vpow.pop %v3451
        %v3453 = vmul.f32 %v3318, 1.442695
        %v3454 = vpow.pop %v3453
        %v3455 = vmul.f32 %v3319, 1.442695
        %v3456 = vpow.pop %v3455
        %v3457 = vmul.f32 %v3320, 1.442695
        %v3458 = vpow.pop %v3457
        %v3459 = vmul.f32 %v3321, 1.442695
        %v3460 = vpow.pop %v3459
        %v3461 = vmul.f32 %v3322, 1.442695
        %v3462 = vpow.pop %v3461
        %v3463 = vmul.f32 %v3323, 1.442695
        %v3464 = vpow.pop %v3463
        %v3465 = vmul.f32 %v3324, 1.442695
        %v3466 = vpow.pop %v3465
        %v3467 = vmul.f32 %v3325, 1.442695
        %v3468 = vpow.pop %v3467
        %v3469 = vmul.f32 %v3326, 1.442695
        %v3470 = vpow.pop %v3469
        %v3471 = vmul.f32 %v3327, 1.442695
        %v3472 = vpow.pop %v3471
        %v3473 = vmul.f32 %v3328, 1.442695
        %v3474 = vpow.pop %v3473
        %v3475 = vmul.f32 %v3329, 1.442695
        %v3476 = vpow.pop %v3475
        %v3477 = vmul.f32 %v3330, 1.442695
        %v3478 = vpow.pop %v3477
        %v3479 = vmul.f32 %v3331, 1.442695
        %v3480 = vpow.pop %v3479
        %v3481 = vmul.f32 %v3332, 1.442695
        %v3482 = vpow.pop %v3481
        %v3483 = vmul.f32 %v3333, 1.442695
        %v3484 = vpow.pop %v3483
        %v3485 = vmul.f32 %v3334, 1.442695
        %v3486 = vpow.pop %v3485
        %v3487 = vmul.f32 %v3335, 1.442695
        %v3488 = vpow.pop %v3487
        %v3489 = vmul.f32 %v3336, 1.442695
        %v3490 = vpow.pop %v3489
        %v3491 = vmul.f32 %v3337, 1.442695
        %v3492 = vpow.pop %v3491
        %v3493 = vmul.f32 %v3338, 1.442695
        %v3494 = vpow.pop %v3493
        %v3495 = vmul.f32 %v3339, 1.442695
        %v3496 = vpow.pop %v3495
        %v3497 = vmul.f32 %v3340, 1.442695
        %v3498 = vpow.pop %v3497
        %v3499 = vmul.f32 %v3341, 1.442695
        %v3500 = vpow.pop %v3499
        %v3501 = vmul.f32 %v3342, 1.442695
        %v3502 = vpow.pop %v3501
        %v3503 = vmul.f32 %v3343, 1.442695
        %v3504 = vpow.pop %v3503
        %v3505 = vmul.f32 %v3344, 1.442695
        %v3506 = vpow.pop %v3505
        %v3507 = vmul.f32 %v3345, 1.442695
        %v3508 = vpow.pop %v3507
        %v3509 = vmul.f32 %v3346, 1.442695
        %v3510 = vpow.pop %v3509
        %v3511 = vmul.f32 %v3347, 1.442695
        %v3512 = vpow.pop %v3511
        %v3513 = vmul.f32 %v3348, 1.442695
        %v3514 = vpow.pop %v3513
        %v3515 = vmul.f32 %v3349, 1.442695
        %v3516 = vpow.pop %v3515
        %v3517 = vmul.f32 %v3350, 1.442695
        %v3518 = vpow.pop %v3517
        %v3519 = vmul.f32 %v3351, 1.442695
        %v3520 = vpow.pop %v3519
        %v3521 = vmul.f32 %v3352, 1.442695
        %v3522 = vpow.pop %v3521
        %v3523 = vmul.f32 %v3353, 1.442695
        %v3524 = vpow.pop %v3523
        %v3525 = vmul.f32 %v3354, 1.442695
        %v3526 = vpow.pop %v3525
        %v3527 = vmul.f32 %v3355, 1.442695
        %v3528 = vpow.pop %v3527
        %v3529 = vmul.f32 %v3356, 1.442695
        %v3530 = vpow.pop %v3529
        %v3531 = vmul.f32 %v3357, 1.442695
        %v3532 = vpow.pop %v3531
        %v3533 = vmul.f32 %v3358, 1.442695
        %v3534 = vpow.pop %v3533
        %v3535 = vmul.f32 %v3359, 1.442695
        %v3536 = vpow.pop %v3535
        %v3537 = vmul.f32 %v3360, 1.442695
        %v3538 = vpow.pop %v3537
        %v3539 = vmul.f32 %v3361, 1.442695
        %v3540 = vpow.pop %v3539
        %v3541 = vmul.f32 %v3362, 1.442695
        %v3542 = vpow.pop %v3541
        %v3543 = vmul.f32 %v3363, 1.442695
        %v3544 = vpow.pop %v3543
        %v3545 = vmul.f32 %v3364, 1.442695
        %v3546 = vpow.pop %v3545
        %v3547 = vmul.f32 %v3365, 1.442695
        %v3548 = vpow.pop %v3547
        %v3549 = vmul.f32 %v3366, 1.442695
        %v3550 = vpow.pop %v3549
        %v3551 = vmul.f32 %v3367, 1.442695
        %v3552 = vpow.pop %v3551
        %v3553 = vmul.f32 %v3368, 1.442695
        %v3554 = vpow.pop %v3553
        %v3555 = vmul.f32 %v3369, 1.442695
        %v3556 = vpow.pop %v3555
        %v3557 = vmul.f32 %v3370, 1.442695
        %v3558 = vpow.pop %v3557
        %v3559 = vmul.f32 %v3371, 1.442695
        %v3560 = vpow.pop %v3559
        %v3561 = vmul.f32 %v3372, 1.442695
        %v3562 = vpow.pop %v3561
        %v3563 = vmul.f32 %v3373, 1.442695
        %v3564 = vpow.pop %v3563
        %v3565 = vmul.f32 %v3374, 1.442695
        %v3566 = vpow.pop %v3565
        %v3567 = vmul.f32 %v3375, 1.442695
        %v3568 = vpow.pop %v3567
        %v3569 = vmul.f32 %v3376, 1.442695
        %v3570 = vpow.pop %v3569
        %v3571 = vmul.f32 %v3377, 1.442695
        %v3572 = vpow.pop %v3571
        %v3573 = vmul.f32 %v3378, 1.442695
        %v3574 = vpow.pop %v3573
        %v3575 = vmul.f32 %v3379, 1.442695
        %v3576 = vpow.pop %v3575
        %v3577 = vmul.f32 %v3380, 1.442695
        %v3578 = vpow.pop %v3577
        %v3579 = vmul.f32 %v3381, 1.442695
        %v3580 = vpow.pop %v3579
        %v3581 = vmul.f32 %v3382, 1.442695
        %v3582 = vpow.pop %v3581
        %v3583 = vmul.f32 %v3383, 1.442695
        %v3584 = vpow.pop %v3583
        %v3585 = vmul.f32 %v3384, 1.442695
        %v3586 = vpow.pop %v3585
        %v3587 = vmul.f32 %v3385, 1.442695
        %v3588 = vpow.pop %v3587
        %v3589 = vmul.f32 %v3386, 1.442695
        %v3590 = vpow.pop %v3589
        %v3591 = vmul.f32 %v3387, 1.442695
        %v3592 = vpow.pop %v3591
        %v3593 = vmul.f32 %v3388, 1.442695
        %v3594 = vpow.pop %v3593
        %v3595 = vmul.f32 %v3389, 1.442695
        %v3596 = vpow.pop %v3595
        %v3597 = vmul.f32 %v3390, 1.442695
        %v3598 = vpow.pop %v3597
        %v3599 = vmul.f32 %v3391, 1.442695
        %v3600 = vpow.pop %v3599
        %v3601 = vmul.f32 %v3392, 1.442695
        %v3602 = vpow.pop %v3601
        %v3603 = vmul.f32 %v3393, 1.442695
        %v3604 = vpow.pop %v3603
        %v3605 = vmul.f32 %v3394, 1.442695
        %v3606 = vpow.pop %v3605
        %v3607 = vmul.f32 %v3395, 1.442695
        %v3608 = vpow.pop %v3607
        %v3609 = vmul.f32 %v3396, 1.442695
        %v3610 = vpow.pop %v3609
        %v3611 = vmul.f32 %v3397, 1.442695
        %v3612 = vpow.pop %v3611
        %v3613 = vmul.f32 %v3398, 1.442695
        %v3614 = vpow.pop %v3613
        %v3615 = vmul.f32 %v3399, 1.442695
        %v3616 = vpow.pop %v3615
        %v3617 = vmul.f32 %v3400, 1.442695
        %v3618 = vpow.pop %v3617
        %v3619 = vmul.f32 %v3401, 1.442695
        %v3620 = vpow.pop %v3619
        %v3621 = vmul.f32 %v3402, 1.442695
        %v3622 = vpow.pop %v3621
        %v3623 = vmul.f32 %v3403, 1.442695
        %v3624 = vpow.pop %v3623
        %v3625 = vmul.f32 %v3404, 1.442695
        %v3626 = vpow.pop %v3625
        %v3627 = vmul.f32 %v3405, 1.442695
        %v3628 = vpow.pop %v3627
        %v3629 = vmul.f32 %v3406, 1.442695
        %v3630 = vpow.pop %v3629
        %v3631 = vmul.f32 %v3407, 1.442695
        %v3632 = vpow.pop %v3631
        %v3633 = vmul.f32 %v3408, 1.442695
        %v3634 = vpow.pop %v3633
        %v3635 = vmul.f32 %v3409, 1.442695
        %v3636 = vpow.pop %v3635
        %v3637 = vmul.f32 %v3410, 1.442695
        %v3638 = vpow.pop %v3637
        %v3639 = vmul.f32 %v3411, 1.442695
        %v3640 = vpow.pop %v3639
        %v3641 = vmul.f32 %v3412, 1.442695
        %v3642 = vpow.pop %v3641
        %v3643 = vmul.f32 %v3413, 1.442695
        %v3644 = vpow.pop %v3643
        %v3645 = vmul.f32 %v3414, 1.442695
        %v3646 = vpow.pop %v3645
        %v3647 = vmul.f32 %v3415, 1.442695
        %v3648 = vpow.pop %v3647
        %v3649 = vmul.f32 %v3416, 1.442695
        %v3650 = vpow.pop %v3649
        %v3651 = vmul.f32 %v3417, 1.442695
        %v3652 = vpow.pop %v3651
        %v3653 = vmul.f32 %v3418, 1.442695
        %v3654 = vpow.pop %v3653
        %v3655 = vmul.f32 %v3419, 1.442695
        %v3656 = vpow.pop %v3655
        %v3657 = vmul.f32 %v3420, 1.442695
        %v3658 = vpow.pop %v3657
        %v3659 = vmul.f32 %v3421, 1.442695
        %v3660 = vpow.pop %v3659
        %v3661 = vmul.f32 %v3422, 1.442695
        %v3662 = vpow.pop %v3661
        %v3663 = vmul.f32 %v3423, 1.442695
        %v3664 = vpow.pop %v3663
        %v3665 = vmul.f32 %v3424, 1.442695
        %v3666 = vpow.pop %v3665
        %v3667 = vmul.f32 %v3425, 1.442695
        %v3668 = vpow.pop %v3667
        %v3669 = vmul.f32 %v3426, 1.442695
        %v3670 = vpow.pop %v3669
        %v3671 = vmul.f32 %v3427, 1.442695
        %v3672 = vpow.pop %v3671
        %v3673 = vmul.f32 %v3428, 1.442695
        %v3674 = vpow.pop %v3673
        %v3675 = vmul.f32 %v3429, 1.442695
        %v3676 = vpow.pop %v3675
        %v3677 = vmul.f32 %v3430, 1.442695
        %v3678 = vpow.pop %v3677
        %v3679 = vmul.f32 %v3431, 1.442695
        %v3680 = vpow.pop %v3679
        %v3681 = vmul.f32 %v3432, 1.442695
        %v3682 = vpow.pop %v3681
        %v3683 = vmul.f32 %v3433, 1.442695
        %v3684 = vpow.pop %v3683
        %v3685 = vmul.f32 %v3434, 1.442695
        %v3686 = vpow.pop %v3685
        %v3687 = vmul.f32 %v3435, 1.442695
        %v3688 = vpow.pop %v3687
        %v3689 = vmul.f32 %v3436, 1.442695
        %v3690 = vpow.pop %v3689
        %v3691 = vmul.f32 %v3437, 1.442695
        %v3692 = vpow.pop %v3691
        %v3693 = vmul.f32 %v3438, 1.442695
        %v3694 = vpow.pop %v3693
        %v3695 = vld [vmem:[#allocation3] sm:$0xff]
        %v3696 = vmul.f32 %v3266, %v3695
        %3825 = vset.pattern.permute.xlu0 0
        %3826 = vperm.xlu0 %3825, %v3440
        %v3827 = vpop.permute.xlu0 %3826
        %3828 = vset.pattern.permute.xlu0 0
        %3829 = vperm.xlu0 %3828, %v3442
        %v3830 = vpop.permute.xlu0 %3829
        %3831 = vset.pattern.permute.xlu0 0
        %3832 = vperm.xlu0 %3831, %v3444
        %v3833 = vpop.permute.xlu0 %3832
        %3834 = vset.pattern.permute.xlu0 0
        %3835 = vperm.xlu0 %3834, %v3446
        %v3836 = vpop.permute.xlu0 %3835
        %3837 = vset.pattern.permute.xlu0 0
        %3838 = vperm.xlu0 %3837, %v3448
        %v3839 = vpop.permute.xlu0 %3838
        %3840 = vset.pattern.permute.xlu0 0
        %3841 = vperm.xlu0 %3840, %v3450
        %v3842 = vpop.permute.xlu0 %3841
        %3843 = vset.pattern.permute.xlu0 0
        %3844 = vperm.xlu0 %3843, %v3452
        %v3845 = vpop.permute.xlu0 %3844
        %3846 = vset.pattern.permute.xlu0 0
        %3847 = vperm.xlu0 %3846, %v3454
        %v3848 = vpop.permute.xlu0 %3847
        %3849 = vset.pattern.permute.xlu0 0
        %3850 = vperm.xlu0 %3849, %v3456
        %v3851 = vpop.permute.xlu0 %3850
        %3852 = vset.pattern.permute.xlu0 0
        %3853 = vperm.xlu0 %3852, %v3458
        %v3854 = vpop.permute.xlu0 %3853
        %3855 = vset.pattern.permute.xlu0 0
        %3856 = vperm.xlu0 %3855, %v3460
        %v3857 = vpop.permute.xlu0 %3856
        %3858 = vset.pattern.permute.xlu0 0
        %3859 = vperm.xlu0 %3858, %v3462
        %v3860 = vpop.permute.xlu0 %3859
        %3861 = vset.pattern.permute.xlu0 0
        %3862 = vperm.xlu0 %3861, %v3464
        %v3863 = vpop.permute.xlu0 %3862
        %3864 = vset.pattern.permute.xlu0 0
        %3865 = vperm.xlu0 %3864, %v3466
        %v3866 = vpop.permute.xlu0 %3865
        %3867 = vset.pattern.permute.xlu0 0
        %3868 = vperm.xlu0 %3867, %v3468
        %v3869 = vpop.permute.xlu0 %3868
        %3870 = vset.pattern.permute.xlu0 0
        %3871 = vperm.xlu0 %3870, %v3470
        %v3872 = vpop.permute.xlu0 %3871
        %3873 = vset.pattern.permute.xlu0 0
        %3874 = vperm.xlu0 %3873, %v3472
        %v3875 = vpop.permute.xlu0 %3874
        %3876 = vset.pattern.permute.xlu0 0
        %3877 = vperm.xlu0 %3876, %v3474
        %v3878 = vpop.permute.xlu0 %3877
        %3879 = vset.pattern.permute.xlu0 0
        %3880 = vperm.xlu0 %3879, %v3476
        %v3881 = vpop.permute.xlu0 %3880
        %3882 = vset.pattern.permute.xlu0 0
        %3883 = vperm.xlu0 %3882, %v3478
        %v3884 = vpop.permute.xlu0 %3883
        %3885 = vset.pattern.permute.xlu0 0
        %3886 = vperm.xlu0 %3885, %v3480
        %v3887 = vpop.permute.xlu0 %3886
        %3888 = vset.pattern.permute.xlu0 0
        %3889 = vperm.xlu0 %3888, %v3482
        %v3890 = vpop.permute.xlu0 %3889
        %3891 = vset.pattern.permute.xlu0 0
        %3892 = vperm.xlu0 %3891, %v3484
        %v3893 = vpop.permute.xlu0 %3892
        %3894 = vset.pattern.permute.xlu0 0
        %3895 = vperm.xlu0 %3894, %v3486
        %v3896 = vpop.permute.xlu0 %3895
        %3897 = vset.pattern.permute.xlu0 0
        %3898 = vperm.xlu0 %3897, %v3488
        %v3899 = vpop.permute.xlu0 %3898
        %3900 = vset.pattern.permute.xlu0 0
        %3901 = vperm.xlu0 %3900, %v3490
        %v3902 = vpop.permute.xlu0 %3901
        %3903 = vset.pattern.permute.xlu0 0
        %3904 = vperm.xlu0 %3903, %v3492
        %v3905 = vpop.permute.xlu0 %3904
        %3906 = vset.pattern.permute.xlu0 0
        %3907 = vperm.xlu0 %3906, %v3494
        %v3908 = vpop.permute.xlu0 %3907
        %3909 = vset.pattern.permute.xlu0 0
        %3910 = vperm.xlu0 %3909, %v3496
        %v3911 = vpop.permute.xlu0 %3910
        %3912 = vset.pattern.permute.xlu0 0
        %3913 = vperm.xlu0 %3912, %v3498
        %v3914 = vpop.permute.xlu0 %3913
        %3915 = vset.pattern.permute.xlu0 0
        %3916 = vperm.xlu0 %3915, %v3500
        %v3917 = vpop.permute.xlu0 %3916
        %3918 = vset.pattern.permute.xlu0 0
        %3919 = vperm.xlu0 %3918, %v3502
        %v3920 = vpop.permute.xlu0 %3919
        %3921 = vset.pattern.permute.xlu0 0
        %3922 = vperm.xlu0 %3921, %v3504
        %v3923 = vpop.permute.xlu0 %3922
        %3924 = vset.pattern.permute.xlu0 0
        %3925 = vperm.xlu0 %3924, %v3506
        %v3926 = vpop.permute.xlu0 %3925
        %3927 = vset.pattern.permute.xlu0 0
        %3928 = vperm.xlu0 %3927, %v3508
        %v3929 = vpop.permute.xlu0 %3928
        %3930 = vset.pattern.permute.xlu0 0
        %3931 = vperm.xlu0 %3930, %v3510
        %v3932 = vpop.permute.xlu0 %3931
        %3933 = vset.pattern.permute.xlu0 0
        %3934 = vperm.xlu0 %3933, %v3512
        %v3935 = vpop.permute.xlu0 %3934
        %3936 = vset.pattern.permute.xlu0 0
        %3937 = vperm.xlu0 %3936, %v3514
        %v3938 = vpop.permute.xlu0 %3937
        %3939 = vset.pattern.permute.xlu0 0
        %3940 = vperm.xlu0 %3939, %v3516
        %v3941 = vpop.permute.xlu0 %3940
        %3942 = vset.pattern.permute.xlu0 0
        %3943 = vperm.xlu0 %3942, %v3518
        %v3944 = vpop.permute.xlu0 %3943
        %3945 = vset.pattern.permute.xlu0 0
        %3946 = vperm.xlu0 %3945, %v3520
        %v3947 = vpop.permute.xlu0 %3946
        %3948 = vset.pattern.permute.xlu0 0
        %3949 = vperm.xlu0 %3948, %v3522
        %v3950 = vpop.permute.xlu0 %3949
        %3951 = vset.pattern.permute.xlu0 0
        %3952 = vperm.xlu0 %3951, %v3524
        %v3953 = vpop.permute.xlu0 %3952
        %3954 = vset.pattern.permute.xlu0 0
        %3955 = vperm.xlu0 %3954, %v3526
        %v3956 = vpop.permute.xlu0 %3955
        %3957 = vset.pattern.permute.xlu0 0
        %3958 = vperm.xlu0 %3957, %v3528
        %v3959 = vpop.permute.xlu0 %3958
        %3960 = vset.pattern.permute.xlu0 0
        %3961 = vperm.xlu0 %3960, %v3530
        %v3962 = vpop.permute.xlu0 %3961
        %3963 = vset.pattern.permute.xlu0 0
        %3964 = vperm.xlu0 %3963, %v3532
        %v3965 = vpop.permute.xlu0 %3964
        %3966 = vset.pattern.permute.xlu0 0
        %3967 = vperm.xlu0 %3966, %v3534
        %v3968 = vpop.permute.xlu0 %3967
        %3969 = vset.pattern.permute.xlu0 0
        %3970 = vperm.xlu0 %3969, %v3536
        %v3971 = vpop.permute.xlu0 %3970
        %3972 = vset.pattern.permute.xlu0 0
        %3973 = vperm.xlu0 %3972, %v3538
        %v3974 = vpop.permute.xlu0 %3973
        %3975 = vset.pattern.permute.xlu0 0
        %3976 = vperm.xlu0 %3975, %v3540
        %v3977 = vpop.permute.xlu0 %3976
        %3978 = vset.pattern.permute.xlu0 0
        %3979 = vperm.xlu0 %3978, %v3542
        %v3980 = vpop.permute.xlu0 %3979
        %3981 = vset.pattern.permute.xlu0 0
        %3982 = vperm.xlu0 %3981, %v3544
        %v3983 = vpop.permute.xlu0 %3982
        %3984 = vset.pattern.permute.xlu0 0
        %3985 = vperm.xlu0 %3984, %v3546
        %v3986 = vpop.permute.xlu0 %3985
        %3987 = vset.pattern.permute.xlu0 0
        %3988 = vperm.xlu0 %3987, %v3548
        %v3989 = vpop.permute.xlu0 %3988
        %3990 = vset.pattern.permute.xlu0 0
        %3991 = vperm.xlu0 %3990, %v3550
        %v3992 = vpop.permute.xlu0 %3991
        %3993 = vset.pattern.permute.xlu0 0
        %3994 = vperm.xlu0 %3993, %v3552
        %v3995 = vpop.permute.xlu0 %3994
        %3996 = vset.pattern.permute.xlu0 0
        %3997 = vperm.xlu0 %3996, %v3554
        %v3998 = vpop.permute.xlu0 %3997
        %3999 = vset.pattern.permute.xlu0 0
        %4000 = vperm.xlu0 %3999, %v3556
        %v4001 = vpop.permute.xlu0 %4000
        %4002 = vset.pattern.permute.xlu0 0
        %4003 = vperm.xlu0 %4002, %v3558
        %v4004 = vpop.permute.xlu0 %4003
        %4005 = vset.pattern.permute.xlu0 0
        %4006 = vperm.xlu0 %4005, %v3560
        %v4007 = vpop.permute.xlu0 %4006
        %4008 = vset.pattern.permute.xlu0 0
        %4009 = vperm.xlu0 %4008, %v3562
        %v4010 = vpop.permute.xlu0 %4009
        %4011 = vset.pattern.permute.xlu0 0
        %4012 = vperm.xlu0 %4011, %v3564
        %v4013 = vpop.permute.xlu0 %4012
        %4014 = vset.pattern.permute.xlu0 0
        %4015 = vperm.xlu0 %4014, %v3566
        %v4016 = vpop.permute.xlu0 %4015
        %4017 = vset.pattern.permute.xlu0 0
        %4018 = vperm.xlu0 %4017, %v3568
        %v4019 = vpop.permute.xlu0 %4018
        %4020 = vset.pattern.permute.xlu0 0
        %4021 = vperm.xlu0 %4020, %v3570
        %v4022 = vpop.permute.xlu0 %4021
        %4023 = vset.pattern.permute.xlu0 0
        %4024 = vperm.xlu0 %4023, %v3572
        %v4025 = vpop.permute.xlu0 %4024
        %4026 = vset.pattern.permute.xlu0 0
        %4027 = vperm.xlu0 %4026, %v3574
        %v4028 = vpop.permute.xlu0 %4027
        %4029 = vset.pattern.permute.xlu0 0
        %4030 = vperm.xlu0 %4029, %v3576
        %v4031 = vpop.permute.xlu0 %4030
        %4032 = vset.pattern.permute.xlu0 0
        %4033 = vperm.xlu0 %4032, %v3578
        %v4034 = vpop.permute.xlu0 %4033
        %4035 = vset.pattern.permute.xlu0 0
        %4036 = vperm.xlu0 %4035, %v3580
        %v4037 = vpop.permute.xlu0 %4036
        %4038 = vset.pattern.permute.xlu0 0
        %4039 = vperm.xlu0 %4038, %v3582
        %v4040 = vpop.permute.xlu0 %4039
        %4041 = vset.pattern.permute.xlu0 0
        %4042 = vperm.xlu0 %4041, %v3584
        %v4043 = vpop.permute.xlu0 %4042
        %4044 = vset.pattern.permute.xlu0 0
        %4045 = vperm.xlu0 %4044, %v3586
        %v4046 = vpop.permute.xlu0 %4045
        %4047 = vset.pattern.permute.xlu0 0
        %4048 = vperm.xlu0 %4047, %v3588
        %v4049 = vpop.permute.xlu0 %4048
        %4050 = vset.pattern.permute.xlu0 0
        %4051 = vperm.xlu0 %4050, %v3590
        %v4052 = vpop.permute.xlu0 %4051
        %4053 = vset.pattern.permute.xlu0 0
        %4054 = vperm.xlu0 %4053, %v3592
        %v4055 = vpop.permute.xlu0 %4054
        %4056 = vset.pattern.permute.xlu0 0
        %4057 = vperm.xlu0 %4056, %v3594
        %v4058 = vpop.permute.xlu0 %4057
        %4059 = vset.pattern.permute.xlu0 0
        %4060 = vperm.xlu0 %4059, %v3596
        %v4061 = vpop.permute.xlu0 %4060
        %4062 = vset.pattern.permute.xlu0 0
        %4063 = vperm.xlu0 %4062, %v3598
        %v4064 = vpop.permute.xlu0 %4063
        %4065 = vset.pattern.permute.xlu0 0
        %4066 = vperm.xlu0 %4065, %v3600
        %v4067 = vpop.permute.xlu0 %4066
        %4068 = vset.pattern.permute.xlu0 0
        %4069 = vperm.xlu0 %4068, %v3602
        %v4070 = vpop.permute.xlu0 %4069
        %4071 = vset.pattern.permute.xlu0 0
        %4072 = vperm.xlu0 %4071, %v3604
        %v4073 = vpop.permute.xlu0 %4072
        %4074 = vset.pattern.permute.xlu0 0
        %4075 = vperm.xlu0 %4074, %v3606
        %v4076 = vpop.permute.xlu0 %4075
        %4077 = vset.pattern.permute.xlu0 0
        %4078 = vperm.xlu0 %4077, %v3608
        %v4079 = vpop.permute.xlu0 %4078
        %4080 = vset.pattern.permute.xlu0 0
        %4081 = vperm.xlu0 %4080, %v3610
        %v4082 = vpop.permute.xlu0 %4081
        %4083 = vset.pattern.permute.xlu0 0
        %4084 = vperm.xlu0 %4083, %v3612
        %v4085 = vpop.permute.xlu0 %4084
        %4086 = vset.pattern.permute.xlu0 0
        %4087 = vperm.xlu0 %4086, %v3614
        %v4088 = vpop.permute.xlu0 %4087
        %4089 = vset.pattern.permute.xlu0 0
        %4090 = vperm.xlu0 %4089, %v3616
        %v4091 = vpop.permute.xlu0 %4090
        %4092 = vset.pattern.permute.xlu0 0
        %4093 = vperm.xlu0 %4092, %v3618
        %v4094 = vpop.permute.xlu0 %4093
        %4095 = vset.pattern.permute.xlu0 0
        %4096 = vperm.xlu0 %4095, %v3620
        %v4097 = vpop.permute.xlu0 %4096
        %4098 = vset.pattern.permute.xlu0 0
        %4099 = vperm.xlu0 %4098, %v3622
        %v4100 = vpop.permute.xlu0 %4099
        %4101 = vset.pattern.permute.xlu0 0
        %4102 = vperm.xlu0 %4101, %v3624
        %v4103 = vpop.permute.xlu0 %4102
        %4104 = vset.pattern.permute.xlu0 0
        %4105 = vperm.xlu0 %4104, %v3626
        %v4106 = vpop.permute.xlu0 %4105
        %4107 = vset.pattern.permute.xlu0 0
        %4108 = vperm.xlu0 %4107, %v3628
        %v4109 = vpop.permute.xlu0 %4108
        %4110 = vset.pattern.permute.xlu0 0
        %4111 = vperm.xlu0 %4110, %v3630
        %v4112 = vpop.permute.xlu0 %4111
        %4113 = vset.pattern.permute.xlu0 0
        %4114 = vperm.xlu0 %4113, %v3632
        %v4115 = vpop.permute.xlu0 %4114
        %4116 = vset.pattern.permute.xlu0 0
        %4117 = vperm.xlu0 %4116, %v3634
        %v4118 = vpop.permute.xlu0 %4117
        %4119 = vset.pattern.permute.xlu0 0
        %4120 = vperm.xlu0 %4119, %v3636
        %v4121 = vpop.permute.xlu0 %4120
        %4122 = vset.pattern.permute.xlu0 0
        %4123 = vperm.xlu0 %4122, %v3638
        %v4124 = vpop.permute.xlu0 %4123
        %4125 = vset.pattern.permute.xlu0 0
        %4126 = vperm.xlu0 %4125, %v3640
        %v4127 = vpop.permute.xlu0 %4126
        %4128 = vset.pattern.permute.xlu0 0
        %4129 = vperm.xlu0 %4128, %v3642
        %v4130 = vpop.permute.xlu0 %4129
        %4131 = vset.pattern.permute.xlu0 0
        %4132 = vperm.xlu0 %4131, %v3644
        %v4133 = vpop.permute.xlu0 %4132
        %4134 = vset.pattern.permute.xlu0 0
        %4135 = vperm.xlu0 %4134, %v3646
        %v4136 = vpop.permute.xlu0 %4135
        %4137 = vset.pattern.permute.xlu0 0
        %4138 = vperm.xlu0 %4137, %v3648
        %v4139 = vpop.permute.xlu0 %4138
        %4140 = vset.pattern.permute.xlu0 0
        %4141 = vperm.xlu0 %4140, %v3650
        %v4142 = vpop.permute.xlu0 %4141
        %4143 = vset.pattern.permute.xlu0 0
        %4144 = vperm.xlu0 %4143, %v3652
        %v4145 = vpop.permute.xlu0 %4144
        %4146 = vset.pattern.permute.xlu0 0
        %4147 = vperm.xlu0 %4146, %v3654
        %v4148 = vpop.permute.xlu0 %4147
        %4149 = vset.pattern.permute.xlu0 0
        %4150 = vperm.xlu0 %4149, %v3656
        %v4151 = vpop.permute.xlu0 %4150
        %4152 = vset.pattern.permute.xlu0 0
        %4153 = vperm.xlu0 %4152, %v3658
        %v4154 = vpop.permute.xlu0 %4153
        %4155 = vset.pattern.permute.xlu0 0
        %4156 = vperm.xlu0 %4155, %v3660
        %v4157 = vpop.permute.xlu0 %4156
        %4158 = vset.pattern.permute.xlu0 0
        %4159 = vperm.xlu0 %4158, %v3662
        %v4160 = vpop.permute.xlu0 %4159
        %4161 = vset.pattern.permute.xlu0 0
        %4162 = vperm.xlu0 %4161, %v3664
        %v4163 = vpop.permute.xlu0 %4162
        %4164 = vset.pattern.permute.xlu0 0
        %4165 = vperm.xlu0 %4164, %v3666
        %v4166 = vpop.permute.xlu0 %4165
        %4167 = vset.pattern.permute.xlu0 0
        %4168 = vperm.xlu0 %4167, %v3668
        %v4169 = vpop.permute.xlu0 %4168
        %4170 = vset.pattern.permute.xlu0 0
        %4171 = vperm.xlu0 %4170, %v3670
        %v4172 = vpop.permute.xlu0 %4171
        %4173 = vset.pattern.permute.xlu0 0
        %4174 = vperm.xlu0 %4173, %v3672
        %v4175 = vpop.permute.xlu0 %4174
        %4176 = vset.pattern.permute.xlu0 0
        %4177 = vperm.xlu0 %4176, %v3674
        %v4178 = vpop.permute.xlu0 %4177
        %4179 = vset.pattern.permute.xlu0 0
        %4180 = vperm.xlu0 %4179, %v3676
        %v4181 = vpop.permute.xlu0 %4180
        %4182 = vset.pattern.permute.xlu0 0
        %4183 = vperm.xlu0 %4182, %v3678
        %v4184 = vpop.permute.xlu0 %4183
        %4185 = vset.pattern.permute.xlu0 0
        %4186 = vperm.xlu0 %4185, %v3680
        %v4187 = vpop.permute.xlu0 %4186
        %4188 = vset.pattern.permute.xlu0 0
        %4189 = vperm.xlu0 %4188, %v3682
        %v4190 = vpop.permute.xlu0 %4189
        %4191 = vset.pattern.permute.xlu0 0
        %4192 = vperm.xlu0 %4191, %v3684
        %v4193 = vpop.permute.xlu0 %4192
        %4194 = vset.pattern.permute.xlu0 0
        %4195 = vperm.xlu0 %4194, %v3686
        %v4196 = vpop.permute.xlu0 %4195
        %4197 = vset.pattern.permute.xlu0 0
        %4198 = vperm.xlu0 %4197, %v3688
        %v4199 = vpop.permute.xlu0 %4198
        %4200 = vset.pattern.permute.xlu0 0
        %4201 = vperm.xlu0 %4200, %v3690
        %v4202 = vpop.permute.xlu0 %4201
        %4203 = vset.pattern.permute.xlu0 0
        %4204 = vperm.xlu0 %4203, %v3692
        %v4205 = vpop.permute.xlu0 %4204
        %4206 = vset.pattern.permute.xlu0 0
        %4207 = vperm.xlu0 %4206, %v3694
        %v4208 = vpop.permute.xlu0 %4207
        %v4209 = vlaneseq
        %v4210 = vshrl.u32 %v4209, 7
        %v4211 = vsub.s32 %v2583, %v4210
        %v4212 = vrot.slane %v3827, %v4211
        %v4213 = vlaneseq
        %v4214 = vshrl.u32 %v4213, 7
        %v4215 = vsub.s32 %v2588, %v4214
        %v4216 = vrot.slane %v3830, %v4215
        %v4217 = vsel %vm2593, %v4216, %v4212
        %v4218 = vlaneseq
        %v4219 = vshrl.u32 %v4218, 7
        %v4220 = vsub.s32 %v2595, %v4219
        %v4221 = vrot.slane %v3833, %v4220
        %v4222 = vsel %vm2600, %v4221, %v4217
        %v4223 = vlaneseq
        %v4224 = vshrl.u32 %v4223, 7
        %v4225 = vsub.s32 %v2602, %v4224
        %v4226 = vrot.slane %v3836, %v4225
        %v4227 = vsel %vm2607, %v4226, %v4222
        %v4228 = vlaneseq
        %v4229 = vshrl.u32 %v4228, 7
        %v4230 = vsub.s32 %v2609, %v4229
        %v4231 = vrot.slane %v3839, %v4230
        %v4232 = vsel %vm2614, %v4231, %v4227
        %v4233 = vlaneseq
        %v4234 = vshrl.u32 %v4233, 7
        %v4235 = vsub.s32 %v2616, %v4234
        %v4236 = vrot.slane %v3842, %v4235
        %v4237 = vsel %vm2621, %v4236, %v4232
        %v4238 = vlaneseq
        %v4239 = vshrl.u32 %v4238, 7
        %v4240 = vsub.s32 %v2623, %v4239
        %v4241 = vrot.slane %v3845, %v4240
        %v4242 = vsel %vm2628, %v4241, %v4237
        %v4243 = vlaneseq
        %v4244 = vshrl.u32 %v4243, 7
        %v4245 = vsub.s32 %v2630, %v4244
        %v4246 = vrot.slane %v3848, %v4245
        %v4247 = vsel %vm2635, %v4246, %v4242
        %v4248 = vlaneseq
        %v4249 = vshrl.u32 %v4248, 7
        %v4250 = vsub.s32 %v2637, %v4249
        %v4251 = vrot.slane %v3851, %v4250
        %v4252 = vsel %vm2642, %v4251, %v4247
        %v4253 = vlaneseq
        %v4254 = vshrl.u32 %v4253, 7
        %v4255 = vsub.s32 %v2644, %v4254
        %v4256 = vrot.slane %v3854, %v4255
        %v4257 = vsel %vm2649, %v4256, %v4252
        %v4258 = vlaneseq
        %v4259 = vshrl.u32 %v4258, 7
        %v4260 = vsub.s32 %v2651, %v4259
        %v4261 = vrot.slane %v3857, %v4260
        %v4262 = vsel %vm2656, %v4261, %v4257
        %v4263 = vlaneseq
        %v4264 = vshrl.u32 %v4263, 7
        %v4265 = vsub.s32 %v2658, %v4264
        %v4266 = vrot.slane %v3860, %v4265
        %v4267 = vsel %vm2663, %v4266, %v4262
        %v4268 = vlaneseq
        %v4269 = vshrl.u32 %v4268, 7
        %v4270 = vsub.s32 %v2665, %v4269
        %v4271 = vrot.slane %v3863, %v4270
        %v4272 = vsel %vm2670, %v4271, %v4267
        %v4273 = vlaneseq
        %v4274 = vshrl.u32 %v4273, 7
        %v4275 = vsub.s32 %v2672, %v4274
        %v4276 = vrot.slane %v3866, %v4275
        %v4277 = vsel %vm2677, %v4276, %v4272
        %v4278 = vlaneseq
        %v4279 = vshrl.u32 %v4278, 7
        %v4280 = vsub.s32 %v2679, %v4279
        %v4281 = vrot.slane %v3869, %v4280
        %v4282 = vsel %vm2684, %v4281, %v4277
        %v4283 = vlaneseq
        %v4284 = vshrl.u32 %v4283, 7
        %v4285 = vsub.s32 %v2686, %v4284
        %v4286 = vrot.slane %v3872, %v4285
        %v4287 = vsel %vm2691, %v4286, %v4282
        %v4288 = vlaneseq
        %v4289 = vshrl.u32 %v4288, 7
        %v4290 = vsub.s32 %v2583, %v4289
        %v4291 = vrot.slane %v3875, %v4290
        %v4292 = vlaneseq
        %v4293 = vshrl.u32 %v4292, 7
        %v4294 = vsub.s32 %v2588, %v4293
        %v4295 = vrot.slane %v3878, %v4294
        %v4296 = vsel %vm2593, %v4295, %v4291
        %v4297 = vlaneseq
        %v4298 = vshrl.u32 %v4297, 7
        %v4299 = vsub.s32 %v2595, %v4298
        %v4300 = vrot.slane %v3881, %v4299
        %v4301 = vsel %vm2600, %v4300, %v4296
        %v4302 = vlaneseq
        %v4303 = vshrl.u32 %v4302, 7
        %v4304 = vsub.s32 %v2602, %v4303
        %v4305 = vrot.slane %v3884, %v4304
        %v4306 = vsel %vm2607, %v4305, %v4301
        %v4307 = vlaneseq
        %v4308 = vshrl.u32 %v4307, 7
        %v4309 = vsub.s32 %v2609, %v4308
        %v4310 = vrot.slane %v3887, %v4309
        %v4311 = vsel %vm2614, %v4310, %v4306
        %v4312 = vlaneseq
        %v4313 = vshrl.u32 %v4312, 7
        %v4314 = vsub.s32 %v2616, %v4313
        %v4315 = vrot.slane %v3890, %v4314
        %v4316 = vsel %vm2621, %v4315, %v4311
        %v4317 = vlaneseq
        %v4318 = vshrl.u32 %v4317, 7
        %v4319 = vsub.s32 %v2623, %v4318
        %v4320 = vrot.slane %v3893, %v4319
        %v4321 = vsel %vm2628, %v4320, %v4316
        %v4322 = vlaneseq
        %v4323 = vshrl.u32 %v4322, 7
        %v4324 = vsub.s32 %v2630, %v4323
        %v4325 = vrot.slane %v3896, %v4324
        %v4326 = vsel %vm2635, %v4325, %v4321
        %v4327 = vlaneseq
        %v4328 = vshrl.u32 %v4327, 7
        %v4329 = vsub.s32 %v2637, %v4328
        %v4330 = vrot.slane %v3899, %v4329
        %v4331 = vsel %vm2642, %v4330, %v4326
        %v4332 = vlaneseq
        %v4333 = vshrl.u32 %v4332, 7
        %v4334 = vsub.s32 %v2644, %v4333
        %v4335 = vrot.slane %v3902, %v4334
        %v4336 = vsel %vm2649, %v4335, %v4331
        %v4337 = vlaneseq
        %v4338 = vshrl.u32 %v4337, 7
        %v4339 = vsub.s32 %v2651, %v4338
        %v4340 = vrot.slane %v3905, %v4339
        %v4341 = vsel %vm2656, %v4340, %v4336
        %v4342 = vlaneseq
        %v4343 = vshrl.u32 %v4342, 7
        %v4344 = vsub.s32 %v2658, %v4343
        %v4345 = vrot.slane %v3908, %v4344
        %v4346 = vsel %vm2663, %v4345, %v4341
        %v4347 = vlaneseq
        %v4348 = vshrl.u32 %v4347, 7
        %v4349 = vsub.s32 %v2665, %v4348
        %v4350 = vrot.slane %v3911, %v4349
        %v4351 = vsel %vm2670, %v4350, %v4346
        %v4352 = vlaneseq
        %v4353 = vshrl.u32 %v4352, 7
        %v4354 = vsub.s32 %v2672, %v4353
        %v4355 = vrot.slane %v3914, %v4354
        %v4356 = vsel %vm2677, %v4355, %v4351
        %v4357 = vlaneseq
        %v4358 = vshrl.u32 %v4357, 7
        %v4359 = vsub.s32 %v2679, %v4358
        %v4360 = vrot.slane %v3917, %v4359
        %v4361 = vsel %vm2684, %v4360, %v4356
        %v4362 = vlaneseq
        %v4363 = vshrl.u32 %v4362, 7
        %v4364 = vsub.s32 %v2686, %v4363
        %v4365 = vrot.slane %v3920, %v4364
        %v4366 = vsel %vm2691, %v4365, %v4361
        %v4367 = vlaneseq
        %v4368 = vshrl.u32 %v4367, 7
        %v4369 = vsub.s32 %v2583, %v4368
        %v4370 = vrot.slane %v3923, %v4369
        %v4371 = vlaneseq
        %v4372 = vshrl.u32 %v4371, 7
        %v4373 = vsub.s32 %v2588, %v4372
        %v4374 = vrot.slane %v3926, %v4373
        %v4375 = vsel %vm2593, %v4374, %v4370
        %v4376 = vlaneseq
        %v4377 = vshrl.u32 %v4376, 7
        %v4378 = vsub.s32 %v2595, %v4377
        %v4379 = vrot.slane %v3929, %v4378
        %v4380 = vsel %vm2600, %v4379, %v4375
        %v4381 = vlaneseq
        %v4382 = vshrl.u32 %v4381, 7
        %v4383 = vsub.s32 %v2602, %v4382
        %v4384 = vrot.slane %v3932, %v4383
        %v4385 = vsel %vm2607, %v4384, %v4380
        %v4386 = vlaneseq
        %v4387 = vshrl.u32 %v4386, 7
        %v4388 = vsub.s32 %v2609, %v4387
        %v4389 = vrot.slane %v3935, %v4388
        %v4390 = vsel %vm2614, %v4389, %v4385
        %v4391 = vlaneseq
        %v4392 = vshrl.u32 %v4391, 7
        %v4393 = vsub.s32 %v2616, %v4392
        %v4394 = vrot.slane %v3938, %v4393
        %v4395 = vsel %vm2621, %v4394, %v4390
        %v4396 = vlaneseq
        %v4397 = vshrl.u32 %v4396, 7
        %v4398 = vsub.s32 %v2623, %v4397
        %v4399 = vrot.slane %v3941, %v4398
        %v4400 = vsel %vm2628, %v4399, %v4395
        %v4401 = vlaneseq
        %v4402 = vshrl.u32 %v4401, 7
        %v4403 = vsub.s32 %v2630, %v4402
        %v4404 = vrot.slane %v3944, %v4403
        %v4405 = vsel %vm2635, %v4404, %v4400
        %v4406 = vlaneseq
        %v4407 = vshrl.u32 %v4406, 7
        %v4408 = vsub.s32 %v2637, %v4407
        %v4409 = vrot.slane %v3947, %v4408
        %v4410 = vsel %vm2642, %v4409, %v4405
        %v4411 = vlaneseq
        %v4412 = vshrl.u32 %v4411, 7
        %v4413 = vsub.s32 %v2644, %v4412
        %v4414 = vrot.slane %v3950, %v4413
        %v4415 = vsel %vm2649, %v4414, %v4410
        %v4416 = vlaneseq
        %v4417 = vshrl.u32 %v4416, 7
        %v4418 = vsub.s32 %v2651, %v4417
        %v4419 = vrot.slane %v3953, %v4418
        %v4420 = vsel %vm2656, %v4419, %v4415
        %v4421 = vlaneseq
        %v4422 = vshrl.u32 %v4421, 7
        %v4423 = vsub.s32 %v2658, %v4422
        %v4424 = vrot.slane %v3956, %v4423
        %v4425 = vsel %vm2663, %v4424, %v4420
        %v4426 = vlaneseq
        %v4427 = vshrl.u32 %v4426, 7
        %v4428 = vsub.s32 %v2665, %v4427
        %v4429 = vrot.slane %v3959, %v4428
        %v4430 = vsel %vm2670, %v4429, %v4425
        %v4431 = vlaneseq
        %v4432 = vshrl.u32 %v4431, 7
        %v4433 = vsub.s32 %v2672, %v4432
        %v4434 = vrot.slane %v3962, %v4433
        %v4435 = vsel %vm2677, %v4434, %v4430
        %v4436 = vlaneseq
        %v4437 = vshrl.u32 %v4436, 7
        %v4438 = vsub.s32 %v2679, %v4437
        %v4439 = vrot.slane %v3965, %v4438
        %v4440 = vsel %vm2684, %v4439, %v4435
        %v4441 = vlaneseq
        %v4442 = vshrl.u32 %v4441, 7
        %v4443 = vsub.s32 %v2686, %v4442
        %v4444 = vrot.slane %v3968, %v4443
        %v4445 = vsel %vm2691, %v4444, %v4440
        %v4446 = vlaneseq
        %v4447 = vshrl.u32 %v4446, 7
        %v4448 = vsub.s32 %v2583, %v4447
        %v4449 = vrot.slane %v3971, %v4448
        %v4450 = vlaneseq
        %v4451 = vshrl.u32 %v4450, 7
        %v4452 = vsub.s32 %v2588, %v4451
        %v4453 = vrot.slane %v3974, %v4452
        %v4454 = vsel %vm2593, %v4453, %v4449
        %v4455 = vlaneseq
        %v4456 = vshrl.u32 %v4455, 7
        %v4457 = vsub.s32 %v2595, %v4456
        %v4458 = vrot.slane %v3977, %v4457
        %v4459 = vsel %vm2600, %v4458, %v4454
        %v4460 = vlaneseq
        %v4461 = vshrl.u32 %v4460, 7
        %v4462 = vsub.s32 %v2602, %v4461
        %v4463 = vrot.slane %v3980, %v4462
        %v4464 = vsel %vm2607, %v4463, %v4459
        %v4465 = vlaneseq
        %v4466 = vshrl.u32 %v4465, 7
        %v4467 = vsub.s32 %v2609, %v4466
        %v4468 = vrot.slane %v3983, %v4467
        %v4469 = vsel %vm2614, %v4468, %v4464
        %v4470 = vlaneseq
        %v4471 = vshrl.u32 %v4470, 7
        %v4472 = vsub.s32 %v2616, %v4471
        %v4473 = vrot.slane %v3986, %v4472
        %v4474 = vsel %vm2621, %v4473, %v4469
        %v4475 = vlaneseq
        %v4476 = vshrl.u32 %v4475, 7
        %v4477 = vsub.s32 %v2623, %v4476
        %v4478 = vrot.slane %v3989, %v4477
        %v4479 = vsel %vm2628, %v4478, %v4474
        %v4480 = vlaneseq
        %v4481 = vshrl.u32 %v4480, 7
        %v4482 = vsub.s32 %v2630, %v4481
        %v4483 = vrot.slane %v3992, %v4482
        %v4484 = vsel %vm2635, %v4483, %v4479
        %v4485 = vlaneseq
        %v4486 = vshrl.u32 %v4485, 7
        %v4487 = vsub.s32 %v2637, %v4486
        %v4488 = vrot.slane %v3995, %v4487
        %v4489 = vsel %vm2642, %v4488, %v4484
        %v4490 = vlaneseq
        %v4491 = vshrl.u32 %v4490, 7
        %v4492 = vsub.s32 %v2644, %v4491
        %v4493 = vrot.slane %v3998, %v4492
        %v4494 = vsel %vm2649, %v4493, %v4489
        %v4495 = vlaneseq
        %v4496 = vshrl.u32 %v4495, 7
        %v4497 = vsub.s32 %v2651, %v4496
        %v4498 = vrot.slane %v4001, %v4497
        %v4499 = vsel %vm2656, %v4498, %v4494
        %v4500 = vlaneseq
        %v4501 = vshrl.u32 %v4500, 7
        %v4502 = vsub.s32 %v2658, %v4501
        %v4503 = vrot.slane %v4004, %v4502
        %v4504 = vsel %vm2663, %v4503, %v4499
        %v4505 = vlaneseq
        %v4506 = vshrl.u32 %v4505, 7
        %v4507 = vsub.s32 %v2665, %v4506
        %v4508 = vrot.slane %v4007, %v4507
        %v4509 = vsel %vm2670, %v4508, %v4504
        %v4510 = vlaneseq
        %v4511 = vshrl.u32 %v4510, 7
        %v4512 = vsub.s32 %v2672, %v4511
        %v4513 = vrot.slane %v4010, %v4512
        %v4514 = vsel %vm2677, %v4513, %v4509
        %v4515 = vlaneseq
        %v4516 = vshrl.u32 %v4515, 7
        %v4517 = vsub.s32 %v2679, %v4516
        %v4518 = vrot.slane %v4013, %v4517
        %v4519 = vsel %vm2684, %v4518, %v4514
        %v4520 = vlaneseq
        %v4521 = vshrl.u32 %v4520, 7
        %v4522 = vsub.s32 %v2686, %v4521
        %v4523 = vrot.slane %v4016, %v4522
        %v4524 = vsel %vm2691, %v4523, %v4519
        %v4525 = vlaneseq
        %v4526 = vshrl.u32 %v4525, 7
        %v4527 = vsub.s32 %v2583, %v4526
        %v4528 = vrot.slane %v4019, %v4527
        %v4529 = vlaneseq
        %v4530 = vshrl.u32 %v4529, 7
        %v4531 = vsub.s32 %v2588, %v4530
        %v4532 = vrot.slane %v4022, %v4531
        %v4533 = vsel %vm2593, %v4532, %v4528
        %v4534 = vlaneseq
        %v4535 = vshrl.u32 %v4534, 7
        %v4536 = vsub.s32 %v2595, %v4535
        %v4537 = vrot.slane %v4025, %v4536
        %v4538 = vsel %vm2600, %v4537, %v4533
        %v4539 = vlaneseq
        %v4540 = vshrl.u32 %v4539, 7
        %v4541 = vsub.s32 %v2602, %v4540
        %v4542 = vrot.slane %v4028, %v4541
        %v4543 = vsel %vm2607, %v4542, %v4538
        %v4544 = vlaneseq
        %v4545 = vshrl.u32 %v4544, 7
        %v4546 = vsub.s32 %v2609, %v4545
        %v4547 = vrot.slane %v4031, %v4546
        %v4548 = vsel %vm2614, %v4547, %v4543
        %v4549 = vlaneseq
        %v4550 = vshrl.u32 %v4549, 7
        %v4551 = vsub.s32 %v2616, %v4550
        %v4552 = vrot.slane %v4034, %v4551
        %v4553 = vsel %vm2621, %v4552, %v4548
        %v4554 = vlaneseq
        %v4555 = vshrl.u32 %v4554, 7
        %v4556 = vsub.s32 %v2623, %v4555
        %v4557 = vrot.slane %v4037, %v4556
        %v4558 = vsel %vm2628, %v4557, %v4553
        %v4559 = vlaneseq
        %v4560 = vshrl.u32 %v4559, 7
        %v4561 = vsub.s32 %v2630, %v4560
        %v4562 = vrot.slane %v4040, %v4561
        %v4563 = vsel %vm2635, %v4562, %v4558
        %v4564 = vlaneseq
        %v4565 = vshrl.u32 %v4564, 7
        %v4566 = vsub.s32 %v2637, %v4565
        %v4567 = vrot.slane %v4043, %v4566
        %v4568 = vsel %vm2642, %v4567, %v4563
        %v4569 = vlaneseq
        %v4570 = vshrl.u32 %v4569, 7
        %v4571 = vsub.s32 %v2644, %v4570
        %v4572 = vrot.slane %v4046, %v4571
        %v4573 = vsel %vm2649, %v4572, %v4568
        %v4574 = vlaneseq
        %v4575 = vshrl.u32 %v4574, 7
        %v4576 = vsub.s32 %v2651, %v4575
        %v4577 = vrot.slane %v4049, %v4576
        %v4578 = vsel %vm2656, %v4577, %v4573
        %v4579 = vlaneseq
        %v4580 = vshrl.u32 %v4579, 7
        %v4581 = vsub.s32 %v2658, %v4580
        %v4582 = vrot.slane %v4052, %v4581
        %v4583 = vsel %vm2663, %v4582, %v4578
        %v4584 = vlaneseq
        %v4585 = vshrl.u32 %v4584, 7
        %v4586 = vsub.s32 %v2665, %v4585
        %v4587 = vrot.slane %v4055, %v4586
        %v4588 = vsel %vm2670, %v4587, %v4583
        %v4589 = vlaneseq
        %v4590 = vshrl.u32 %v4589, 7
        %v4591 = vsub.s32 %v2672, %v4590
        %v4592 = vrot.slane %v4058, %v4591
        %v4593 = vsel %vm2677, %v4592, %v4588
        %v4594 = vlaneseq
        %v4595 = vshrl.u32 %v4594, 7
        %v4596 = vsub.s32 %v2679, %v4595
        %v4597 = vrot.slane %v4061, %v4596
        %v4598 = vsel %vm2684, %v4597, %v4593
        %v4599 = vlaneseq
        %v4600 = vshrl.u32 %v4599, 7
        %v4601 = vsub.s32 %v2686, %v4600
        %v4602 = vrot.slane %v4064, %v4601
        %v4603 = vsel %vm2691, %v4602, %v4598
        %v4604 = vlaneseq
        %v4605 = vshrl.u32 %v4604, 7
        %v4606 = vsub.s32 %v2583, %v4605
        %v4607 = vrot.slane %v4067, %v4606
        %v4608 = vlaneseq
        %v4609 = vshrl.u32 %v4608, 7
        %v4610 = vsub.s32 %v2588, %v4609
        %v4611 = vrot.slane %v4070, %v4610
        %v4612 = vsel %vm2593, %v4611, %v4607
        %v4613 = vlaneseq
        %v4614 = vshrl.u32 %v4613, 7
        %v4615 = vsub.s32 %v2595, %v4614
        %v4616 = vrot.slane %v4073, %v4615
        %v4617 = vsel %vm2600, %v4616, %v4612
        %v4618 = vlaneseq
        %v4619 = vshrl.u32 %v4618, 7
        %v4620 = vsub.s32 %v2602, %v4619
        %v4621 = vrot.slane %v4076, %v4620
        %v4622 = vsel %vm2607, %v4621, %v4617
        %v4623 = vlaneseq
        %v4624 = vshrl.u32 %v4623, 7
        %v4625 = vsub.s32 %v2609, %v4624
        %v4626 = vrot.slane %v4079, %v4625
        %v4627 = vsel %vm2614, %v4626, %v4622
        %v4628 = vlaneseq
        %v4629 = vshrl.u32 %v4628, 7
        %v4630 = vsub.s32 %v2616, %v4629
        %v4631 = vrot.slane %v4082, %v4630
        %v4632 = vsel %vm2621, %v4631, %v4627
        %v4633 = vlaneseq
        %v4634 = vshrl.u32 %v4633, 7
        %v4635 = vsub.s32 %v2623, %v4634
        %v4636 = vrot.slane %v4085, %v4635
        %v4637 = vsel %vm2628, %v4636, %v4632
        %v4638 = vlaneseq
        %v4639 = vshrl.u32 %v4638, 7
        %v4640 = vsub.s32 %v2630, %v4639
        %v4641 = vrot.slane %v4088, %v4640
        %v4642 = vsel %vm2635, %v4641, %v4637
        %v4643 = vlaneseq
        %v4644 = vshrl.u32 %v4643, 7
        %v4645 = vsub.s32 %v2637, %v4644
        %v4646 = vrot.slane %v4091, %v4645
        %v4647 = vsel %vm2642, %v4646, %v4642
        %v4648 = vlaneseq
        %v4649 = vshrl.u32 %v4648, 7
        %v4650 = vsub.s32 %v2644, %v4649
        %v4651 = vrot.slane %v4094, %v4650
        %v4652 = vsel %vm2649, %v4651, %v4647
        %v4653 = vlaneseq
        %v4654 = vshrl.u32 %v4653, 7
        %v4655 = vsub.s32 %v2651, %v4654
        %v4656 = vrot.slane %v4097, %v4655
        %v4657 = vsel %vm2656, %v4656, %v4652
        %v4658 = vlaneseq
        %v4659 = vshrl.u32 %v4658, 7
        %v4660 = vsub.s32 %v2658, %v4659
        %v4661 = vrot.slane %v4100, %v4660
        %v4662 = vsel %vm2663, %v4661, %v4657
        %v4663 = vlaneseq
        %v4664 = vshrl.u32 %v4663, 7
        %v4665 = vsub.s32 %v2665, %v4664
        %v4666 = vrot.slane %v4103, %v4665
        %v4667 = vsel %vm2670, %v4666, %v4662
        %v4668 = vlaneseq
        %v4669 = vshrl.u32 %v4668, 7
        %v4670 = vsub.s32 %v2672, %v4669
        %v4671 = vrot.slane %v4106, %v4670
        %v4672 = vsel %vm2677, %v4671, %v4667
        %v4673 = vlaneseq
        %v4674 = vshrl.u32 %v4673, 7
        %v4675 = vsub.s32 %v2679, %v4674
        %v4676 = vrot.slane %v4109, %v4675
        %v4677 = vsel %vm2684, %v4676, %v4672
        %v4678 = vlaneseq
        %v4679 = vshrl.u32 %v4678, 7
        %v4680 = vsub.s32 %v2686, %v4679
        %v4681 = vrot.slane %v4112, %v4680
        %v4682 = vsel %vm2691, %v4681, %v4677
        %v4683 = vlaneseq
        %v4684 = vshrl.u32 %v4683, 7
        %v4685 = vsub.s32 %v2583, %v4684
        %v4686 = vrot.slane %v4115, %v4685
        %v4687 = vlaneseq
        %v4688 = vshrl.u32 %v4687, 7
        %v4689 = vsub.s32 %v2588, %v4688
        %v4690 = vrot.slane %v4118, %v4689
        %v4691 = vsel %vm2593, %v4690, %v4686
        %v4692 = vlaneseq
        %v4693 = vshrl.u32 %v4692, 7
        %v4694 = vsub.s32 %v2595, %v4693
        %v4695 = vrot.slane %v4121, %v4694
        %v4696 = vsel %vm2600, %v4695, %v4691
        %v4697 = vlaneseq
        %v4698 = vshrl.u32 %v4697, 7
        %v4699 = vsub.s32 %v2602, %v4698
        %v4700 = vrot.slane %v4124, %v4699
        %v4701 = vsel %vm2607, %v4700, %v4696
        %v4702 = vlaneseq
        %v4703 = vshrl.u32 %v4702, 7
        %v4704 = vsub.s32 %v2609, %v4703
        %v4705 = vrot.slane %v4127, %v4704
        %v4706 = vsel %vm2614, %v4705, %v4701
        %v4707 = vlaneseq
        %v4708 = vshrl.u32 %v4707, 7
        %v4709 = vsub.s32 %v2616, %v4708
        %v4710 = vrot.slane %v4130, %v4709
        %v4711 = vsel %vm2621, %v4710, %v4706
        %v4712 = vlaneseq
        %v4713 = vshrl.u32 %v4712, 7
        %v4714 = vsub.s32 %v2623, %v4713
        %v4715 = vrot.slane %v4133, %v4714
        %v4716 = vsel %vm2628, %v4715, %v4711
        %v4717 = vlaneseq
        %v4718 = vshrl.u32 %v4717, 7
        %v4719 = vsub.s32 %v2630, %v4718
        %v4720 = vrot.slane %v4136, %v4719
        %v4721 = vsel %vm2635, %v4720, %v4716
        %v4722 = vlaneseq
        %v4723 = vshrl.u32 %v4722, 7
        %v4724 = vsub.s32 %v2637, %v4723
        %v4725 = vrot.slane %v4139, %v4724
        %v4726 = vsel %vm2642, %v4725, %v4721
        %v4727 = vlaneseq
        %v4728 = vshrl.u32 %v4727, 7
        %v4729 = vsub.s32 %v2644, %v4728
        %v4730 = vrot.slane %v4142, %v4729
        %v4731 = vsel %vm2649, %v4730, %v4726
        %v4732 = vlaneseq
        %v4733 = vshrl.u32 %v4732, 7
        %v4734 = vsub.s32 %v2651, %v4733
        %v4735 = vrot.slane %v4145, %v4734
        %v4736 = vsel %vm2656, %v4735, %v4731
        %v4737 = vlaneseq
        %v4738 = vshrl.u32 %v4737, 7
        %v4739 = vsub.s32 %v2658, %v4738
        %v4740 = vrot.slane %v4148, %v4739
        %v4741 = vsel %vm2663, %v4740, %v4736
        %v4742 = vlaneseq
        %v4743 = vshrl.u32 %v4742, 7
        %v4744 = vsub.s32 %v2665, %v4743
        %v4745 = vrot.slane %v4151, %v4744
        %v4746 = vsel %vm2670, %v4745, %v4741
        %v4747 = vlaneseq
        %v4748 = vshrl.u32 %v4747, 7
        %v4749 = vsub.s32 %v2672, %v4748
        %v4750 = vrot.slane %v4154, %v4749
        %v4751 = vsel %vm2677, %v4750, %v4746
        %v4752 = vlaneseq
        %v4753 = vshrl.u32 %v4752, 7
        %v4754 = vsub.s32 %v2679, %v4753
        %v4755 = vrot.slane %v4157, %v4754
        %v4756 = vsel %vm2684, %v4755, %v4751
        %v4757 = vlaneseq
        %v4758 = vshrl.u32 %v4757, 7
        %v4759 = vsub.s32 %v2686, %v4758
        %v4760 = vrot.slane %v4160, %v4759
        %v4761 = vsel %vm2691, %v4760, %v4756
        %v4762 = vlaneseq
        %v4763 = vshrl.u32 %v4762, 7
        %v4764 = vsub.s32 %v2583, %v4763
        %v4765 = vrot.slane %v4163, %v4764
        %v4766 = vlaneseq
        %v4767 = vshrl.u32 %v4766, 7
        %v4768 = vsub.s32 %v2588, %v4767
        %v4769 = vrot.slane %v4166, %v4768
        %v4770 = vsel %vm2593, %v4769, %v4765
        %v4771 = vlaneseq
        %v4772 = vshrl.u32 %v4771, 7
        %v4773 = vsub.s32 %v2595, %v4772
        %v4774 = vrot.slane %v4169, %v4773
        %v4775 = vsel %vm2600, %v4774, %v4770
        %v4776 = vlaneseq
        %v4777 = vshrl.u32 %v4776, 7
        %v4778 = vsub.s32 %v2602, %v4777
        %v4779 = vrot.slane %v4172, %v4778
        %v4780 = vsel %vm2607, %v4779, %v4775
        %v4781 = vlaneseq
        %v4782 = vshrl.u32 %v4781, 7
        %v4783 = vsub.s32 %v2609, %v4782
        %v4784 = vrot.slane %v4175, %v4783
        %v4785 = vsel %vm2614, %v4784, %v4780
        %v4786 = vlaneseq
        %v4787 = vshrl.u32 %v4786, 7
        %v4788 = vsub.s32 %v2616, %v4787
        %v4789 = vrot.slane %v4178, %v4788
        %v4790 = vsel %vm2621, %v4789, %v4785
        %v4791 = vlaneseq
        %v4792 = vshrl.u32 %v4791, 7
        %v4793 = vsub.s32 %v2623, %v4792
        %v4794 = vrot.slane %v4181, %v4793
        %v4795 = vsel %vm2628, %v4794, %v4790
        %v4796 = vlaneseq
        %v4797 = vshrl.u32 %v4796, 7
        %v4798 = vsub.s32 %v2630, %v4797
        %v4799 = vrot.slane %v4184, %v4798
        %v4800 = vsel %vm2635, %v4799, %v4795
        %v4801 = vlaneseq
        %v4802 = vshrl.u32 %v4801, 7
        %v4803 = vsub.s32 %v2637, %v4802
        %v4804 = vrot.slane %v4187, %v4803
        %v4805 = vsel %vm2642, %v4804, %v4800
        %v4806 = vlaneseq
        %v4807 = vshrl.u32 %v4806, 7
        %v4808 = vsub.s32 %v2644, %v4807
        %v4809 = vrot.slane %v4190, %v4808
        %v4810 = vsel %vm2649, %v4809, %v4805
        %v4811 = vlaneseq
        %v4812 = vshrl.u32 %v4811, 7
        %v4813 = vsub.s32 %v2651, %v4812
        %v4814 = vrot.slane %v4193, %v4813
        %v4815 = vsel %vm2656, %v4814, %v4810
        %v4816 = vlaneseq
        %v4817 = vshrl.u32 %v4816, 7
        %v4818 = vsub.s32 %v2658, %v4817
        %v4819 = vrot.slane %v4196, %v4818
        %v4820 = vsel %vm2663, %v4819, %v4815
        %v4821 = vlaneseq
        %v4822 = vshrl.u32 %v4821, 7
        %v4823 = vsub.s32 %v2665, %v4822
        %v4824 = vrot.slane %v4199, %v4823
        %v4825 = vsel %vm2670, %v4824, %v4820
        %v4826 = vlaneseq
        %v4827 = vshrl.u32 %v4826, 7
        %v4828 = vsub.s32 %v2672, %v4827
        %v4829 = vrot.slane %v4202, %v4828
        %v4830 = vsel %vm2677, %v4829, %v4825
        %v4831 = vlaneseq
        %v4832 = vshrl.u32 %v4831, 7
        %v4833 = vsub.s32 %v2679, %v4832
        %v4834 = vrot.slane %v4205, %v4833
        %v4835 = vsel %vm2684, %v4834, %v4830
        %v4836 = vlaneseq
        %v4837 = vshrl.u32 %v4836, 7
        %v4838 = vsub.s32 %v2686, %v4837
        %v4839 = vrot.slane %v4208, %v4838
        %v4840 = vsel %vm2691, %v4839, %v4835
        %v4841 = vsel %vm3246, %v4366, %v4287
        %v4842 = vsel %vm3248, %v4445, %v4841
        %v4843 = vsel %vm3250, %v4524, %v4842
        %v4844 = vsel %vm3252, %v4603, %v4843
        %v4845 = vsel %vm3254, %v4682, %v4844
        %v4846 = vsel %vm3256, %v4761, %v4845
        %v4847 = vsel %vm3258, %v4840, %v4846
        %4849 = vadd.xlane.f32.xlu0 %v4847
        %v4850 = vpop.xlane.xlu0 %4849
        %v4851 = vadd.f32 %v3696, %v4850
        %vm4852 = vcmask 7168
        %4853 = vst.msk [vmem:[#allocation3] sm:$0xff] %vm4852, %v4851
        %4855 = vmatprep.subr.mxu0 0.0
        %4856 = vmatpush1.msra.mxu0 %v736
        %4857 = vmatprep.subr.mxu0 0.0
        %4858 = vmatpush1.msra.mxu0 %v735
        %4859 = vmatprep.subr.mxu0 0.0
        %4860 = vmatpush1.msra.mxu0 %v734
        %4861 = vmatprep.subr.mxu0 0.0
        %4862 = vmatpush1.msra.mxu0 %v733
        %4863 = vmatprep.subr.mxu0 0.0
        %4864 = vmatpush1.msra.mxu0 %v732
        %4865 = vmatprep.subr.mxu0 0.0
        %4866 = vmatpush1.msra.mxu0 %v731
        %4867 = vmatprep.subr.mxu0 0.0
        %4868 = vmatpush1.msra.mxu0 %v730
        %4869 = vmatprep.subr.mxu0 0.0
        %4870 = vmatpush1.msra.mxu0 %v729
        %4871 = vmatprep.subr.mxu0 0.0
        %4872 = vmatpush1.msra.mxu0 %v728
        %4873 = vmatprep.subr.mxu0 0.0
        %4874 = vmatpush1.msra.mxu0 %v727
        %4875 = vmatprep.subr.mxu0 0.0
        %4876 = vmatpush1.msra.mxu0 %v726
        %4877 = vmatprep.subr.mxu0 0.0
        %4878 = vmatpush1.msra.mxu0 %v725
        %4879 = vmatprep.subr.mxu0 0.0
        %4880 = vmatpush1.msra.mxu0 %v724
        %4881 = vmatprep.subr.mxu0 0.0
        %4882 = vmatpush1.msra.mxu0 %v723
        %4883 = vmatprep.subr.mxu0 0.0
        %4884 = vmatpush1.msra.mxu0 %v722
        %4885 = vmatprep.subr.mxu0 0.0
        %4886 = vmatpush1.msra.mxu0 %v721
        %4887 = vmatprep.subr.mxu0 0.0
        %4888 = vmatpush2.msra.mxu0 0.0
        %4889 = vmatprep.subr.mxu0 0.0
        %4890 = vmatpush2.msra.mxu0 0.0
        %4891 = vmatprep.subr.mxu0 0.0
        %4892 = vmatpush2.msra.mxu0 0.0
        %4893 = vmatprep.subr.mxu0 0.0
        %4894 = vmatpush2.msra.mxu0 0.0
        %4895 = vmatprep.subr.mxu0 0.0
        %4896 = vmatpush2.msra.mxu0 0.0
        %4897 = vmatprep.subr.mxu0 0.0
        %4898 = vmatpush2.msra.mxu0 0.0
        %4899 = vmatprep.subr.mxu0 0.0
        %4900 = vmatpush2.msra.mxu0 0.0
        %4901 = vmatprep.subr.mxu0 0.0
        %4902 = vmatpush2.msra.mxu0 0.0
        %4903 = vmatprep.subr.mxu0 0.0
        %4904 = vmatpush2.msra.mxu0 0.0
        %4905 = vmatprep.subr.mxu0 0.0
        %4906 = vmatpush2.msra.mxu0 0.0
        %4907 = vmatprep.subr.mxu0 0.0
        %4908 = vmatpush2.msra.mxu0 0.0
        %4909 = vmatprep.subr.mxu0 0.0
        %4910 = vmatpush2.msra.mxu0 0.0
        %4911 = vmatprep.subr.mxu0 0.0
        %4912 = vmatpush2.msra.mxu0 0.0
        %4913 = vmatprep.subr.mxu0 0.0
        %4914 = vmatpush2.msra.mxu0 0.0
        %4915 = vmatprep.subr.mxu0 0.0
        %4916 = vmatpush2.msra.mxu0 0.0
        %4917 = vmatprep.subr.mxu0 0.0
        %4918 = vmatpush2.msra.mxu0 0.0
        %4919 = vmatprep.mubr.f32.mxu0 0.0
        %4920 = vmatmul.mubr.f32.gmra.mxu0 %v4287
        %v4921 = vpop.f32.mrf.mxu0
        %v4922 = vadd.f32 0.0, %v4921
        %v4923 = vpop.f32.mrf.mxu0
        %4924 = vdwg.mxu0
        %4926 = vmatprep.subr.mxu0 0.0
        %4927 = vmatpush1.msra.mxu0 %v752
        %4928 = vmatprep.subr.mxu0 0.0
        %4929 = vmatpush1.msra.mxu0 %v751
        %4930 = vmatprep.subr.mxu0 0.0
        %4931 = vmatpush1.msra.mxu0 %v750
        %4932 = vmatprep.subr.mxu0 0.0
        %4933 = vmatpush1.msra.mxu0 %v749
        %4934 = vmatprep.subr.mxu0 0.0
        %4935 = vmatpush1.msra.mxu0 %v748
        %4936 = vmatprep.subr.mxu0 0.0
        %4937 = vmatpush1.msra.mxu0 %v747
        %4938 = vmatprep.subr.mxu0 0.0
        %4939 = vmatpush1.msra.mxu0 %v746
        %4940 = vmatprep.subr.mxu0 0.0
        %4941 = vmatpush1.msra.mxu0 %v745
        %4942 = vmatprep.subr.mxu0 0.0
        %4943 = vmatpush1.msra.mxu0 %v744
        %4944 = vmatprep.subr.mxu0 0.0
        %4945 = vmatpush1.msra.mxu0 %v743
        %4946 = vmatprep.subr.mxu0 0.0
        %4947 = vmatpush1.msra.mxu0 %v742
        %4948 = vmatprep.subr.mxu0 0.0
        %4949 = vmatpush1.msra.mxu0 %v741
        %4950 = vmatprep.subr.mxu0 0.0
        %4951 = vmatpush1.msra.mxu0 %v740
        %4952 = vmatprep.subr.mxu0 0.0
        %4953 = vmatpush1.msra.mxu0 %v739
        %4954 = vmatprep.subr.mxu0 0.0
        %4955 = vmatpush1.msra.mxu0 %v738
        %4956 = vmatprep.subr.mxu0 0.0
        %4957 = vmatpush1.msra.mxu0 %v737
        %4958 = vmatprep.subr.mxu0 0.0
        %4959 = vmatpush2.msra.mxu0 0.0
        %4960 = vmatprep.subr.mxu0 0.0
        %4961 = vmatpush2.msra.mxu0 0.0
        %4962 = vmatprep.subr.mxu0 0.0
        %4963 = vmatpush2.msra.mxu0 0.0
        %4964 = vmatprep.subr.mxu0 0.0
        %4965 = vmatpush2.msra.mxu0 0.0
        %4966 = vmatprep.subr.mxu0 0.0
        %4967 = vmatpush2.msra.mxu0 0.0
        %4968 = vmatprep.subr.mxu0 0.0
        %4969 = vmatpush2.msra.mxu0 0.0
        %4970 = vmatprep.subr.mxu0 0.0
        %4971 = vmatpush2.msra.mxu0 0.0
        %4972 = vmatprep.subr.mxu0 0.0
        %4973 = vmatpush2.msra.mxu0 0.0
        %4974 = vmatprep.subr.mxu0 0.0
        %4975 = vmatpush2.msra.mxu0 0.0
        %4976 = vmatprep.subr.mxu0 0.0
        %4977 = vmatpush2.msra.mxu0 0.0
        %4978 = vmatprep.subr.mxu0 0.0
        %4979 = vmatpush2.msra.mxu0 0.0
        %4980 = vmatprep.subr.mxu0 0.0
        %4981 = vmatpush2.msra.mxu0 0.0
        %4982 = vmatprep.subr.mxu0 0.0
        %4983 = vmatpush2.msra.mxu0 0.0
        %4984 = vmatprep.subr.mxu0 0.0
        %4985 = vmatpush2.msra.mxu0 0.0
        %4986 = vmatprep.subr.mxu0 0.0
        %4987 = vmatpush2.msra.mxu0 0.0
        %4988 = vmatprep.subr.mxu0 0.0
        %4989 = vmatpush2.msra.mxu0 0.0
        %4990 = vmatprep.mubr.f32.mxu0 0.0
        %4991 = vmatmul.mubr.f32.gmra.mxu0 %v4366
        %v4992 = vpop.f32.mrf.mxu0
        %v4993 = vadd.f32 0.0, %v4992
        %v4994 = vpop.f32.mrf.mxu0
        %4995 = vdwg.mxu0
        %4997 = vmatprep.subr.mxu0 0.0
        %4998 = vmatpush1.msra.mxu0 %v768
        %4999 = vmatprep.subr.mxu0 0.0
        %5000 = vmatpush1.msra.mxu0 %v767
        %5001 = vmatprep.subr.mxu0 0.0
        %5002 = vmatpush1.msra.mxu0 %v766
        %5003 = vmatprep.subr.mxu0 0.0
        %5004 = vmatpush1.msra.mxu0 %v765
        %5005 = vmatprep.subr.mxu0 0.0
        %5006 = vmatpush1.msra.mxu0 %v764
        %5007 = vmatprep.subr.mxu0 0.0
        %5008 = vmatpush1.msra.mxu0 %v763
        %5009 = vmatprep.subr.mxu0 0.0
        %5010 = vmatpush1.msra.mxu0 %v762
        %5011 = vmatprep.subr.mxu0 0.0
        %5012 = vmatpush1.msra.mxu0 %v761
        %5013 = vmatprep.subr.mxu0 0.0
        %5014 = vmatpush1.msra.mxu0 %v760
        %5015 = vmatprep.subr.mxu0 0.0
        %5016 = vmatpush1.msra.mxu0 %v759
        %5017 = vmatprep.subr.mxu0 0.0
        %5018 = vmatpush1.msra.mxu0 %v758
        %5019 = vmatprep.subr.mxu0 0.0
        %5020 = vmatpush1.msra.mxu0 %v757
        %5021 = vmatprep.subr.mxu0 0.0
        %5022 = vmatpush1.msra.mxu0 %v756
        %5023 = vmatprep.subr.mxu0 0.0
        %5024 = vmatpush1.msra.mxu0 %v755
        %5025 = vmatprep.subr.mxu0 0.0
        %5026 = vmatpush1.msra.mxu0 %v754
        %5027 = vmatprep.subr.mxu0 0.0
        %5028 = vmatpush1.msra.mxu0 %v753
        %5029 = vmatprep.subr.mxu0 0.0
        %5030 = vmatpush2.msra.mxu0 0.0
        %5031 = vmatprep.subr.mxu0 0.0
        %5032 = vmatpush2.msra.mxu0 0.0
        %5033 = vmatprep.subr.mxu0 0.0
        %5034 = vmatpush2.msra.mxu0 0.0
        %5035 = vmatprep.subr.mxu0 0.0
        %5036 = vmatpush2.msra.mxu0 0.0
        %5037 = vmatprep.subr.mxu0 0.0
        %5038 = vmatpush2.msra.mxu0 0.0
        %5039 = vmatprep.subr.mxu0 0.0
        %5040 = vmatpush2.msra.mxu0 0.0
        %5041 = vmatprep.subr.mxu0 0.0
        %5042 = vmatpush2.msra.mxu0 0.0
        %5043 = vmatprep.subr.mxu0 0.0
        %5044 = vmatpush2.msra.mxu0 0.0
        %5045 = vmatprep.subr.mxu0 0.0
        %5046 = vmatpush2.msra.mxu0 0.0
        %5047 = vmatprep.subr.mxu0 0.0
        %5048 = vmatpush2.msra.mxu0 0.0
        %5049 = vmatprep.subr.mxu0 0.0
        %5050 = vmatpush2.msra.mxu0 0.0
        %5051 = vmatprep.subr.mxu0 0.0
        %5052 = vmatpush2.msra.mxu0 0.0
        %5053 = vmatprep.subr.mxu0 0.0
        %5054 = vmatpush2.msra.mxu0 0.0
        %5055 = vmatprep.subr.mxu0 0.0
        %5056 = vmatpush2.msra.mxu0 0.0
        %5057 = vmatprep.subr.mxu0 0.0
        %5058 = vmatpush2.msra.mxu0 0.0
        %5059 = vmatprep.subr.mxu0 0.0
        %5060 = vmatpush2.msra.mxu0 0.0
        %5061 = vmatprep.mubr.f32.mxu0 0.0
        %5062 = vmatmul.mubr.f32.gmra.mxu0 %v4445
        %v5063 = vpop.f32.mrf.mxu0
        %v5064 = vadd.f32 0.0, %v5063
        %v5065 = vpop.f32.mrf.mxu0
        %5066 = vdwg.mxu0
        %5068 = vmatprep.subr.mxu0 0.0
        %5069 = vmatpush1.msra.mxu0 %v784
        %5070 = vmatprep.subr.mxu0 0.0
        %5071 = vmatpush1.msra.mxu0 %v783
        %5072 = vmatprep.subr.mxu0 0.0
        %5073 = vmatpush1.msra.mxu0 %v782
        %5074 = vmatprep.subr.mxu0 0.0
        %5075 = vmatpush1.msra.mxu0 %v781
        %5076 = vmatprep.subr.mxu0 0.0
        %5077 = vmatpush1.msra.mxu0 %v780
        %5078 = vmatprep.subr.mxu0 0.0
        %5079 = vmatpush1.msra.mxu0 %v779
        %5080 = vmatprep.subr.mxu0 0.0
        %5081 = vmatpush1.msra.mxu0 %v778
        %5082 = vmatprep.subr.mxu0 0.0
        %5083 = vmatpush1.msra.mxu0 %v777
        %5084 = vmatprep.subr.mxu0 0.0
        %5085 = vmatpush1.msra.mxu0 %v776
        %5086 = vmatprep.subr.mxu0 0.0
        %5087 = vmatpush1.msra.mxu0 %v775
        %5088 = vmatprep.subr.mxu0 0.0
        %5089 = vmatpush1.msra.mxu0 %v774
        %5090 = vmatprep.subr.mxu0 0.0
        %5091 = vmatpush1.msra.mxu0 %v773
        %5092 = vmatprep.subr.mxu0 0.0
        %5093 = vmatpush1.msra.mxu0 %v772
        %5094 = vmatprep.subr.mxu0 0.0
        %5095 = vmatpush1.msra.mxu0 %v771
        %5096 = vmatprep.subr.mxu0 0.0
        %5097 = vmatpush1.msra.mxu0 %v770
        %5098 = vmatprep.subr.mxu0 0.0
        %5099 = vmatpush1.msra.mxu0 %v769
        %5100 = vmatprep.subr.mxu0 0.0
        %5101 = vmatpush2.msra.mxu0 0.0
        %5102 = vmatprep.subr.mxu0 0.0
        %5103 = vmatpush2.msra.mxu0 0.0
        %5104 = vmatprep.subr.mxu0 0.0
        %5105 = vmatpush2.msra.mxu0 0.0
        %5106 = vmatprep.subr.mxu0 0.0
        %5107 = vmatpush2.msra.mxu0 0.0
        %5108 = vmatprep.subr.mxu0 0.0
        %5109 = vmatpush2.msra.mxu0 0.0
        %5110 = vmatprep.subr.mxu0 0.0
        %5111 = vmatpush2.msra.mxu0 0.0
        %5112 = vmatprep.subr.mxu0 0.0
        %5113 = vmatpush2.msra.mxu0 0.0
        %5114 = vmatprep.subr.mxu0 0.0
        %5115 = vmatpush2.msra.mxu0 0.0
        %5116 = vmatprep.subr.mxu0 0.0
        %5117 = vmatpush2.msra.mxu0 0.0
        %5118 = vmatprep.subr.mxu0 0.0
        %5119 = vmatpush2.msra.mxu0 0.0
        %5120 = vmatprep.subr.mxu0 0.0
        %5121 = vmatpush2.msra.mxu0 0.0
        %5122 = vmatprep.subr.mxu0 0.0
        %5123 = vmatpush2.msra.mxu0 0.0
        %5124 = vmatprep.subr.mxu0 0.0
        %5125 = vmatpush2.msra.mxu0 0.0
        %5126 = vmatprep.subr.mxu0 0.0
        %5127 = vmatpush2.msra.mxu0 0.0
        %5128 = vmatprep.subr.mxu0 0.0
        %5129 = vmatpush2.msra.mxu0 0.0
        %5130 = vmatprep.subr.mxu0 0.0
        %5131 = vmatpush2.msra.mxu0 0.0
        %5132 = vmatprep.mubr.f32.mxu0 0.0
        %5133 = vmatmul.mubr.f32.gmra.mxu0 %v4524
        %v5134 = vpop.f32.mrf.mxu0
        %v5135 = vadd.f32 0.0, %v5134
        %v5136 = vpop.f32.mrf.mxu0
        %5137 = vdwg.mxu0
        %5139 = vmatprep.subr.mxu0 0.0
        %5140 = vmatpush1.msra.mxu0 %v800
        %5141 = vmatprep.subr.mxu0 0.0
        %5142 = vmatpush1.msra.mxu0 %v799
        %5143 = vmatprep.subr.mxu0 0.0
        %5144 = vmatpush1.msra.mxu0 %v798
        %5145 = vmatprep.subr.mxu0 0.0
        %5146 = vmatpush1.msra.mxu0 %v797
        %5147 = vmatprep.subr.mxu0 0.0
        %5148 = vmatpush1.msra.mxu0 %v796
        %5149 = vmatprep.subr.mxu0 0.0
        %5150 = vmatpush1.msra.mxu0 %v795
        %5151 = vmatprep.subr.mxu0 0.0
        %5152 = vmatpush1.msra.mxu0 %v794
        %5153 = vmatprep.subr.mxu0 0.0
        %5154 = vmatpush1.msra.mxu0 %v793
        %5155 = vmatprep.subr.mxu0 0.0
        %5156 = vmatpush1.msra.mxu0 %v792
        %5157 = vmatprep.subr.mxu0 0.0
        %5158 = vmatpush1.msra.mxu0 %v791
        %5159 = vmatprep.subr.mxu0 0.0
        %5160 = vmatpush1.msra.mxu0 %v790
        %5161 = vmatprep.subr.mxu0 0.0
        %5162 = vmatpush1.msra.mxu0 %v789
        %5163 = vmatprep.subr.mxu0 0.0
        %5164 = vmatpush1.msra.mxu0 %v788
        %5165 = vmatprep.subr.mxu0 0.0
        %5166 = vmatpush1.msra.mxu0 %v787
        %5167 = vmatprep.subr.mxu0 0.0
        %5168 = vmatpush1.msra.mxu0 %v786
        %5169 = vmatprep.subr.mxu0 0.0
        %5170 = vmatpush1.msra.mxu0 %v785
        %5171 = vmatprep.subr.mxu0 0.0
        %5172 = vmatpush2.msra.mxu0 0.0
        %5173 = vmatprep.subr.mxu0 0.0
        %5174 = vmatpush2.msra.mxu0 0.0
        %5175 = vmatprep.subr.mxu0 0.0
        %5176 = vmatpush2.msra.mxu0 0.0
        %5177 = vmatprep.subr.mxu0 0.0
        %5178 = vmatpush2.msra.mxu0 0.0
        %5179 = vmatprep.subr.mxu0 0.0
        %5180 = vmatpush2.msra.mxu0 0.0
        %5181 = vmatprep.subr.mxu0 0.0
        %5182 = vmatpush2.msra.mxu0 0.0
        %5183 = vmatprep.subr.mxu0 0.0
        %5184 = vmatpush2.msra.mxu0 0.0
        %5185 = vmatprep.subr.mxu0 0.0
        %5186 = vmatpush2.msra.mxu0 0.0
        %5187 = vmatprep.subr.mxu0 0.0
        %5188 = vmatpush2.msra.mxu0 0.0
        %5189 = vmatprep.subr.mxu0 0.0
        %5190 = vmatpush2.msra.mxu0 0.0
        %5191 = vmatprep.subr.mxu0 0.0
        %5192 = vmatpush2.msra.mxu0 0.0
        %5193 = vmatprep.subr.mxu0 0.0
        %5194 = vmatpush2.msra.mxu0 0.0
        %5195 = vmatprep.subr.mxu0 0.0
        %5196 = vmatpush2.msra.mxu0 0.0
        %5197 = vmatprep.subr.mxu0 0.0
        %5198 = vmatpush2.msra.mxu0 0.0
        %5199 = vmatprep.subr.mxu0 0.0
        %5200 = vmatpush2.msra.mxu0 0.0
        %5201 = vmatprep.subr.mxu0 0.0
        %5202 = vmatpush2.msra.mxu0 0.0
        %5203 = vmatprep.mubr.f32.mxu0 0.0
        %5204 = vmatmul.mubr.f32.gmra.mxu0 %v4603
        %v5205 = vpop.f32.mrf.mxu0
        %v5206 = vadd.f32 0.0, %v5205
        %v5207 = vpop.f32.mrf.mxu0
        %5208 = vdwg.mxu0
        %5210 = vmatprep.subr.mxu0 0.0
        %5211 = vmatpush1.msra.mxu0 %v816
        %5212 = vmatprep.subr.mxu0 0.0
        %5213 = vmatpush1.msra.mxu0 %v815
        %5214 = vmatprep.subr.mxu0 0.0
        %5215 = vmatpush1.msra.mxu0 %v814
        %5216 = vmatprep.subr.mxu0 0.0
        %5217 = vmatpush1.msra.mxu0 %v813
        %5218 = vmatprep.subr.mxu0 0.0
        %5219 = vmatpush1.msra.mxu0 %v812
        %5220 = vmatprep.subr.mxu0 0.0
        %5221 = vmatpush1.msra.mxu0 %v811
        %5222 = vmatprep.subr.mxu0 0.0
        %5223 = vmatpush1.msra.mxu0 %v810
        %5224 = vmatprep.subr.mxu0 0.0
        %5225 = vmatpush1.msra.mxu0 %v809
        %5226 = vmatprep.subr.mxu0 0.0
        %5227 = vmatpush1.msra.mxu0 %v808
        %5228 = vmatprep.subr.mxu0 0.0
        %5229 = vmatpush1.msra.mxu0 %v807
        %5230 = vmatprep.subr.mxu0 0.0
        %5231 = vmatpush1.msra.mxu0 %v806
        %5232 = vmatprep.subr.mxu0 0.0
        %5233 = vmatpush1.msra.mxu0 %v805
        %5234 = vmatprep.subr.mxu0 0.0
        %5235 = vmatpush1.msra.mxu0 %v804
        %5236 = vmatprep.subr.mxu0 0.0
        %5237 = vmatpush1.msra.mxu0 %v803
        %5238 = vmatprep.subr.mxu0 0.0
        %5239 = vmatpush1.msra.mxu0 %v802
        %5240 = vmatprep.subr.mxu0 0.0
        %5241 = vmatpush1.msra.mxu0 %v801
        %5242 = vmatprep.subr.mxu0 0.0
        %5243 = vmatpush2.msra.mxu0 0.0
        %5244 = vmatprep.subr.mxu0 0.0
        %5245 = vmatpush2.msra.mxu0 0.0
        %5246 = vmatprep.subr.mxu0 0.0
        %5247 = vmatpush2.msra.mxu0 0.0
        %5248 = vmatprep.subr.mxu0 0.0
        %5249 = vmatpush2.msra.mxu0 0.0
        %5250 = vmatprep.subr.mxu0 0.0
        %5251 = vmatpush2.msra.mxu0 0.0
        %5252 = vmatprep.subr.mxu0 0.0
        %5253 = vmatpush2.msra.mxu0 0.0
        %5254 = vmatprep.subr.mxu0 0.0
        %5255 = vmatpush2.msra.mxu0 0.0
        %5256 = vmatprep.subr.mxu0 0.0
        %5257 = vmatpush2.msra.mxu0 0.0
        %5258 = vmatprep.subr.mxu0 0.0
        %5259 = vmatpush2.msra.mxu0 0.0
        %5260 = vmatprep.subr.mxu0 0.0
        %5261 = vmatpush2.msra.mxu0 0.0
        %5262 = vmatprep.subr.mxu0 0.0
        %5263 = vmatpush2.msra.mxu0 0.0
        %5264 = vmatprep.subr.mxu0 0.0
        %5265 = vmatpush2.msra.mxu0 0.0
        %5266 = vmatprep.subr.mxu0 0.0
        %5267 = vmatpush2.msra.mxu0 0.0
        %5268 = vmatprep.subr.mxu0 0.0
        %5269 = vmatpush2.msra.mxu0 0.0
        %5270 = vmatprep.subr.mxu0 0.0
        %5271 = vmatpush2.msra.mxu0 0.0
        %5272 = vmatprep.subr.mxu0 0.0
        %5273 = vmatpush2.msra.mxu0 0.0
        %5274 = vmatprep.mubr.f32.mxu0 0.0
        %5275 = vmatmul.mubr.f32.gmra.mxu0 %v4682
        %v5276 = vpop.f32.mrf.mxu0
        %v5277 = vadd.f32 0.0, %v5276
        %v5278 = vpop.f32.mrf.mxu0
        %5279 = vdwg.mxu0
        %5281 = vmatprep.subr.mxu0 0.0
        %5282 = vmatpush1.msra.mxu0 %v832
        %5283 = vmatprep.subr.mxu0 0.0
        %5284 = vmatpush1.msra.mxu0 %v831
        %5285 = vmatprep.subr.mxu0 0.0
        %5286 = vmatpush1.msra.mxu0 %v830
        %5287 = vmatprep.subr.mxu0 0.0
        %5288 = vmatpush1.msra.mxu0 %v829
        %5289 = vmatprep.subr.mxu0 0.0
        %5290 = vmatpush1.msra.mxu0 %v828
        %5291 = vmatprep.subr.mxu0 0.0
        %5292 = vmatpush1.msra.mxu0 %v827
        %5293 = vmatprep.subr.mxu0 0.0
        %5294 = vmatpush1.msra.mxu0 %v826
        %5295 = vmatprep.subr.mxu0 0.0
        %5296 = vmatpush1.msra.mxu0 %v825
        %5297 = vmatprep.subr.mxu0 0.0
        %5298 = vmatpush1.msra.mxu0 %v824
        %5299 = vmatprep.subr.mxu0 0.0
        %5300 = vmatpush1.msra.mxu0 %v823
        %5301 = vmatprep.subr.mxu0 0.0
        %5302 = vmatpush1.msra.mxu0 %v822
        %5303 = vmatprep.subr.mxu0 0.0
        %5304 = vmatpush1.msra.mxu0 %v821
        %5305 = vmatprep.subr.mxu0 0.0
        %5306 = vmatpush1.msra.mxu0 %v820
        %5307 = vmatprep.subr.mxu0 0.0
        %5308 = vmatpush1.msra.mxu0 %v819
        %5309 = vmatprep.subr.mxu0 0.0
        %5310 = vmatpush1.msra.mxu0 %v818
        %5311 = vmatprep.subr.mxu0 0.0
        %5312 = vmatpush1.msra.mxu0 %v817
        %5313 = vmatprep.subr.mxu0 0.0
        %5314 = vmatpush2.msra.mxu0 0.0
        %5315 = vmatprep.subr.mxu0 0.0
        %5316 = vmatpush2.msra.mxu0 0.0
        %5317 = vmatprep.subr.mxu0 0.0
        %5318 = vmatpush2.msra.mxu0 0.0
        %5319 = vmatprep.subr.mxu0 0.0
        %5320 = vmatpush2.msra.mxu0 0.0
        %5321 = vmatprep.subr.mxu0 0.0
        %5322 = vmatpush2.msra.mxu0 0.0
        %5323 = vmatprep.subr.mxu0 0.0
        %5324 = vmatpush2.msra.mxu0 0.0
        %5325 = vmatprep.subr.mxu0 0.0
        %5326 = vmatpush2.msra.mxu0 0.0
        %5327 = vmatprep.subr.mxu0 0.0
        %5328 = vmatpush2.msra.mxu0 0.0
        %5329 = vmatprep.subr.mxu0 0.0
        %5330 = vmatpush2.msra.mxu0 0.0
        %5331 = vmatprep.subr.mxu0 0.0
        %5332 = vmatpush2.msra.mxu0 0.0
        %5333 = vmatprep.subr.mxu0 0.0
        %5334 = vmatpush2.msra.mxu0 0.0
        %5335 = vmatprep.subr.mxu0 0.0
        %5336 = vmatpush2.msra.mxu0 0.0
        %5337 = vmatprep.subr.mxu0 0.0
        %5338 = vmatpush2.msra.mxu0 0.0
        %5339 = vmatprep.subr.mxu0 0.0
        %5340 = vmatpush2.msra.mxu0 0.0
        %5341 = vmatprep.subr.mxu0 0.0
        %5342 = vmatpush2.msra.mxu0 0.0
        %5343 = vmatprep.subr.mxu0 0.0
        %5344 = vmatpush2.msra.mxu0 0.0
        %5345 = vmatprep.mubr.f32.mxu0 0.0
        %5346 = vmatmul.mubr.f32.gmra.mxu0 %v4761
        %v5347 = vpop.f32.mrf.mxu0
        %v5348 = vadd.f32 0.0, %v5347
        %v5349 = vpop.f32.mrf.mxu0
        %5350 = vdwg.mxu0
        %5352 = vmatprep.subr.mxu0 0.0
        %5353 = vmatpush1.msra.mxu0 %v848
        %5354 = vmatprep.subr.mxu0 0.0
        %5355 = vmatpush1.msra.mxu0 %v847
        %5356 = vmatprep.subr.mxu0 0.0
        %5357 = vmatpush1.msra.mxu0 %v846
        %5358 = vmatprep.subr.mxu0 0.0
        %5359 = vmatpush1.msra.mxu0 %v845
        %5360 = vmatprep.subr.mxu0 0.0
        %5361 = vmatpush1.msra.mxu0 %v844
        %5362 = vmatprep.subr.mxu0 0.0
        %5363 = vmatpush1.msra.mxu0 %v843
        %5364 = vmatprep.subr.mxu0 0.0
        %5365 = vmatpush1.msra.mxu0 %v842
        %5366 = vmatprep.subr.mxu0 0.0
        %5367 = vmatpush1.msra.mxu0 %v841
        %5368 = vmatprep.subr.mxu0 0.0
        %5369 = vmatpush1.msra.mxu0 %v840
        %5370 = vmatprep.subr.mxu0 0.0
        %5371 = vmatpush1.msra.mxu0 %v839
        %5372 = vmatprep.subr.mxu0 0.0
        %5373 = vmatpush1.msra.mxu0 %v838
        %5374 = vmatprep.subr.mxu0 0.0
        %5375 = vmatpush1.msra.mxu0 %v837
        %5376 = vmatprep.subr.mxu0 0.0
        %5377 = vmatpush1.msra.mxu0 %v836
        %5378 = vmatprep.subr.mxu0 0.0
        %5379 = vmatpush1.msra.mxu0 %v835
        %5380 = vmatprep.subr.mxu0 0.0
        %5381 = vmatpush1.msra.mxu0 %v834
        %5382 = vmatprep.subr.mxu0 0.0
        %5383 = vmatpush1.msra.mxu0 %v833
        %5384 = vmatprep.subr.mxu0 0.0
        %5385 = vmatpush2.msra.mxu0 0.0
        %5386 = vmatprep.subr.mxu0 0.0
        %5387 = vmatpush2.msra.mxu0 0.0
        %5388 = vmatprep.subr.mxu0 0.0
        %5389 = vmatpush2.msra.mxu0 0.0
        %5390 = vmatprep.subr.mxu0 0.0
        %5391 = vmatpush2.msra.mxu0 0.0
        %5392 = vmatprep.subr.mxu0 0.0
        %5393 = vmatpush2.msra.mxu0 0.0
        %5394 = vmatprep.subr.mxu0 0.0
        %5395 = vmatpush2.msra.mxu0 0.0
        %5396 = vmatprep.subr.mxu0 0.0
        %5397 = vmatpush2.msra.mxu0 0.0
        %5398 = vmatprep.subr.mxu0 0.0
        %5399 = vmatpush2.msra.mxu0 0.0
        %5400 = vmatprep.subr.mxu0 0.0
        %5401 = vmatpush2.msra.mxu0 0.0
        %5402 = vmatprep.subr.mxu0 0.0
        %5403 = vmatpush2.msra.mxu0 0.0
        %5404 = vmatprep.subr.mxu0 0.0
        %5405 = vmatpush2.msra.mxu0 0.0
        %5406 = vmatprep.subr.mxu0 0.0
        %5407 = vmatpush2.msra.mxu0 0.0
        %5408 = vmatprep.subr.mxu0 0.0
        %5409 = vmatpush2.msra.mxu0 0.0
        %5410 = vmatprep.subr.mxu0 0.0
        %5411 = vmatpush2.msra.mxu0 0.0
        %5412 = vmatprep.subr.mxu0 0.0
        %5413 = vmatpush2.msra.mxu0 0.0
        %5414 = vmatprep.subr.mxu0 0.0
        %5415 = vmatpush2.msra.mxu0 0.0
        %5416 = vmatprep.mubr.f32.mxu0 0.0
        %5417 = vmatmul.mubr.f32.gmra.mxu0 %v4840
        %v5418 = vpop.f32.mrf.mxu0
        %v5419 = vadd.f32 0.0, %v5418
        %v5420 = vpop.f32.mrf.mxu0
        %5421 = vdwg.mxu0
        %v5422 = vld [vmem:[#allocation4] sm:$0xff]
        %5424 = vset.pattern.permute.xlu0 0
        %5425 = vperm.xlu0 %5424, %v3266
        %v5426 = vpop.permute.xlu0 %5425
        %v5428 = vmul.f32 %v5426, %v5422
        %v5437 = vrot.slane %v4993, 7
        %v5438 = vsel %vm3246, %v5437, %v4922
        %v5439 = vrot.slane %v5064, 6
        %v5440 = vsel %vm3248, %v5439, %v5438
        %v5441 = vrot.slane %v5135, 5
        %v5442 = vsel %vm3250, %v5441, %v5440
        %v5443 = vrot.slane %v5206, 4
        %v5444 = vsel %vm3252, %v5443, %v5442
        %v5445 = vrot.slane %v5277, 3
        %v5446 = vsel %vm3254, %v5445, %v5444
        %v5447 = vrot.slane %v5348, 2
        %v5448 = vsel %vm3256, %v5447, %v5446
        %v5449 = vrot.slane %v5419, 1
        %v5450 = vsel %vm3258, %v5449, %v5448
        %v5452 = vadd.f32 %v5428, %v5450
        %5453 = vst [vmem:[#allocation4] sm:$0xff] %v5452
        %5454 = vst.msk [vmem:[#allocation2] sm:$0xff] %vm4852, %v3263
        %p5455 = scmp.eq.s32.totalorder %s50, 1
        // Predicated region
        $region109: #{tpu_custom_call.1} parent=63 // pred_check
          %p5456 = pneg %p5455
        $region110: #{tpu_custom_call.1} parent=63 // pred_check_branch
          %5458 = sbr.rel (%p5456) target = $region112
        $region111: #{tpu_custom_call.1} parent=63 // pred_region
          %v5459 = vld [vmem:[#allocation3] sm:$0xff]
          %v5460 = vrcp.pop %v5459
          %v5461 = vmul.f32 %v5459, %v5460
          %v5462 = vsub.f32 2.0, %v5461
          %v5463 = vmul.f32 %v5460, %v5462
          %v5464 = vmul.f32 %v5459, %v5463
          %v5465 = vsub.f32 2.0, %v5464
          %v5466 = vmul.f32 %v5463, %v5465
          %v5467 = vld [vmem:[#allocation4] sm:$0xff]
          %5469 = vset.pattern.permute.xlu0 0
          %5470 = vperm.xlu0 %5469, %v5466
          %v5471 = vpop.permute.xlu0 %5470
          %v5473 = vmul.f32 %v5467, %v5471
          %v5474 = vld [vmem:[%s619] sm:$0xff]
          %v5475 = vld [vmem:[%s619 + $0x8] sm:$0xff]
          %v5476 = vld [vmem:[%s619 + $0x10] sm:$0xff]
          %v5477 = vld [vmem:[%s619 + $0x18] sm:$0xff]
          %v5478 = vld [vmem:[#allocation18] sm:$0xff]
          %v5479 = vld [vmem:[#allocation18 + $0x8] sm:$0xff]
          %v5480 = vld [vmem:[#allocation18 + $0x10] sm:$0xff]
          %v5481 = vld [vmem:[#allocation18 + $0x18] sm:$0xff]
          %v5482 = vld [vmem:[#allocation18 + $0x20] sm:$0xff]
          %v5483 = vld [vmem:[#allocation18 + $0x28] sm:$0xff]
          %v5484 = vld [vmem:[#allocation18 + $0x30] sm:$0xff]
          %v5485 = vld [vmem:[#allocation18 + $0x38] sm:$0xff]
          %v5486 = vld [vmem:[#allocation18 + $0x40] sm:$0xff]
          %v5487 = vld [vmem:[#allocation18 + $0x48] sm:$0xff]
          %v5488 = vld [vmem:[#allocation18 + $0x50] sm:$0xff]
          %v5489 = vld [vmem:[#allocation18 + $0x58] sm:$0xff]
          %v5490 = vld [vmem:[#allocation18 + $0x60] sm:$0xff]
          %v5491 = vld [vmem:[#allocation18 + $0x68] sm:$0xff]
          %v5492 = vld [vmem:[#allocation18 + $0x70] sm:$0xff]
          %v5493 = vld [vmem:[#allocation18 + $0x78] sm:$0xff]
          %v5494 = vld [vmem:[#allocation18 + $0x80] sm:$0xff]
          %v5495 = vld [vmem:[#allocation18 + $0x88] sm:$0xff]
          %v5496 = vld [vmem:[#allocation18 + $0x90] sm:$0xff]
          %v5497 = vld [vmem:[#allocation18 + $0x98] sm:$0xff]
          %v5498 = vld [vmem:[#allocation18 + $0xa0] sm:$0xff]
          %v5499 = vld [vmem:[#allocation18 + $0xa8] sm:$0xff]
          %v5500 = vld [vmem:[#allocation18 + $0xb0] sm:$0xff]
          %v5501 = vld [vmem:[#allocation18 + $0xb8] sm:$0xff]
          %v5502 = vld [vmem:[#allocation18 + $0xc0] sm:$0xff]
          %v5503 = vld [vmem:[#allocation18 + $0xc8] sm:$0xff]
          %v5504 = vld [vmem:[#allocation18 + $0xd0] sm:$0xff]
          %v5505 = vld [vmem:[#allocation18 + $0xd8] sm:$0xff]
          %v5506 = vld [vmem:[#allocation18 + $0xe0] sm:$0xff]
          %v5507 = vld [vmem:[#allocation18 + $0xe8] sm:$0xff]
          %v5508 = vld [vmem:[#allocation18 + $0xf0] sm:$0xff]
          %v5509 = vld [vmem:[#allocation18 + $0xf8] sm:$0xff]
          %v5510 = vld [vmem:[#allocation18 + $0x100] sm:$0xff]
          %v5511 = vld [vmem:[#allocation18 + $0x108] sm:$0xff]
          %v5512 = vld [vmem:[#allocation18 + $0x110] sm:$0xff]
          %v5513 = vld [vmem:[#allocation18 + $0x118] sm:$0xff]
          %v5514 = vld [vmem:[#allocation18 + $0x120] sm:$0xff]
          %v5515 = vld [vmem:[#allocation18 + $0x128] sm:$0xff]
          %v5516 = vld [vmem:[#allocation18 + $0x130] sm:$0xff]
          %v5517 = vld [vmem:[#allocation18 + $0x138] sm:$0xff]
          %v5518 = vld [vmem:[#allocation18 + $0x140] sm:$0xff]
          %v5519 = vld [vmem:[#allocation18 + $0x148] sm:$0xff]
          %v5520 = vld [vmem:[#allocation18 + $0x150] sm:$0xff]
          %v5521 = vld [vmem:[#allocation18 + $0x158] sm:$0xff]
          %v5522 = vld [vmem:[#allocation18 + $0x160] sm:$0xff]
          %v5523 = vld [vmem:[#allocation18 + $0x168] sm:$0xff]
          %v5524 = vld [vmem:[#allocation18 + $0x170] sm:$0xff]
          %v5525 = vld [vmem:[#allocation18 + $0x178] sm:$0xff]
          %v5526 = vld [vmem:[#allocation18 + $0x180] sm:$0xff]
          %v5527 = vld [vmem:[#allocation18 + $0x188] sm:$0xff]
          %v5528 = vld [vmem:[#allocation18 + $0x190] sm:$0xff]
          %v5529 = vld [vmem:[#allocation18 + $0x198] sm:$0xff]
          %v5530 = vld [vmem:[#allocation18 + $0x1a0] sm:$0xff]
          %v5531 = vld [vmem:[#allocation18 + $0x1a8] sm:$0xff]
          %v5532 = vld [vmem:[#allocation18 + $0x1b0] sm:$0xff]
          %v5533 = vld [vmem:[#allocation18 + $0x1b8] sm:$0xff]
          %v5534 = vld [vmem:[#allocation18 + $0x1c0] sm:$0xff]
          %v5535 = vld [vmem:[#allocation18 + $0x1c8] sm:$0xff]
          %v5536 = vld [vmem:[#allocation18 + $0x1d0] sm:$0xff]
          %v5537 = vld [vmem:[#allocation18 + $0x1d8] sm:$0xff]
          %v5538 = vld [vmem:[#allocation18 + $0x1e0] sm:$0xff]
          %v5539 = vld [vmem:[#allocation18 + $0x1e8] sm:$0xff]
          %v5540 = vld [vmem:[#allocation18 + $0x1f0] sm:$0xff]
          %v5541 = vld [vmem:[#allocation18 + $0x1f8] sm:$0xff]
          %5542 = vmatprep.subr.mxu0 %v5539
          %5543 = vmatpush1.msra.mxu0 %v5538
          %5544 = vmatprep.subr.mxu0 %v5535
          %5545 = vmatpush1.msra.mxu0 %v5534
          %5546 = vmatprep.subr.mxu0 %v5531
          %5547 = vmatpush1.msra.mxu0 %v5530
          %5548 = vmatprep.subr.mxu0 %v5527
          %5549 = vmatpush1.msra.mxu0 %v5526
          %5550 = vmatprep.subr.mxu0 %v5523
          %5551 = vmatpush1.msra.mxu0 %v5522
          %5552 = vmatprep.subr.mxu0 %v5519
          %5553 = vmatpush1.msra.mxu0 %v5518
          %5554 = vmatprep.subr.mxu0 %v5515
          %5555 = vmatpush1.msra.mxu0 %v5514
          %5556 = vmatprep.subr.mxu0 %v5511
          %5557 = vmatpush1.msra.mxu0 %v5510
          %5558 = vmatprep.subr.mxu0 %v5507
          %5559 = vmatpush1.msra.mxu0 %v5506
          %5560 = vmatprep.subr.mxu0 %v5503
          %5561 = vmatpush1.msra.mxu0 %v5502
          %5562 = vmatprep.subr.mxu0 %v5499
          %5563 = vmatpush1.msra.mxu0 %v5498
          %5564 = vmatprep.subr.mxu0 %v5495
          %5565 = vmatpush1.msra.mxu0 %v5494
          %5566 = vmatprep.subr.mxu0 %v5491
          %5567 = vmatpush1.msra.mxu0 %v5490
          %5568 = vmatprep.subr.mxu0 %v5487
          %5569 = vmatpush1.msra.mxu0 %v5486
          %5570 = vmatprep.subr.mxu0 %v5483
          %5571 = vmatpush1.msra.mxu0 %v5482
          %5572 = vmatprep.subr.mxu0 %v5479
          %5573 = vmatpush1.msra.mxu0 %v5478
          %5574 = vmatprep.subr.mxu0 0.0
          %5575 = vmatpush2.msra.mxu0 0.0
          %5576 = vmatprep.subr.mxu0 0.0
          %5577 = vmatpush2.msra.mxu0 0.0
          %5578 = vmatprep.subr.mxu0 0.0
          %5579 = vmatpush2.msra.mxu0 0.0
          %5580 = vmatprep.subr.mxu0 0.0
          %5581 = vmatpush2.msra.mxu0 0.0
          %5582 = vmatprep.subr.mxu0 0.0
          %5583 = vmatpush2.msra.mxu0 0.0
          %5584 = vmatprep.subr.mxu0 0.0
          %5585 = vmatpush2.msra.mxu0 0.0
          %5586 = vmatprep.subr.mxu0 0.0
          %5587 = vmatpush2.msra.mxu0 0.0
          %5588 = vmatprep.subr.mxu0 0.0
          %5589 = vmatpush2.msra.mxu0 0.0
          %5590 = vmatprep.subr.mxu0 0.0
          %5591 = vmatpush2.msra.mxu0 0.0
          %5592 = vmatprep.subr.mxu0 0.0
          %5593 = vmatpush2.msra.mxu0 0.0
          %5594 = vmatprep.subr.mxu0 0.0
          %5595 = vmatpush2.msra.mxu0 0.0
          %5596 = vmatprep.subr.mxu0 0.0
          %5597 = vmatpush2.msra.mxu0 0.0
          %5598 = vmatprep.subr.mxu0 0.0
          %5599 = vmatpush2.msra.mxu0 0.0
          %5600 = vmatprep.subr.mxu0 0.0
          %5601 = vmatpush2.msra.mxu0 0.0
          %5602 = vmatprep.subr.mxu0 0.0
          %5603 = vmatpush2.msra.mxu0 0.0
          %5604 = vmatprep.subr.mxu0 0.0
          %5605 = vmatpush2.msra.mxu0 0.0
          %5606 = vmatprep.mubr.f32.mxu0 0.0
          %5607 = vmatmul.mubr.f32.gmra.mxu0 %v5473
          %v5608 = vpop.f32.mrf.mxu0
          %v5609 = vadd.f32 0.0, %v5608
          %v5610 = vpop.f32.mrf.mxu0
          %v5611 = vadd.f32 0.0, %v5610
          %5612 = vdwg.mxu0
          %5613 = vmatprep.subr.mxu0 %v5541
          %5614 = vmatpush1.msra.mxu0 %v5540
          %5615 = vmatprep.subr.mxu0 %v5537
          %5616 = vmatpush1.msra.mxu0 %v5536
          %5617 = vmatprep.subr.mxu0 %v5533
          %5618 = vmatpush1.msra.mxu0 %v5532
          %5619 = vmatprep.subr.mxu0 %v5529
          %5620 = vmatpush1.msra.mxu0 %v5528
          %5621 = vmatprep.subr.mxu0 %v5525
          %5622 = vmatpush1.msra.mxu0 %v5524
          %5623 = vmatprep.subr.mxu0 %v5521
          %5624 = vmatpush1.msra.mxu0 %v5520
          %5625 = vmatprep.subr.mxu0 %v5517
          %5626 = vmatpush1.msra.mxu0 %v5516
          %5627 = vmatprep.subr.mxu0 %v5513
          %5628 = vmatpush1.msra.mxu0 %v5512
          %5629 = vmatprep.subr.mxu0 %v5509
          %5630 = vmatpush1.msra.mxu0 %v5508
          %5631 = vmatprep.subr.mxu0 %v5505
          %5632 = vmatpush1.msra.mxu0 %v5504
          %5633 = vmatprep.subr.mxu0 %v5501
          %5634 = vmatpush1.msra.mxu0 %v5500
          %5635 = vmatprep.subr.mxu0 %v5497
          %5636 = vmatpush1.msra.mxu0 %v5496
          %5637 = vmatprep.subr.mxu0 %v5493
          %5638 = vmatpush1.msra.mxu0 %v5492
          %5639 = vmatprep.subr.mxu0 %v5489
          %5640 = vmatpush1.msra.mxu0 %v5488
          %5641 = vmatprep.subr.mxu0 %v5485
          %5642 = vmatpush1.msra.mxu0 %v5484
          %5643 = vmatprep.subr.mxu0 %v5481
          %5644 = vmatpush1.msra.mxu0 %v5480
          %5645 = vmatprep.subr.mxu0 0.0
          %5646 = vmatpush2.msra.mxu0 0.0
          %5647 = vmatprep.subr.mxu0 0.0
          %5648 = vmatpush2.msra.mxu0 0.0
          %5649 = vmatprep.subr.mxu0 0.0
          %5650 = vmatpush2.msra.mxu0 0.0
          %5651 = vmatprep.subr.mxu0 0.0
          %5652 = vmatpush2.msra.mxu0 0.0
          %5653 = vmatprep.subr.mxu0 0.0
          %5654 = vmatpush2.msra.mxu0 0.0
          %5655 = vmatprep.subr.mxu0 0.0
          %5656 = vmatpush2.msra.mxu0 0.0
          %5657 = vmatprep.subr.mxu0 0.0
          %5658 = vmatpush2.msra.mxu0 0.0
          %5659 = vmatprep.subr.mxu0 0.0
          %5660 = vmatpush2.msra.mxu0 0.0
          %5661 = vmatprep.subr.mxu0 0.0
          %5662 = vmatpush2.msra.mxu0 0.0
          %5663 = vmatprep.subr.mxu0 0.0
          %5664 = vmatpush2.msra.mxu0 0.0
          %5665 = vmatprep.subr.mxu0 0.0
          %5666 = vmatpush2.msra.mxu0 0.0
          %5667 = vmatprep.subr.mxu0 0.0
          %5668 = vmatpush2.msra.mxu0 0.0
          %5669 = vmatprep.subr.mxu0 0.0
          %5670 = vmatpush2.msra.mxu0 0.0
          %5671 = vmatprep.subr.mxu0 0.0
          %5672 = vmatpush2.msra.mxu0 0.0
          %5673 = vmatprep.subr.mxu0 0.0
          %5674 = vmatpush2.msra.mxu0 0.0
          %5675 = vmatprep.subr.mxu0 0.0
          %5676 = vmatpush2.msra.mxu0 0.0
          %5677 = vmatprep.mubr.f32.mxu0 0.0
          %5678 = vmatmul.mubr.f32.gmra.mxu0 %v5473
          %v5679 = vpop.f32.mrf.mxu0
          %v5680 = vadd.f32 0.0, %v5679
          %v5681 = vpop.f32.mrf.mxu0
          %v5682 = vadd.f32 0.0, %v5681
          %5683 = vdwg.mxu0
          %v5684 = vadd.f32 %v5474, %v5609
          %v5685 = vadd.f32 %v5475, %v5611
          %v5686 = vadd.f32 %v5476, %v5680
          %v5687 = vadd.f32 %v5477, %v5682
          %v5688 = vxor.u32 %v5684, 2147483648
          %v5689 = vmul.f32 %v5688, 1.442695
          %v5690 = vpow.pop %v5689
          %v5691 = vadd.f32 %v5690, 1.0
          %v5692 = vrcp.pop %v5691
          %v5693 = vmul.f32 1.0, %v5692
          %v5694 = vxor.u32 %v5685, 2147483648
          %v5695 = vmul.f32 %v5694, 1.442695
          %v5696 = vpow.pop %v5695
          %v5697 = vadd.f32 %v5696, 1.0
          %v5698 = vrcp.pop %v5697
          %v5699 = vmul.f32 1.0, %v5698
          %v5700 = vtanh.pop %v5686
          %v5701 = vxor.u32 %v5687, 2147483648
          %v5702 = vmul.f32 %v5701, 1.442695
          %v5703 = vpow.pop %v5702
          %v5704 = vadd.f32 %v5703, 1.0
          %v5705 = vrcp.pop %v5704
          %v5706 = vmul.f32 1.0, %v5705
          %v5707 = vld [vmem:[%s610] sm:$0xff]
          %v5708 = vmul.f32 %v5699, %v5707
          %v5709 = vmul.f32 %v5693, %v5700
          %v5710 = vadd.f32 %v5708, %v5709
          %v5711 = vtanh.pop %v5710
          %v5712 = vmul.f32 %v5706, %v5711
          %v5713 = vld [vmem:[#allocation20] sm:$0xff]
          %v5714 = vld [vmem:[#allocation20 + $0x8] sm:$0xff]
          %v5715 = vld [vmem:[#allocation20 + $0x10] sm:$0xff]
          %v5716 = vld [vmem:[#allocation20 + $0x18] sm:$0xff]
          %v5717 = vld [vmem:[#allocation20 + $0x20] sm:$0xff]
          %v5718 = vld [vmem:[#allocation20 + $0x28] sm:$0xff]
          %v5719 = vld [vmem:[#allocation20 + $0x30] sm:$0xff]
          %v5720 = vld [vmem:[#allocation20 + $0x38] sm:$0xff]
          %v5721 = vld [vmem:[#allocation20 + $0x40] sm:$0xff]
          %v5722 = vld [vmem:[#allocation20 + $0x48] sm:$0xff]
          %v5723 = vld [vmem:[#allocation20 + $0x50] sm:$0xff]
          %v5724 = vld [vmem:[#allocation20 + $0x58] sm:$0xff]
          %v5725 = vld [vmem:[#allocation20 + $0x60] sm:$0xff]
          %v5726 = vld [vmem:[#allocation20 + $0x68] sm:$0xff]
          %v5727 = vld [vmem:[#allocation20 + $0x70] sm:$0xff]
          %v5728 = vld [vmem:[#allocation20 + $0x78] sm:$0xff]
          %v5729 = vld [vmem:[#allocation21] sm:$0x1]
          %v5731 = vlaneseq
          %v5732 = vshrl.u32 %v5731, 7
          %v5733 = vsub.s32 0, %v5732
          %v5734 = vrot.slane %v5729, %v5733
          %5736 = vmatprep.subr.mxu0 0.0
          %5737 = vmatpush1.msra.mxu0 %v5728
          %5738 = vmatprep.subr.mxu0 0.0
          %5739 = vmatpush1.msra.mxu0 %v5727
          %5740 = vmatprep.subr.mxu0 0.0
          %5741 = vmatpush1.msra.mxu0 %v5726
          %5742 = vmatprep.subr.mxu0 0.0
          %5743 = vmatpush1.msra.mxu0 %v5725
          %5744 = vmatprep.subr.mxu0 0.0
          %5745 = vmatpush1.msra.mxu0 %v5724
          %5746 = vmatprep.subr.mxu0 0.0
          %5747 = vmatpush1.msra.mxu0 %v5723
          %5748 = vmatprep.subr.mxu0 0.0
          %5749 = vmatpush1.msra.mxu0 %v5722
          %5750 = vmatprep.subr.mxu0 0.0
          %5751 = vmatpush1.msra.mxu0 %v5721
          %5752 = vmatprep.subr.mxu0 0.0
          %5753 = vmatpush1.msra.mxu0 %v5720
          %5754 = vmatprep.subr.mxu0 0.0
          %5755 = vmatpush1.msra.mxu0 %v5719
          %5756 = vmatprep.subr.mxu0 0.0
          %5757 = vmatpush1.msra.mxu0 %v5718
          %5758 = vmatprep.subr.mxu0 0.0
          %5759 = vmatpush1.msra.mxu0 %v5717
          %5760 = vmatprep.subr.mxu0 0.0
          %5761 = vmatpush1.msra.mxu0 %v5716
          %5762 = vmatprep.subr.mxu0 0.0
          %5763 = vmatpush1.msra.mxu0 %v5715
          %5764 = vmatprep.subr.mxu0 0.0
          %5765 = vmatpush1.msra.mxu0 %v5714
          %5766 = vmatprep.subr.mxu0 0.0
          %5767 = vmatpush1.msra.mxu0 %v5713
          %5768 = vmatprep.subr.mxu0 0.0
          %5769 = vmatpush2.msra.mxu0 0.0
          %5770 = vmatprep.subr.mxu0 0.0
          %5771 = vmatpush2.msra.mxu0 0.0
          %5772 = vmatprep.subr.mxu0 0.0
          %5773 = vmatpush2.msra.mxu0 0.0
          %5774 = vmatprep.subr.mxu0 0.0
          %5775 = vmatpush2.msra.mxu0 0.0
          %5776 = vmatprep.subr.mxu0 0.0
          %5777 = vmatpush2.msra.mxu0 0.0
          %5778 = vmatprep.subr.mxu0 0.0
          %5779 = vmatpush2.msra.mxu0 0.0
          %5780 = vmatprep.subr.mxu0 0.0
          %5781 = vmatpush2.msra.mxu0 0.0
          %5782 = vmatprep.subr.mxu0 0.0
          %5783 = vmatpush2.msra.mxu0 0.0
          %5784 = vmatprep.subr.mxu0 0.0
          %5785 = vmatpush2.msra.mxu0 0.0
          %5786 = vmatprep.subr.mxu0 0.0
          %5787 = vmatpush2.msra.mxu0 0.0
          %5788 = vmatprep.subr.mxu0 0.0
          %5789 = vmatpush2.msra.mxu0 0.0
          %5790 = vmatprep.subr.mxu0 0.0
          %5791 = vmatpush2.msra.mxu0 0.0
          %5792 = vmatprep.subr.mxu0 0.0
          %5793 = vmatpush2.msra.mxu0 0.0
          %5794 = vmatprep.subr.mxu0 0.0
          %5795 = vmatpush2.msra.mxu0 0.0
          %5796 = vmatprep.subr.mxu0 0.0
          %5797 = vmatpush2.msra.mxu0 0.0
          %5798 = vmatprep.subr.mxu0 0.0
          %5799 = vmatpush2.msra.mxu0 0.0
          %5800 = vmatprep.mubr.f32.mxu0 0.0
          %5801 = vmatmul.mubr.f32.gmra.mxu0 %v5712
          %v5802 = vpop.f32.mrf.mxu0
          %v5803 = vadd.f32 %v5734, %v5802
          %v5804 = vpop.f32.mrf.mxu0
          %5805 = vdwg.mxu0
          %5806 = vst [vmem:[%s696] sm:$0xff] %v5803
          %5807 = vst [vmem:[%s703] sm:$0xff] %v5712
          %5808 = vst [vmem:[%s710] sm:$0xff] %v5710
        $region112: #{tpu_custom_call.1} parent=63 // pred_fallthru
          _
        %s5809 = sand.u32 %s318, 1
        %s5810 = scalar_lea.sflag [#allocation8], %s5809
        %s5811 = sand.u32 %s318, 1
        %s5812 = smul.addr %s5811, 8
        %s5813 = scalar_lea.vmem [#allocation23], %s5812
        %s5814 = sand.u32 %s45, 1
        %s5815 = scalar_lea.sflag [#allocation25], %s5814
        %s5816 = sand.u32 %s344, 1
        %s5817 = smul.addr %s5816, 8
        %s5818 = scalar_lea.vmem [#allocation24], %s5817
        %s5819 = sand.u32 %s45, 1
        %s5820 = scalar_lea.sflag [#allocation25], %s5819
        %s5821 = sand.u32 %s370, 1
        %s5822 = smul.addr %s5821, 8
        %s5823 = scalar_lea.vmem [#allocation26], %s5822
        // Predicated region
        $region113: #{tpu_custom_call.1} parent=63 // pred_check
          %p5824 = pneg %p328
        $region114: #{tpu_custom_call.1} parent=63 // pred_check_branch
          %5826 = sbr.rel (%p5824) target = $region116
        $region115: #{tpu_custom_call.1} parent=63 // pred_region
          %s5828 = ssub.s32 128, 128
          %5829 = vsyncadd %s5810, %s5828
          %s5830 = smul.addr %s49, 128
          %s5831 = scalar_lea.hbm %s11, %s5830
          %s5833 = sshll.u32 %s5813, 4
          %s5834 = int_to_ptr.vmem [resolvable:$true] %s5833
          %5836 = dma.vmem_to_hbm [thread:$0]  %s5834, 128, %s5831, %s5810
        $region116: #{tpu_custom_call.1} parent=63 // pred_fallthru
          _
        // Predicated region
        $region117: #{tpu_custom_call.1} parent=63 // pred_check
          %p5837 = pneg %p354
        $region118: #{tpu_custom_call.1} parent=63 // pred_check_branch
          %5839 = sbr.rel (%p5837) target = $region120
        $region119: #{tpu_custom_call.1} parent=63 // pred_region
          %s5841 = ssub.s32 128, 128
          %5842 = vsyncadd %s5815, %s5841
          %s5843 = smul.addr %s49, 128
          %s5844 = scalar_lea.hbm %s12, %s5843
          %s5846 = sshll.u32 %s5818, 4
          %s5847 = int_to_ptr.vmem [resolvable:$true] %s5846
          %5849 = dma.vmem_to_hbm [thread:$0]  %s5847, 128, %s5844, %s5815
        $region120: #{tpu_custom_call.1} parent=63 // pred_fallthru
          _
        // Predicated region
        $region121: #{tpu_custom_call.1} parent=63 // pred_check
          %p5850 = pneg %p380
        $region122: #{tpu_custom_call.1} parent=63 // pred_check_branch
          %5852 = sbr.rel (%p5850) target = $region124
        $region123: #{tpu_custom_call.1} parent=63 // pred_region
          %s5854 = ssub.s32 128, 128
          %5855 = vsyncadd %s5820, %s5854
          %s5856 = smul.addr %s49, 128
          %s5857 = scalar_lea.hbm %s13, %s5856
          %s5859 = sshll.u32 %s5823, 4
          %s5860 = int_to_ptr.vmem [resolvable:$true] %s5859
          %5862 = dma.vmem_to_hbm [thread:$0]  %s5860, 128, %s5857, %s5820
        $region124: #{tpu_custom_call.1} parent=63 // pred_fallthru
          _
      $region64: #{tpu_custom_call.1} parent=5 // pred_fallthru
        _
      %p5863 = scmp.le.s32.totalorder 2, %s40
      // Predicated region
      $region125: #{tpu_custom_call.1} parent=5 // pred_check
        %p5864 = pneg %p5863
      $region126: #{tpu_custom_call.1} parent=5 // pred_check_branch
        %5866 = sbr.rel (%p5864) target = $region128
      $region127: #{tpu_custom_call.1} parent=5 // pred_region
        %s5867 = ssub.s32 %s40, 2
        // Predicated region
        $region129: #{tpu_custom_call.1} parent=127 // pred_check
          %p5868 = pneg %p334
        $region130: #{tpu_custom_call.1} parent=127 // pred_check_branch
          %5870 = sbr.rel (%p5868) target = $region132
        $region131: #{tpu_custom_call.1} parent=127 // pred_region
          %s5871 = sand.u32 %s319, 1
          %s5872 = scalar_lea.sflag [#allocation8], %s5871
          %s5873 = sand.u32 %s319, 1
          %s5874 = smul.addr %s5873, 8
          %s5875 = scalar_lea.vmem [#allocation23], %s5874
          %5876 = dma.done %s5872, 128
        $region132: #{tpu_custom_call.1} parent=127 // pred_fallthru
          _
        // Predicated region
        $region133: #{tpu_custom_call.1} parent=127 // pred_check
          %p5877 = pneg %p360
        $region134: #{tpu_custom_call.1} parent=127 // pred_check_branch
          %5879 = sbr.rel (%p5877) target = $region136
        $region135: #{tpu_custom_call.1} parent=127 // pred_region
          %s5880 = sand.u32 %s46, 1
          %s5881 = scalar_lea.sflag [#allocation25], %s5880
          %s5882 = sand.u32 %s345, 1
          %s5883 = smul.addr %s5882, 8
          %s5884 = scalar_lea.vmem [#allocation24], %s5883
          %5885 = dma.done %s5881, 128
        $region136: #{tpu_custom_call.1} parent=127 // pred_fallthru
          _
        // Predicated region
        $region137: #{tpu_custom_call.1} parent=127 // pred_check
          %p5886 = pneg %p386
        $region138: #{tpu_custom_call.1} parent=127 // pred_check_branch
          %5888 = sbr.rel (%p5886) target = $region140
        $region139: #{tpu_custom_call.1} parent=127 // pred_region
          %s5889 = sand.u32 %s46, 1
          %s5890 = scalar_lea.sflag [#allocation25], %s5889
          %s5891 = sand.u32 %s371, 1
          %s5892 = smul.addr %s5891, 8
          %s5893 = scalar_lea.vmem [#allocation26], %s5892
          %5894 = dma.done %s5890, 128
        $region140: #{tpu_custom_call.1} parent=127 // pred_fallthru
          _
      $region128: #{tpu_custom_call.1} parent=5 // pred_fallthru
        _
    $region6: #{tpu_custom_call.1} parent=1 // loop_footer
      %s44 = sadd.s32 1, %s40
    $region7: #{tpu_custom_call.1} parent=1 // loop_footer_branch
      %39 = sbr.rel target = $region3
    $region8: #{tpu_custom_call.1} parent=1 // loop_exit
      _
    %5895 = vsyncpa [#allocation7], 1
    %s5896 = scalar_lea.sflag [#allocation7], 1
    %5897 = vsyncpa %s5896, 1
    %5898 = vsyncpa [#allocation10], 1
    %s5899 = scalar_lea.sflag [#allocation10], 1
    %5900 = vsyncpa %s5899, 1
    %5901 = vsyncpa [#allocation13], 1
    %s5902 = scalar_lea.sflag [#allocation13], 1
    %5903 = vsyncpa %s5902, 1
    %5904 = vsyncpa [#allocation16], 1
    %5905 = vsyncpa [#allocation19], 1
    %5906 = vsyncpa [#allocation22], 1
    %5907 = vsyncpa [#allocation8], 1
    %s5908 = scalar_lea.sflag [#allocation8], 1
    %5909 = vsyncpa %s5908, 1
    %5910 = vsyncpa [#allocation25], 1
    %s5911 = scalar_lea.sflag [#allocation25], 1
    %5912 = vsyncpa %s5911, 1

</llo_original>
